<compile_context>
chip_gen: v6e
topology: v6e:2x2x1
jax: 0.10.0
libtpu: 0.0.40
codegen_flags: <defaults>
</compile_context>

<pallas_src>
import functools

import jax
import jax.numpy as jnp
from jax import lax
from jax.experimental import pallas as pl
from jax.experimental.pallas import tpu as pltpu


# ----------------------------------------------------------------------------
# Helpers
# ----------------------------------------------------------------------------
_VMEM_LIMIT_BYTES = 32 * 1024 * 1024          # safe on v5e/v6e (128 MiB) & v7x (64 MiB)
_XW_RESIDENT_BUDGET = 6 * 1024 * 1024         # conservative: assume double-buffered


def _round_up(x, m):
    return ((x + m - 1) // m) * m


def _pad2d(a, rows, cols, dtype):
    out = jnp.zeros((rows, cols), dtype=dtype)
    return out.at[: a.shape[0], : a.shape[1]].set(a.astype(dtype))


def _choose_tiles(n, *, tm_target=512, tk_target=1024):
    """Pick (tm, tk, n_pad) such that:
       - n_pad is a multiple of both tm and tk (tk is a multiple of tm),
       - padding is at most one tk tile,
       - the row grid has >= 2 blocks when the graph allows (v7x megacore)."""
    n128 = _round_up(max(n, 1), 128)
    tm = min(tm_target, n128)
    while tm > 128 and -(-n128 // tm) < 2:     # keep >= 2 row blocks if possible
        tm //= 2
    tm = max(tm, 128)
    tk = min(tk_target, n128)
    tk = max(tm, (tk // tm) * tm)              # tk multiple of tm
    n_pad = _round_up(n128, tk)
    return tm, tk, n_pad


def _row_tile(n_pad, cap=1024):
    """Largest multiple of 128 <= cap that divides n_pad (n_pad is a 128-multiple)."""
    t = (min(cap, n_pad) // 128) * 128
    while t > 128 and n_pad % t != 0:
        t -= 128
    return max(t, 128)


# ----------------------------------------------------------------------------
# Dense symmetric-normalized adjacency, built directly at padded size (XLA)
# ----------------------------------------------------------------------------
def build_normalized_adjacency_padded(edge_index, num_nodes, n_pad, *,
                                      add_self_loops=True, out_dtype=jnp.bfloat16):
    """A_hat = D^{-1/2} (A + remaining self loops) D^{-1/2}; duplicate edges are
       summed (scatter-add), matching PyG message passing. Padded rows/cols stay
       all-zero (degree 0 -> weight 0), so padded nodes never leak into real ones."""
    src = edge_index[0]
    dst = edge_index[1]
    adj = jnp.zeros((n_pad, n_pad), dtype=jnp.float32)
    adj = adj.at[dst, src].add(1.0)
    if add_self_loops:
        ids = jnp.arange(n_pad)
        has_self = adj[ids, ids] > 0.0
        add = jnp.where((ids < num_nodes) & jnp.logical_not(has_self), 1.0, 0.0)
        adj = adj.at[ids, ids].add(add)
    deg = adj.sum(axis=1)
    dinv = jnp.where(deg > 0.0, lax.rsqrt(deg), 0.0)
    return (dinv[:, None] * adj * dinv[None, :]).astype(out_dtype)


# ----------------------------------------------------------------------------
# Kernel 1: layer-0 feature transform  XW = X @ W   (tiled over node rows)
# ----------------------------------------------------------------------------
def _xw_kernel(x_ref, w_ref, o_ref):
    o_ref[...] = jnp.dot(
        x_ref[...], w_ref[...], preferred_element_type=jnp.float32
    ).astype(o_ref.dtype)


def feature_transform(x, w, *, tm):
    """x: (N_pad, F_in_pad) bf16, w: (F_in_pad, H_pad) bf16 -> (N_pad, H_pad) bf16."""
    n_pad, f_in = x.shape
    f_out = w.shape[1]
    return pl.pallas_call(
        _xw_kernel,
        out_shape=jax.ShapeDtypeStruct((n_pad, f_out), jnp.bfloat16),
        grid_spec=pltpu.PrefetchScalarGridSpec(
            num_scalar_prefetch=0,
            grid=(n_pad // tm,),
            in_specs=[
                pl.BlockSpec((tm, f_in), lambda i: (i, 0)),
                pl.BlockSpec((f_in, f_out), lambda i: (0, 0)),
            ],
            out_specs=pl.BlockSpec((tm, f_out), lambda i: (i, 0)),
        ),
        compiler_params=pltpu.CompilerParams(dimension_semantics=("parallel",)),
    )(x, w)


# ----------------------------------------------------------------------------
# Kernel 2a: intermediate layer
#   acc = A_hat @ XW ; h = relu(acc + b) ; emit xw_next = h @ W_next (bf16 only)
# ----------------------------------------------------------------------------
def _gcn_inner_kernel(a_ref, xw_ref, b_ref, wn_ref, xwn_ref, acc_ref,
                      *, tk, xw_resident):
    k = pl.program_id(1)

    @pl.when(k == 0)
    def _init():
        acc_ref[...] = jnp.zeros_like(acc_ref)

    if xw_resident:
        start = pl.multiple_of(k * tk, tk)
        xw_blk = xw_ref[pl.ds(start, tk), :]
    else:
        xw_blk = xw_ref[...]

    # (tm, tk) x (tk, H) bf16 -> f32 accumulate on the MXU.
    acc_ref[...] += jnp.dot(a_ref[...], xw_blk, preferred_element_type=jnp.float32)

    @pl.when(k == pl.num_programs(1) - 1)
    def _finalize():
        # Intermediate layers always apply the activation before feeding the
        # fused next-layer transform. Padded rows pick up bias+ReLU here, but
        # A_hat's padded COLUMNS are all-zero, so they can never leak back
        # into real rows (documented invariant).
        h = jnp.maximum(acc_ref[...] + b_ref[...], 0.0)
        xwn_ref[...] = jnp.dot(
            h.astype(jnp.bfloat16), wn_ref[...],
            preferred_element_type=jnp.float32,
        ).astype(xwn_ref.dtype)


def gcn_aggregate_inner(a_hat, xw, b, w_next, *, tm, tk):
    """Returns xw_next = relu(A_hat @ xw + b) @ w_next, shape (N_pad, H_pad) bf16."""
    n_pad = a_hat.shape[0]
    h_dim = xw.shape[1]
    xw_resident = (n_pad * h_dim * 2) <= _XW_RESIDENT_BUDGET
    if xw_resident:
        xw_spec = pl.BlockSpec((n_pad, h_dim), lambda i, k: (0, 0))   # fetched once
    else:
        xw_spec = pl.BlockSpec((tk, h_dim), lambda i, k: (k, 0))      # streamed slab
    kernel = functools.partial(_gcn_inner_kernel, tk=tk, xw_resident=xw_resident)
    return pl.pallas_call(
        kernel,
        out_shape=jax.ShapeDtypeStruct((n_pad, h_dim), jnp.bfloat16),
        grid_spec=pltpu.PrefetchScalarGridSpec(
            num_scalar_prefetch=0,
            grid=(n_pad // tm, n_pad // tk),
            in_specs=[
                pl.BlockSpec((tm, tk), lambda i, k: (i, k)),          # A_hat tile
                xw_spec,                                              # XW
                pl.BlockSpec((1, h_dim), lambda i, k: (0, 0)),        # bias
                pl.BlockSpec((h_dim, h_dim), lambda i, k: (0, 0)),    # W_next
            ],
            out_specs=pl.BlockSpec((tm, h_dim), lambda i, k: (i, 0)), # xw_next
            scratch_shapes=[pltpu.VMEM((tm, h_dim), jnp.float32)],
        ),
        compiler_params=pltpu.CompilerParams(
            dimension_semantics=("parallel", "arbitrary"),
            vmem_limit_bytes=_VMEM_LIMIT_BYTES,
        ),
    )(a_hat, xw, b, w_next)


# ----------------------------------------------------------------------------
# Kernel 2b: last layer
#   acc = A_hat @ XW ; h = acc + b (optionally relu) ; emit h (f32 only)
# ----------------------------------------------------------------------------
def _gcn_last_kernel(a_ref, xw_ref, b_ref, h_ref, acc_ref,
                     *, tk, xw_resident, apply_act):
    k = pl.program_id(1)

    @pl.when(k == 0)
    def _init():
        acc_ref[...] = jnp.zeros_like(acc_ref)

    if xw_resident:
        start = pl.multiple_of(k * tk, tk)
        xw_blk = xw_ref[pl.ds(start, tk), :]
    else:
        xw_blk = xw_ref[...]

    acc_ref[...] += jnp.dot(a_ref[...], xw_blk, preferred_element_type=jnp.float32)

    @pl.when(k == pl.num_programs(1) - 1)
    def _finalize():
        h = acc_ref[...] + b_ref[...]
        if apply_act:
            h = jnp.maximum(h, 0.0)
        h_ref[...] = h.astype(h_ref.dtype)


def gcn_aggregate_last(a_hat, xw, b, *, apply_act, tm, tk):
    """Returns h = [relu](A_hat @ xw + b), shape (N_pad, H_pad) f32."""
    n_pad = a_hat.shape[0]
    h_dim = xw.shape[1]
    xw_resident = (n_pad * h_dim * 2) <= _XW_RESIDENT_BUDGET
    if xw_resident:
        xw_spec = pl.BlockSpec((n_pad, h_dim), lambda i, k: (0, 0))
    else:
        xw_spec = pl.BlockSpec((tk, h_dim), lambda i, k: (k, 0))
    kernel = functools.partial(
        _gcn_last_kernel, tk=tk, xw_resident=xw_resident, apply_act=apply_act
    )
    return pl.pallas_call(
        kernel,
        out_shape=jax.ShapeDtypeStruct((n_pad, h_dim), jnp.float32),
        grid_spec=pltpu.PrefetchScalarGridSpec(
            num_scalar_prefetch=0,
            grid=(n_pad // tm, n_pad // tk),
            in_specs=[
                pl.BlockSpec((tm, tk), lambda i, k: (i, k)),          # A_hat tile
                xw_spec,                                              # XW
                pl.BlockSpec((1, h_dim), lambda i, k: (0, 0)),        # bias
            ],
            out_specs=pl.BlockSpec((tm, h_dim), lambda i, k: (i, 0)), # h
            scratch_shapes=[pltpu.VMEM((tm, h_dim), jnp.float32)],
        ),
        compiler_params=pltpu.CompilerParams(
            dimension_semantics=("parallel", "arbitrary"),
            vmem_limit_bytes=_VMEM_LIMIT_BYTES,
        ),
    )(a_hat, xw, b)


# ----------------------------------------------------------------------------
# Encoder: k GCN layers with ReLU (last_act handling as in the module)
# ----------------------------------------------------------------------------
def init_encoder_params(key, num_features, num_hidden, n_layers):
    params = []
    dims = [num_features] + [num_hidden] * n_layers
    for i in range(n_layers):
        key, wk = jax.random.split(key)
        fan_in, fan_out = dims[i], dims[i + 1]
        limit = jnp.sqrt(6.0 / (fan_in + fan_out))  # Glorot uniform (PyG default)
        w = jax.random.uniform(wk, (fan_in, fan_out), jnp.float32, -limit, limit)
        b = jnp.zeros((1, fan_out), dtype=jnp.float32)  # PyG zero-inits bias
        params.append((w, b))
    return params


def encoder_forward(params, x, edge_index, *, last_act=True):
    n, f_in = x.shape
    h_dim = params[0][0].shape[1]
    n_layers = len(params)

    tm, tk, n_pad = _choose_tiles(n)
    f_in_pad = _round_up(f_in, 128)
    # Note: keeping H padded to 128 (not 256) keeps aggregation HBM traffic
    # minimal; the transform matmuls are not the bottleneck here.
    h_pad = _round_up(h_dim, 128)

    # Dense normalized adjacency, built directly at padded size, streamed bf16.
    a_hat_p = build_normalized_adjacency_padded(
        edge_index, n, n_pad, add_self_loops=True, out_dtype=jnp.bfloat16
    )

    x_p = _pad2d(x, n_pad, f_in_pad, jnp.bfloat16)
    w0_p = _pad2d(params[0][0], f_in_pad, h_pad, jnp.bfloat16)

    # Layer-0 feature transform (hoisted, large row tiles — mem-bound pass).
    xw = feature_transform(x_p, w0_p, tm=_row_tile(n_pad))

    # Intermediate layers: aggregation fused with the next layer's transform;
    # no dead f32 writeback.
    for i in range(n_layers - 1):
        b_p = _pad2d(params[i][1], 1, h_pad, jnp.float32)
        w_next_p = _pad2d(params[i + 1][0], h_pad, h_pad, jnp.bfloat16)
        xw = gcn_aggregate_inner(a_hat_p, xw, b_p, w_next_p, tm=tm, tk=tk)

    # Last layer: no dummy W_next, no dead xw_next output.
    b_last = _pad2d(params[-1][1], 1, h_pad, jnp.float32)
    h_out = gcn_aggregate_last(a_hat_p, xw, b_last, apply_act=last_act, tm=tm, tk=tk)
    return h_out[:n, :h_dim]


if __name__ == "__main__":
    # Small shapes consistent with the module's forward. With the new tiling
    # rule 300 nodes pad to 384 (one extra reduction tile), grid = (2, 1).
    num_nodes = 300
    num_features = 48
    num_hidden = 64
    n_layers = 3          # module asserts n_layers >= 2
    num_edges = 1200

    key = jax.random.PRNGKey(0)
    kx, ke1, ke2, kp = jax.random.split(key, 4)

    x = jax.random.normal(kx, (num_nodes, num_features), dtype=jnp.float32)
    src = jax.random.randint(ke1, (num_edges,), 0, num_nodes, dtype=jnp.int32)
    dst = jax.random.randint(ke2, (num_edges,), 0, num_nodes, dtype=jnp.int32)
    edge_index = jnp.stack([src, dst], axis=0)  # (2, E)

    params = init_encoder_params(kp, num_features, num_hidden, n_layers)

    fwd = jax.jit(functools.partial(encoder_forward, last_act=True))
    out = jax.block_until_ready(fwd(params, x, edge_index))

    # Pure-JAX f32 reference (same math, dense normalized adjacency).
    a_hat_ref = build_normalized_adjacency_padded(
        edge_index, num_nodes, num_nodes, add_self_loops=True, out_dtype=jnp.float32
    )
    h_ref = x
    for w, b in params:
        h_ref = a_hat_ref @ (h_ref @ w) + b
        h_ref = jnp.maximum(h_ref, 0.0)   # last_act=True -> act on every layer

    assert out.shape == (num_nodes, num_hidden)
    assert bool(jnp.all(jnp.isfinite(out)))
    # bf16-streamed A_hat / XW with f32 accumulation: allow modest tolerance.
    assert bool(jnp.allclose(out, h_ref, rtol=5e-2, atol=7.5e-2))
    print("KERNEL_OK")
</pallas_src>

<mosaic_0001>
module attributes {stable_mosaic.version = 11 : i64} {
  func.func private @main(%arg0: i32) attributes {dimension_semantics = [#tpu.dimension_semantics<core_parallel>], iteration_bounds = array<i64: 2>, tpu.core_type = #tpu.core_type<sc_scalar_subcore>, window_params = []} {
    return
  }
}

module attributes {stable_mosaic.version = 11 : i64} {
  func.func private @main(%arg0: i32) attributes {dimension_semantics = [#tpu.dimension_semantics<core_parallel>], iteration_bounds = array<i64: 2>, tpu.core_type = #tpu.core_type<sc_scalar_subcore>, window_params = []} {
    return
  }
}

module attributes {stable_mosaic.version = 11 : i64} {
  func.func @_xw_kernel(%arg0: i32, %arg1: memref<384x128xbf16, #tpu.memory_space<vmem>>, %arg2: memref<128x128xbf16, #tpu.memory_space<vmem>>, %arg3: memref<384x128xbf16, #tpu.memory_space<vmem>>) attributes {dimension_semantics = [#tpu.dimension_semantics<parallel>], iteration_bounds = array<i64: 1>, scalar_prefetch = 0 : i64, scratch_operands = 0 : i64, tpu.core_type = #tpu.core_type<tc>, window_params = [{transform_indices = @transform_0, window_bounds = array<i64: 384, 128>}, {pipeline_mode = #tpu.pipeline_mode<synchronous>, transform_indices = @transform_1, window_bounds = array<i64: 128, 128>}, {transform_indices = @transform_2, window_bounds = array<i64: 384, 128>}]} {
    %c0 = arith.constant 0 : index
    %c0_0 = arith.constant 0 : index
    %0 = vector.load %arg1[%c0, %c0_0] : memref<384x128xbf16, #tpu.memory_space<vmem>>, vector<384x128xbf16>
    %c0_1 = arith.constant 0 : index
    %c0_2 = arith.constant 0 : index
    %1 = vector.load %arg2[%c0_1, %c0_2] : memref<128x128xbf16, #tpu.memory_space<vmem>>, vector<128x128xbf16>
    %cst = arith.constant dense<0.000000e+00> : vector<384x128xf32>
    %2 = tpu.matmul %0, %1, %cst {dimension_numbers = #tpu.dot_dimension_numbers<[1], [0], [0], [1], [0, 0, 1, 1], [], []>} : vector<384x128xbf16>, vector<128x128xbf16>, vector<384x128xf32> -> vector<384x128xf32>
    %3 = arith.truncf %2 : vector<384x128xf32> to vector<384x128xbf16>
    %c0_3 = arith.constant 0 : index
    %c0_4 = arith.constant 0 : index
    %4 = vector.load %arg3[%c0_3, %c0_4] : memref<384x128xbf16, #tpu.memory_space<vmem>>, vector<384x128xbf16>
    tpu.vector_store %arg3[%c0_3, %c0_4], %3 {strides = array<i32>} : memref<384x128xbf16, #tpu.memory_space<vmem>>, vector<384x128xbf16>,
    return
  }
  func.func @transform_0(%arg0: i32) -> (i32, i32) {
    %c0_i32 = arith.constant 0 : i32
    %c0_i32_0 = arith.constant 0 : i32
    return %arg0, %c0_i32 : i32, i32
  }
  func.func @transform_1(%arg0: i32) -> (i32, i32) {
    %c0_i32 = arith.constant 0 : i32
    %c0_i32_0 = arith.constant 0 : i32
    %c0_i32_1 = arith.constant 0 : i32
    return %c0_i32, %c0_i32_0 : i32, i32
  }
  func.func @transform_2(%arg0: i32) -> (i32, i32) {
    %c0_i32 = arith.constant 0 : i32
    %c0_i32_0 = arith.constant 0 : i32
    return %arg0, %c0_i32 : i32, i32
  }
}

module attributes {stable_mosaic.version = 11 : i64} {
  func.func @_gcn_last_kernel(%arg0: i32, %arg1: i32, %arg2: memref<192x384xbf16, #tpu.memory_space<vmem>>, %arg3: memref<384x128xbf16, #tpu.memory_space<vmem>>, %arg4: memref<1x128xf32, #tpu.memory_space<vmem>>, %arg5: memref<192x128xf32, #tpu.memory_space<vmem>>, %arg6: memref<192x128xf32, #tpu.memory_space<vmem>>) attributes {dimension_semantics = [#tpu.dimension_semantics<parallel>, #tpu.dimension_semantics<arbitrary>], iteration_bounds = array<i64: 2, 1>, scalar_prefetch = 0 : i64, scratch_operands = 1 : i64, tpu.core_type = #tpu.core_type<tc>, window_params = [{transform_indices = @transform_0, window_bounds = array<i64: 192, 384>}, {pipeline_mode = #tpu.pipeline_mode<synchronous>, transform_indices = @transform_1, window_bounds = array<i64: 384, 128>}, {pipeline_mode = #tpu.pipeline_mode<synchronous>, transform_indices = @transform_2, window_bounds = array<i64: 1, 128>}, {transform_indices = @transform_3, window_bounds = array<i64: 192, 128>}]} {
    %c0_i32 = arith.constant 0 : i32
    %0 = arith.cmpi eq, %arg1, %c0_i32 : i32
    %1 = arith.extui %0 : i1 to i32
    %c0_i32_0 = arith.constant 0 : i32
    %2 = arith.cmpi ne, %1, %c0_i32_0 : i32
    scf.if %2 {
      %cst_9 = arith.constant 0.000000e+00 : f32
      %15 = vector.broadcast %cst_9 : f32 to vector<192x128xf32>
      %c0_10 = arith.constant 0 : index
      %c0_11 = arith.constant 0 : index
      %16 = vector.load %arg6[%c0_10, %c0_11] : memref<192x128xf32, #tpu.memory_space<vmem>>, vector<192x128xf32>
      tpu.vector_store %arg6[%c0_10, %c0_11], %15 {strides = array<i32>} : memref<192x128xf32, #tpu.memory_space<vmem>>, vector<192x128xf32>,
    } else {
    }
    %c384_i32 = arith.constant 384 : i32
    %3 = arith.muli %arg1, %c384_i32 : i32
    %4 = tpu.assume_multiple %3, 384 : i32
    %5 = arith.index_cast %4 : i32 to index
    %c0 = arith.constant 0 : index
    %6 = vector.load %arg3[%5, %c0] : memref<384x128xbf16, #tpu.memory_space<vmem>>, vector<384x128xbf16>
    %c0_1 = arith.constant 0 : index
    %c0_2 = arith.constant 0 : index
    %7 = vector.load %arg6[%c0_1, %c0_2] : memref<192x128xf32, #tpu.memory_space<vmem>>, vector<192x128xf32>
    %c0_3 = arith.constant 0 : index
    %c0_4 = arith.constant 0 : index
    %8 = vector.load %arg2[%c0_3, %c0_4] : memref<192x384xbf16, #tpu.memory_space<vmem>>, vector<192x384xbf16>
    %cst = arith.constant dense<0.000000e+00> : vector<192x128xf32>
    %9 = tpu.matmul %8, %6, %cst {dimension_numbers = #tpu.dot_dimension_numbers<[1], [0], [0], [1], [0, 0, 1, 1], [], []>} : vector<192x384xbf16>, vector<384x128xbf16>, vector<192x128xf32> -> vector<192x128xf32>
    %10 = arith.addf %7, %9 : vector<192x128xf32>
    %c0_5 = arith.constant 0 : index
    %c0_6 = arith.constant 0 : index
    %11 = vector.load %arg6[%c0_5, %c0_6] : memref<192x128xf32, #tpu.memory_space<vmem>>, vector<192x128xf32>
    tpu.vector_store %arg6[%c0_5, %c0_6], %10 {strides = array<i32>} : memref<192x128xf32, #tpu.memory_space<vmem>>, vector<192x128xf32>,
    %c0_i32_7 = arith.constant 0 : i32
    %12 = arith.cmpi eq, %arg1, %c0_i32_7 : i32
    %13 = arith.extui %12 : i1 to i32
    %c0_i32_8 = arith.constant 0 : i32
    %14 = arith.cmpi ne, %13, %c0_i32_8 : i32
    scf.if %14 {
      %c0_9 = arith.constant 0 : index
      %c0_10 = arith.constant 0 : index
      %15 = vector.load %arg6[%c0_9, %c0_10] : memref<192x128xf32, #tpu.memory_space<vmem>>, vector<192x128xf32>
      %c0_11 = arith.constant 0 : index
      %c0_12 = arith.constant 0 : index
      %16 = vector.load %arg4[%c0_11, %c0_12] : memref<1x128xf32, #tpu.memory_space<vmem>>, vector<1x128xf32>
      %17 = vector.broadcast %16 : vector<1x128xf32> to vector<192x128xf32>
      %18 = arith.addf %15, %17 : vector<192x128xf32>
      %cst_13 = arith.constant 0.000000e+00 : f32
      %19 = vector.broadcast %cst_13 : f32 to vector<192x128xf32>
      %20 = arith.maximumf %18, %19 : vector<192x128xf32>
      %c0_14 = arith.constant 0 : index
      %c0_15 = arith.constant 0 : index
      %21 = vector.load %arg5[%c0_14, %c0_15] : memref<192x128xf32, #tpu.memory_space<vmem>>, vector<192x128xf32>
      tpu.vector_store %arg5[%c0_14, %c0_15], %20 {strides = array<i32>} : memref<192x128xf32, #tpu.memory_space<vmem>>, vector<192x128xf32>,
    } else {
    }
    return
  }
  func.func @transform_0(%arg0: i32, %arg1: i32) -> (i32, i32) {
    %c0_i32 = arith.constant 0 : i32
    return %arg0, %arg1 : i32, i32
  }
  func.func @transform_1(%arg0: i32, %arg1: i32) -> (i32, i32) {
    %c0_i32 = arith.constant 0 : i32
    %c0_i32_0 = arith.constant 0 : i32
    %c0_i32_1 = arith.constant 0 : i32
    return %c0_i32, %c0_i32_0 : i32, i32
  }
  func.func @transform_2(%arg0: i32, %arg1: i32) -> (i32, i32) {
    %c0_i32 = arith.constant 0 : i32
    %c0_i32_0 = arith.constant 0 : i32
    %c0_i32_1 = arith.constant 0 : i32
    return %c0_i32, %c0_i32_0 : i32, i32
  }
  func.func @transform_3(%arg0: i32, %arg1: i32) -> (i32, i32) {
    %c0_i32 = arith.constant 0 : i32
    %c0_i32_0 = arith.constant 0 : i32
    return %arg0, %c0_i32 : i32, i32
  }
}

module attributes {stable_mosaic.version = 11 : i64} {
  func.func @_gcn_inner_kernel(%arg0: i32, %arg1: i32, %arg2: memref<192x384xbf16, #tpu.memory_space<vmem>>, %arg3: memref<384x128xbf16, #tpu.memory_space<vmem>>, %arg4: memref<1x128xf32, #tpu.memory_space<vmem>>, %arg5: memref<128x128xbf16, #tpu.memory_space<vmem>>, %arg6: memref<192x128xbf16, #tpu.memory_space<vmem>>, %arg7: memref<192x128xf32, #tpu.memory_space<vmem>>) attributes {dimension_semantics = [#tpu.dimension_semantics<parallel>, #tpu.dimension_semantics<arbitrary>], iteration_bounds = array<i64: 2, 1>, scalar_prefetch = 0 : i64, scratch_operands = 1 : i64, tpu.core_type = #tpu.core_type<tc>, window_params = [{transform_indices = @transform_0, window_bounds = array<i64: 192, 384>}, {pipeline_mode = #tpu.pipeline_mode<synchronous>, transform_indices = @transform_1, window_bounds = array<i64: 384, 128>}, {pipeline_mode = #tpu.pipeline_mode<synchronous>, transform_indices = @transform_2, window_bounds = array<i64: 1, 128>}, {pipeline_mode = #tpu.pipeline_mode<synchronous>, transform_indices = @transform_3, window_bounds = array<i64: 128, 128>}, {transform_indices = @transform_4, window_bounds = array<i64: 192, 128>}]} {
    %c0_i32 = arith.constant 0 : i32
    %0 = arith.cmpi eq, %arg1, %c0_i32 : i32
    %1 = arith.extui %0 : i1 to i32
    %c0_i32_0 = arith.constant 0 : i32
    %2 = arith.cmpi ne, %1, %c0_i32_0 : i32
    scf.if %2 {
      %cst_9 = arith.constant 0.000000e+00 : f32
      %15 = vector.broadcast %cst_9 : f32 to vector<192x128xf32>
      %c0_10 = arith.constant 0 : index
      %c0_11 = arith.constant 0 : index
      %16 = vector.load %arg7[%c0_10, %c0_11] : memref<192x128xf32, #tpu.memory_space<vmem>>, vector<192x128xf32>
      tpu.vector_store %arg7[%c0_10, %c0_11], %15 {strides = array<i32>} : memref<192x128xf32, #tpu.memory_space<vmem>>, vector<192x128xf32>,
    } else {
    }
    %c384_i32 = arith.constant 384 : i32
    %3 = arith.muli %arg1, %c384_i32 : i32
    %4 = tpu.assume_multiple %3, 384 : i32
    %5 = arith.index_cast %4 : i32 to index
    %c0 = arith.constant 0 : index
    %6 = vector.load %arg3[%5, %c0] : memref<384x128xbf16, #tpu.memory_space<vmem>>, vector<384x128xbf16>
    %c0_1 = arith.constant 0 : index
    %c0_2 = arith.constant 0 : index
    %7 = vector.load %arg7[%c0_1, %c0_2] : memref<192x128xf32, #tpu.memory_space<vmem>>, vector<192x128xf32>
    %c0_3 = arith.constant 0 : index
    %c0_4 = arith.constant 0 : index
    %8 = vector.load %arg2[%c0_3, %c0_4] : memref<192x384xbf16, #tpu.memory_space<vmem>>, vector<192x384xbf16>
    %cst = arith.constant dense<0.000000e+00> : vector<192x128xf32>
    %9 = tpu.matmul %8, %6, %cst {dimension_numbers = #tpu.dot_dimension_numbers<[1], [0], [0], [1], [0, 0, 1, 1], [], []>} : vector<192x384xbf16>, vector<384x128xbf16>, vector<192x128xf32> -> vector<192x128xf32>
    %10 = arith.addf %7, %9 : vector<192x128xf32>
    %c0_5 = arith.constant 0 : index
    %c0_6 = arith.constant 0 : index
    %11 = vector.load %arg7[%c0_5, %c0_6] : memref<192x128xf32, #tpu.memory_space<vmem>>, vector<192x128xf32>
    tpu.vector_store %arg7[%c0_5, %c0_6], %10 {strides = array<i32>} : memref<192x128xf32, #tpu.memory_space<vmem>>, vector<192x128xf32>,
    %c0_i32_7 = arith.constant 0 : i32
    %12 = arith.cmpi eq, %arg1, %c0_i32_7 : i32
    %13 = arith.extui %12 : i1 to i32
    %c0_i32_8 = arith.constant 0 : i32
    %14 = arith.cmpi ne, %13, %c0_i32_8 : i32
    scf.if %14 {
      %c0_9 = arith.constant 0 : index
      %c0_10 = arith.constant 0 : index
      %15 = vector.load %arg7[%c0_9, %c0_10] : memref<192x128xf32, #tpu.memory_space<vmem>>, vector<192x128xf32>
      %c0_11 = arith.constant 0 : index
      %c0_12 = arith.constant 0 : index
      %16 = vector.load %arg4[%c0_11, %c0_12] : memref<1x128xf32, #tpu.memory_space<vmem>>, vector<1x128xf32>
      %17 = vector.broadcast %16 : vector<1x128xf32> to vector<192x128xf32>
      %18 = arith.addf %15, %17 : vector<192x128xf32>
      %cst_13 = arith.constant 0.000000e+00 : f32
      %19 = vector.broadcast %cst_13 : f32 to vector<192x128xf32>
      %20 = arith.maximumf %18, %19 : vector<192x128xf32>
      %21 = arith.truncf %20 : vector<192x128xf32> to vector<192x128xbf16>
      %c0_14 = arith.constant 0 : index
      %c0_15 = arith.constant 0 : index
      %22 = vector.load %arg5[%c0_14, %c0_15] : memref<128x128xbf16, #tpu.memory_space<vmem>>, vector<128x128xbf16>
      %cst_16 = arith.constant dense<0.000000e+00> : vector<192x128xf32>
      %23 = tpu.matmul %21, %22, %cst_16 {dimension_numbers = #tpu.dot_dimension_numbers<[1], [0], [0], [1], [0, 0, 1, 1], [], []>} : vector<192x128xbf16>, vector<128x128xbf16>, vector<192x128xf32> -> vector<192x128xf32>
      %24 = arith.truncf %23 : vector<192x128xf32> to vector<192x128xbf16>
      %c0_17 = arith.constant 0 : index
      %c0_18 = arith.constant 0 : index
      %25 = vector.load %arg6[%c0_17, %c0_18] : memref<192x128xbf16, #tpu.memory_space<vmem>>, vector<192x128xbf16>
      tpu.vector_store %arg6[%c0_17, %c0_18], %24 {strides = array<i32>} : memref<192x128xbf16, #tpu.memory_space<vmem>>, vector<192x128xbf16>,
    } else {
    }
    return
  }
  func.func @transform_0(%arg0: i32, %arg1: i32) -> (i32, i32) {
    %c0_i32 = arith.constant 0 : i32
    return %arg0, %arg1 : i32, i32
  }
  func.func @transform_1(%arg0: i32, %arg1: i32) -> (i32, i32) {
    %c0_i32 = arith.constant 0 : i32
    %c0_i32_0 = arith.constant 0 : i32
    %c0_i32_1 = arith.constant 0 : i32
    return %c0_i32, %c0_i32_0 : i32, i32
  }
  func.func @transform_2(%arg0: i32, %arg1: i32) -> (i32, i32) {
    %c0_i32 = arith.constant 0 : i32
    %c0_i32_0 = arith.constant 0 : i32
    %c0_i32_1 = arith.constant 0 : i32
    return %c0_i32, %c0_i32_0 : i32, i32
  }
  func.func @transform_3(%arg0: i32, %arg1: i32) -> (i32, i32) {
    %c0_i32 = arith.constant 0 : i32
    %c0_i32_0 = arith.constant 0 : i32
    %c0_i32_1 = arith.constant 0 : i32
    return %c0_i32, %c0_i32_0 : i32, i32
  }
  func.func @transform_4(%arg0: i32, %arg1: i32) -> (i32, i32) {
    %c0_i32 = arith.constant 0 : i32
    %c0_i32_0 = arith.constant 0 : i32
    return %arg0, %c0_i32 : i32, i32
  }
}

</mosaic_0001>

<llo_original>
// kernel: encoder_forward.4
$region0: #{encoder_forward.4}
  #allocation0 [shape = 'u32[]', space=smem, size = 0x4, offset = 0x4, fixed_abs, tag = 'smem constant byte address 0x4 - core index']
  #allocation1 [shape = 'u32[144,128]{1,0:T(1,128)}', space=vmem, size = 0x12000, scoped, tag = 'internal scratch']
  %s0 = inlined_call_operand.vmem [shape: bf16[384,128], index: 0, kind: input, shape index: {}]
  %s1 = inlined_call_operand.vmem [shape: bf16[128,128], index: 1, kind: input, shape index: {}]
  %s2 = inlined_call_operand.vmem [shape: bf16[384,128], index: 2, kind: output, shape index: {}]
  %s3 = sld [smem:[#allocation0]]
  $region18: #{encoder_forward.4} parent=0
    _
  %s5 = ssub.s32 1, %s3
  %s6 = scalar_select 0, %s5, %s3
  // Predicated region
  $region2: #{encoder_forward.4} parent=0 // pred_check
    _
  $region3: #{encoder_forward.4} parent=0 // pred_check_branch
    %8 = sbr.rel (0) target = $region5
  $region4: #{encoder_forward.4} parent=0 // pred_region
    _
  $region5: #{encoder_forward.4} parent=0 // pred_fallthru
    _
  // Predicated region
  $region6: #{encoder_forward.4} parent=0 // pred_check
    _
  $region7: #{encoder_forward.4} parent=0 // pred_check_branch
    %10 = sbr.rel (0) target = $region9
  $region8: #{encoder_forward.4} parent=0 // pred_region
    _
  $region9: #{encoder_forward.4} parent=0 // pred_fallthru
    _
  %v12 = vld [vmem:[%s0] sm:$0xf]
  %v13 = vld [vmem:[%s0 + $0x4] sm:$0xf]
  %v14 = vld [vmem:[%s0 + $0x8] sm:$0xf]
  %v15 = vld [vmem:[%s0 + $0xc] sm:$0xf]
  %v16 = vld [vmem:[%s0 + $0x10] sm:$0xf]
  %v17 = vld [vmem:[%s0 + $0x14] sm:$0xf]
  %v18 = vld [vmem:[%s0 + $0x18] sm:$0xf]
  %v19 = vld [vmem:[%s0 + $0x1c] sm:$0xf]
  %v20 = vld [vmem:[%s0 + $0x20] sm:$0xf]
  %v21 = vld [vmem:[%s0 + $0x24] sm:$0xf]
  %v22 = vld [vmem:[%s0 + $0x28] sm:$0xf]
  %v23 = vld [vmem:[%s0 + $0x2c] sm:$0xf]
  %v24 = vld [vmem:[%s0 + $0x30] sm:$0xf]
  %v25 = vld [vmem:[%s0 + $0x34] sm:$0xf]
  %v26 = vld [vmem:[%s0 + $0x38] sm:$0xf]
  %v27 = vld [vmem:[%s0 + $0x3c] sm:$0xf]
  %v28 = vld [vmem:[%s0 + $0x40] sm:$0xf]
  %v29 = vld [vmem:[%s0 + $0x44] sm:$0xf]
  %v30 = vld [vmem:[%s0 + $0x48] sm:$0xf]
  %v31 = vld [vmem:[%s0 + $0x4c] sm:$0xf]
  %v32 = vld [vmem:[%s0 + $0x50] sm:$0xf]
  %v33 = vld [vmem:[%s0 + $0x54] sm:$0xf]
  %v34 = vld [vmem:[%s0 + $0x58] sm:$0xf]
  %v35 = vld [vmem:[%s0 + $0x5c] sm:$0xf]
  %v36 = vld [vmem:[%s0 + $0x60] sm:$0xf]
  %v37 = vld [vmem:[%s0 + $0x64] sm:$0xf]
  %v38 = vld [vmem:[%s0 + $0x68] sm:$0xf]
  %v39 = vld [vmem:[%s0 + $0x6c] sm:$0xf]
  %v40 = vld [vmem:[%s0 + $0x70] sm:$0xf]
  %v41 = vld [vmem:[%s0 + $0x74] sm:$0xf]
  %v42 = vld [vmem:[%s0 + $0x78] sm:$0xf]
  %v43 = vld [vmem:[%s0 + $0x7c] sm:$0xf]
  %v44 = vld [vmem:[%s0 + $0x80] sm:$0xf]
  %v45 = vld [vmem:[%s0 + $0x84] sm:$0xf]
  %v46 = vld [vmem:[%s0 + $0x88] sm:$0xf]
  %v47 = vld [vmem:[%s0 + $0x8c] sm:$0xf]
  %v48 = vld [vmem:[%s0 + $0x90] sm:$0xf]
  %v49 = vld [vmem:[%s0 + $0x94] sm:$0xf]
  %v50 = vld [vmem:[%s0 + $0x98] sm:$0xf]
  %v51 = vld [vmem:[%s0 + $0x9c] sm:$0xf]
  %v52 = vld [vmem:[%s0 + $0xa0] sm:$0xf]
  %v53 = vld [vmem:[%s0 + $0xa4] sm:$0xf]
  %v54 = vld [vmem:[%s0 + $0xa8] sm:$0xf]
  %v55 = vld [vmem:[%s0 + $0xac] sm:$0xf]
  %v56 = vld [vmem:[%s0 + $0xb0] sm:$0xf]
  %v57 = vld [vmem:[%s0 + $0xb4] sm:$0xf]
  %v58 = vld [vmem:[%s0 + $0xb8] sm:$0xf]
  %v59 = vld [vmem:[%s0 + $0xbc] sm:$0xf]
  %v60 = vld [vmem:[%s1] sm:$0xf]
  %v61 = vld [vmem:[%s1 + $0x4] sm:$0xf]
  %v62 = vld [vmem:[%s1 + $0x8] sm:$0xf]
  %v63 = vld [vmem:[%s1 + $0xc] sm:$0xf]
  %v64 = vld [vmem:[%s1 + $0x10] sm:$0xf]
  %v65 = vld [vmem:[%s1 + $0x14] sm:$0xf]
  %v66 = vld [vmem:[%s1 + $0x18] sm:$0xf]
  %v67 = vld [vmem:[%s1 + $0x1c] sm:$0xf]
  %v68 = vld [vmem:[%s1 + $0x20] sm:$0xf]
  %v69 = vld [vmem:[%s1 + $0x24] sm:$0xf]
  %v70 = vld [vmem:[%s1 + $0x28] sm:$0xf]
  %v71 = vld [vmem:[%s1 + $0x2c] sm:$0xf]
  %v72 = vld [vmem:[%s1 + $0x30] sm:$0xf]
  %v73 = vld [vmem:[%s1 + $0x34] sm:$0xf]
  %v74 = vld [vmem:[%s1 + $0x38] sm:$0xf]
  %v75 = vld [vmem:[%s1 + $0x3c] sm:$0xf]
  %v124 = vunpack.c.l.b16 %v12
  %v125 = vunpack.c.l.b16 %v13
  %v126 = vunpack.c.l.b16 %v14
  %v127 = vunpack.c.l.b16 %v15
  %v128 = vunpack.c.l.b16 %v16
  %v129 = vunpack.c.l.b16 %v17
  %v130 = vunpack.c.l.b16 %v18
  %v131 = vunpack.c.l.b16 %v19
  %v132 = vunpack.c.l.b16 %v20
  %v133 = vunpack.c.l.b16 %v21
  %v134 = vunpack.c.l.b16 %v22
  %v135 = vunpack.c.l.b16 %v23
  %v136 = vunpack.c.l.b16 %v24
  %v137 = vunpack.c.l.b16 %v25
  %v138 = vunpack.c.l.b16 %v26
  %v139 = vunpack.c.l.b16 %v27
  %v140 = vunpack.c.l.b16 %v28
  %v141 = vunpack.c.l.b16 %v29
  %v142 = vunpack.c.l.b16 %v30
  %v143 = vunpack.c.l.b16 %v31
  %v144 = vunpack.c.l.b16 %v32
  %v145 = vunpack.c.l.b16 %v33
  %v146 = vunpack.c.l.b16 %v34
  %v147 = vunpack.c.l.b16 %v35
  %v148 = vunpack.c.l.b16 %v36
  %v149 = vunpack.c.l.b16 %v37
  %v150 = vunpack.c.l.b16 %v38
  %v151 = vunpack.c.l.b16 %v39
  %v152 = vunpack.c.l.b16 %v40
  %v153 = vunpack.c.l.b16 %v41
  %v154 = vunpack.c.l.b16 %v42
  %v155 = vunpack.c.l.b16 %v43
  %v156 = vunpack.c.l.b16 %v44
  %v157 = vunpack.c.l.b16 %v45
  %v158 = vunpack.c.l.b16 %v46
  %v159 = vunpack.c.l.b16 %v47
  %v160 = vunpack.c.l.b16 %v48
  %v161 = vunpack.c.l.b16 %v49
  %v162 = vunpack.c.l.b16 %v50
  %v163 = vunpack.c.l.b16 %v51
  %v164 = vunpack.c.l.b16 %v52
  %v165 = vunpack.c.l.b16 %v53
  %v166 = vunpack.c.l.b16 %v54
  %v167 = vunpack.c.l.b16 %v55
  %v168 = vunpack.c.l.b16 %v56
  %v169 = vunpack.c.l.b16 %v57
  %v170 = vunpack.c.l.b16 %v58
  %v171 = vunpack.c.l.b16 %v59
  %v172 = vpack.c.b16 %v125, %v124
  %v173 = vpack.c.b16 %v127, %v126
  %v174 = vpack.c.b16 %v129, %v128
  %v175 = vpack.c.b16 %v131, %v130
  %v176 = vpack.c.b16 %v133, %v132
  %v177 = vpack.c.b16 %v135, %v134
  %v178 = vpack.c.b16 %v137, %v136
  %v179 = vpack.c.b16 %v139, %v138
  %v180 = vpack.c.b16 %v141, %v140
  %v181 = vpack.c.b16 %v143, %v142
  %v182 = vpack.c.b16 %v145, %v144
  %v183 = vpack.c.b16 %v147, %v146
  %v184 = vpack.c.b16 %v149, %v148
  %v185 = vpack.c.b16 %v151, %v150
  %v186 = vpack.c.b16 %v153, %v152
  %v187 = vpack.c.b16 %v155, %v154
  %v188 = vpack.c.b16 %v157, %v156
  %v189 = vpack.c.b16 %v159, %v158
  %v190 = vpack.c.b16 %v161, %v160
  %v191 = vpack.c.b16 %v163, %v162
  %v192 = vpack.c.b16 %v165, %v164
  %v193 = vpack.c.b16 %v167, %v166
  %v194 = vpack.c.b16 %v169, %v168
  %v195 = vpack.c.b16 %v171, %v170
  %v236 = vunpack.c.l.b16 %v60
  %v237 = vunpack.c.l.b16 %v61
  %v238 = vunpack.c.l.b16 %v62
  %v239 = vunpack.c.l.b16 %v63
  %v240 = vunpack.c.l.b16 %v64
  %v241 = vunpack.c.l.b16 %v65
  %v242 = vunpack.c.l.b16 %v66
  %v243 = vunpack.c.l.b16 %v67
  %v244 = vunpack.c.l.b16 %v68
  %v245 = vunpack.c.l.b16 %v69
  %v246 = vunpack.c.l.b16 %v70
  %v247 = vunpack.c.l.b16 %v71
  %v248 = vunpack.c.l.b16 %v72
  %v249 = vunpack.c.l.b16 %v73
  %v250 = vunpack.c.l.b16 %v74
  %v251 = vunpack.c.l.b16 %v75
  %v252 = vpack.c.b16 %v237, %v236
  %v253 = vpack.c.b16 %v239, %v238
  %v254 = vpack.c.b16 %v241, %v240
  %v255 = vpack.c.b16 %v243, %v242
  %v256 = vpack.c.b16 %v245, %v244
  %v257 = vpack.c.b16 %v247, %v246
  %v258 = vpack.c.b16 %v249, %v248
  %v259 = vpack.c.b16 %v251, %v250
  %268 = vmatprep.subr.bf16.mxu0 0
  %269 = vmatpush1.bf16.msra.mxu0 %v259
  %270 = vmatprep.subr.bf16.mxu0 0
  %271 = vmatpush1.bf16.msra.mxu0 %v258
  %272 = vmatprep.subr.bf16.mxu0 0
  %273 = vmatpush1.bf16.msra.mxu0 %v257
  %274 = vmatprep.subr.bf16.mxu0 0
  %275 = vmatpush1.bf16.msra.mxu0 %v256
  %276 = vmatprep.subr.bf16.mxu0 0
  %277 = vmatpush1.bf16.msra.mxu0 %v255
  %278 = vmatprep.subr.bf16.mxu0 0
  %279 = vmatpush1.bf16.msra.mxu0 %v254
  %280 = vmatprep.subr.bf16.mxu0 0
  %281 = vmatpush1.bf16.msra.mxu0 %v253
  %282 = vmatprep.subr.bf16.mxu0 0
  %283 = vmatpush1.bf16.msra.mxu0 %v252
  %284 = vmatprep.subr.bf16.mxu0 0
  %285 = vmatpush2.bf16.msra.mxu0 0
  %286 = vmatprep.subr.bf16.mxu0 0
  %287 = vmatpush2.bf16.msra.mxu0 0
  %288 = vmatprep.subr.bf16.mxu0 0
  %289 = vmatpush2.bf16.msra.mxu0 0
  %290 = vmatprep.subr.bf16.mxu0 0
  %291 = vmatpush2.bf16.msra.mxu0 0
  %292 = vmatprep.subr.bf16.mxu0 0
  %293 = vmatpush2.bf16.msra.mxu0 0
  %294 = vmatprep.subr.bf16.mxu0 0
  %295 = vmatpush2.bf16.msra.mxu0 0
  %296 = vmatprep.subr.bf16.mxu0 0
  %297 = vmatpush2.bf16.msra.mxu0 0
  %298 = vmatprep.subr.bf16.mxu0 0
  %299 = vmatpush2.bf16.msra.mxu0 0
  %300 = vmatprep.mubr.bf16.mxu0 0
  %301 = vmatmul.mubr.bf16.gmra.mxu0 %v172
  %v302 = vpop.f32.mrf.mxu0
  %v303 = vadd.f32 0.0, %v302
  %v304 = vpop.f32.mrf.mxu0
  %v305 = vpop.f32.mrf.mxu0
  %v306 = vadd.f32 0.0, %v305
  %v307 = vpop.f32.mrf.mxu0
  %308 = vmatprep.mubr.bf16.mxu0 0
  %309 = vmatmul.mubr.bf16.gmra.mxu0 %v173
  %v310 = vpop.f32.mrf.mxu0
  %v311 = vadd.f32 0.0, %v310
  %v312 = vpop.f32.mrf.mxu0
  %v313 = vpop.f32.mrf.mxu0
  %v314 = vadd.f32 0.0, %v313
  %v315 = vpop.f32.mrf.mxu0
  %316 = vmatprep.mubr.bf16.mxu0 0
  %317 = vmatmul.mubr.bf16.gmra.mxu0 %v174
  %v318 = vpop.f32.mrf.mxu0
  %v319 = vadd.f32 0.0, %v318
  %v320 = vpop.f32.mrf.mxu0
  %v321 = vpop.f32.mrf.mxu0
  %v322 = vadd.f32 0.0, %v321
  %v323 = vpop.f32.mrf.mxu0
  %324 = vmatprep.mubr.bf16.mxu0 0
  %325 = vmatmul.mubr.bf16.gmra.mxu0 %v175
  %v326 = vpop.f32.mrf.mxu0
  %v327 = vadd.f32 0.0, %v326
  %v328 = vpop.f32.mrf.mxu0
  %v329 = vpop.f32.mrf.mxu0
  %v330 = vadd.f32 0.0, %v329
  %v331 = vpop.f32.mrf.mxu0
  %332 = vmatprep.mubr.bf16.mxu0 0
  %333 = vmatmul.mubr.bf16.gmra.mxu0 %v176
  %v334 = vpop.f32.mrf.mxu0
  %v335 = vadd.f32 0.0, %v334
  %v336 = vpop.f32.mrf.mxu0
  %v337 = vpop.f32.mrf.mxu0
  %v338 = vadd.f32 0.0, %v337
  %v339 = vpop.f32.mrf.mxu0
  %340 = vmatprep.mubr.bf16.mxu0 0
  %341 = vmatmul.mubr.bf16.gmra.mxu0 %v177
  %v342 = vpop.f32.mrf.mxu0
  %v343 = vadd.f32 0.0, %v342
  %v344 = vpop.f32.mrf.mxu0
  %v345 = vpop.f32.mrf.mxu0
  %v346 = vadd.f32 0.0, %v345
  %v347 = vpop.f32.mrf.mxu0
  %348 = vmatprep.mubr.bf16.mxu0 0
  %349 = vmatmul.mubr.bf16.gmra.mxu0 %v178
  %v350 = vpop.f32.mrf.mxu0
  %v351 = vadd.f32 0.0, %v350
  %v352 = vpop.f32.mrf.mxu0
  %v353 = vpop.f32.mrf.mxu0
  %v354 = vadd.f32 0.0, %v353
  %v355 = vpop.f32.mrf.mxu0
  %356 = vmatprep.mubr.bf16.mxu0 0
  %357 = vmatmul.mubr.bf16.gmra.mxu0 %v179
  %v358 = vpop.f32.mrf.mxu0
  %v359 = vadd.f32 0.0, %v358
  %v360 = vpop.f32.mrf.mxu0
  %v361 = vpop.f32.mrf.mxu0
  %v362 = vadd.f32 0.0, %v361
  %v363 = vpop.f32.mrf.mxu0
  %364 = vmatprep.mubr.bf16.mxu0 0
  %365 = vmatmul.mubr.bf16.gmra.mxu0 %v180
  %v366 = vpop.f32.mrf.mxu0
  %v367 = vadd.f32 0.0, %v366
  %v368 = vpop.f32.mrf.mxu0
  %v369 = vpop.f32.mrf.mxu0
  %v370 = vadd.f32 0.0, %v369
  %v371 = vpop.f32.mrf.mxu0
  %372 = vmatprep.mubr.bf16.mxu0 0
  %373 = vmatmul.mubr.bf16.gmra.mxu0 %v181
  %v374 = vpop.f32.mrf.mxu0
  %v375 = vadd.f32 0.0, %v374
  %v376 = vpop.f32.mrf.mxu0
  %v377 = vpop.f32.mrf.mxu0
  %v378 = vadd.f32 0.0, %v377
  %v379 = vpop.f32.mrf.mxu0
  %380 = vmatprep.mubr.bf16.mxu0 0
  %381 = vmatmul.mubr.bf16.gmra.mxu0 %v182
  %v382 = vpop.f32.mrf.mxu0
  %v383 = vadd.f32 0.0, %v382
  %v384 = vpop.f32.mrf.mxu0
  %v385 = vpop.f32.mrf.mxu0
  %v386 = vadd.f32 0.0, %v385
  %v387 = vpop.f32.mrf.mxu0
  %388 = vmatprep.mubr.bf16.mxu0 0
  %389 = vmatmul.mubr.bf16.gmra.mxu0 %v183
  %v390 = vpop.f32.mrf.mxu0
  %v391 = vadd.f32 0.0, %v390
  %v392 = vpop.f32.mrf.mxu0
  %v393 = vpop.f32.mrf.mxu0
  %v394 = vadd.f32 0.0, %v393
  %v395 = vpop.f32.mrf.mxu0
  %396 = vmatprep.mubr.bf16.mxu0 0
  %397 = vmatmul.mubr.bf16.gmra.mxu0 %v184
  %v398 = vpop.f32.mrf.mxu0
  %v399 = vadd.f32 0.0, %v398
  %v400 = vpop.f32.mrf.mxu0
  %v401 = vpop.f32.mrf.mxu0
  %v402 = vadd.f32 0.0, %v401
  %v403 = vpop.f32.mrf.mxu0
  %404 = vmatprep.mubr.bf16.mxu0 0
  %405 = vmatmul.mubr.bf16.gmra.mxu0 %v185
  %v406 = vpop.f32.mrf.mxu0
  %v407 = vadd.f32 0.0, %v406
  %v408 = vpop.f32.mrf.mxu0
  %v409 = vpop.f32.mrf.mxu0
  %v410 = vadd.f32 0.0, %v409
  %v411 = vpop.f32.mrf.mxu0
  %412 = vmatprep.mubr.bf16.mxu0 0
  %413 = vmatmul.mubr.bf16.gmra.mxu0 %v186
  %v414 = vpop.f32.mrf.mxu0
  %v415 = vadd.f32 0.0, %v414
  %v416 = vpop.f32.mrf.mxu0
  %v417 = vpop.f32.mrf.mxu0
  %v418 = vadd.f32 0.0, %v417
  %v419 = vpop.f32.mrf.mxu0
  %420 = vmatprep.mubr.bf16.mxu0 0
  %421 = vmatmul.mubr.bf16.gmra.mxu0 %v187
  %v422 = vpop.f32.mrf.mxu0
  %v423 = vadd.f32 0.0, %v422
  %v424 = vpop.f32.mrf.mxu0
  %v425 = vpop.f32.mrf.mxu0
  %v426 = vadd.f32 0.0, %v425
  %v427 = vpop.f32.mrf.mxu0
  %428 = vmatprep.mubr.bf16.mxu0 0
  %429 = vmatmul.mubr.bf16.gmra.mxu0 %v188
  %v430 = vpop.f32.mrf.mxu0
  %v431 = vadd.f32 0.0, %v430
  %v432 = vpop.f32.mrf.mxu0
  %v433 = vpop.f32.mrf.mxu0
  %v434 = vadd.f32 0.0, %v433
  %v435 = vpop.f32.mrf.mxu0
  %436 = vmatprep.mubr.bf16.mxu0 0
  %437 = vmatmul.mubr.bf16.gmra.mxu0 %v189
  %v438 = vpop.f32.mrf.mxu0
  %v439 = vadd.f32 0.0, %v438
  %v440 = vpop.f32.mrf.mxu0
  %v441 = vpop.f32.mrf.mxu0
  %v442 = vadd.f32 0.0, %v441
  %v443 = vpop.f32.mrf.mxu0
  %444 = vmatprep.mubr.bf16.mxu0 0
  %445 = vmatmul.mubr.bf16.gmra.mxu0 %v190
  %v446 = vpop.f32.mrf.mxu0
  %v447 = vadd.f32 0.0, %v446
  %v448 = vpop.f32.mrf.mxu0
  %v449 = vpop.f32.mrf.mxu0
  %v450 = vadd.f32 0.0, %v449
  %v451 = vpop.f32.mrf.mxu0
  %452 = vmatprep.mubr.bf16.mxu0 0
  %453 = vmatmul.mubr.bf16.gmra.mxu0 %v191
  %v454 = vpop.f32.mrf.mxu0
  %v455 = vadd.f32 0.0, %v454
  %v456 = vpop.f32.mrf.mxu0
  %v457 = vpop.f32.mrf.mxu0
  %v458 = vadd.f32 0.0, %v457
  %v459 = vpop.f32.mrf.mxu0
  %460 = vmatprep.mubr.bf16.mxu0 0
  %461 = vmatmul.mubr.bf16.gmra.mxu0 %v192
  %v462 = vpop.f32.mrf.mxu0
  %v463 = vadd.f32 0.0, %v462
  %v464 = vpop.f32.mrf.mxu0
  %v465 = vpop.f32.mrf.mxu0
  %v466 = vadd.f32 0.0, %v465
  %v467 = vpop.f32.mrf.mxu0
  %468 = vmatprep.mubr.bf16.mxu0 0
  %469 = vmatmul.mubr.bf16.gmra.mxu0 %v193
  %v470 = vpop.f32.mrf.mxu0
  %v471 = vadd.f32 0.0, %v470
  %v472 = vpop.f32.mrf.mxu0
  %v473 = vpop.f32.mrf.mxu0
  %v474 = vadd.f32 0.0, %v473
  %v475 = vpop.f32.mrf.mxu0
  %476 = vmatprep.mubr.bf16.mxu0 0
  %477 = vmatmul.mubr.bf16.gmra.mxu0 %v194
  %v478 = vpop.f32.mrf.mxu0
  %v479 = vadd.f32 0.0, %v478
  %v480 = vpop.f32.mrf.mxu0
  %v481 = vpop.f32.mrf.mxu0
  %v482 = vadd.f32 0.0, %v481
  %v483 = vpop.f32.mrf.mxu0
  %484 = vmatprep.mubr.bf16.mxu0 0
  %485 = vmatmul.mubr.bf16.gmra.mxu0 %v195
  %v486 = vpop.f32.mrf.mxu0
  %v487 = vadd.f32 0.0, %v486
  %v488 = vpop.f32.mrf.mxu0
  %v489 = vpop.f32.mrf.mxu0
  %v490 = vadd.f32 0.0, %v489
  %v491 = vpop.f32.mrf.mxu0
  %492 = vdwg.mxu0
  %v493 = vpack.c.bf16 %v306, %v303
  %v494 = vpack.c.bf16 %v314, %v311
  %v495 = vpack.c.bf16 %v322, %v319
  %v496 = vpack.c.bf16 %v330, %v327
  %v497 = vpack.c.bf16 %v338, %v335
  %v498 = vpack.c.bf16 %v346, %v343
  %v499 = vpack.c.bf16 %v354, %v351
  %v500 = vpack.c.bf16 %v362, %v359
  %v501 = vpack.c.bf16 %v370, %v367
  %v502 = vpack.c.bf16 %v378, %v375
  %v503 = vpack.c.bf16 %v386, %v383
  %v504 = vpack.c.bf16 %v394, %v391
  %v505 = vpack.c.bf16 %v402, %v399
  %v506 = vpack.c.bf16 %v410, %v407
  %v507 = vpack.c.bf16 %v418, %v415
  %v508 = vpack.c.bf16 %v426, %v423
  %v509 = vpack.c.bf16 %v434, %v431
  %v510 = vpack.c.bf16 %v442, %v439
  %v511 = vpack.c.bf16 %v450, %v447
  %v512 = vpack.c.bf16 %v458, %v455
  %v513 = vpack.c.bf16 %v466, %v463
  %v514 = vpack.c.bf16 %v474, %v471
  %v515 = vpack.c.bf16 %v482, %v479
  %v516 = vpack.c.bf16 %v490, %v487
  %v541 = vunpack.c.l.b16 %v493
  %v542 = vunpack.c.h.b16 %v493
  %v543 = vunpack.c.l.b16 %v494
  %v544 = vunpack.c.h.b16 %v494
  %v545 = vunpack.c.l.b16 %v495
  %v546 = vunpack.c.h.b16 %v495
  %v547 = vunpack.c.l.b16 %v496
  %v548 = vunpack.c.h.b16 %v496
  %v549 = vunpack.c.l.b16 %v497
  %v550 = vunpack.c.h.b16 %v497
  %v551 = vunpack.c.l.b16 %v498
  %v552 = vunpack.c.h.b16 %v498
  %v553 = vunpack.c.l.b16 %v499
  %v554 = vunpack.c.h.b16 %v499
  %v555 = vunpack.c.l.b16 %v500
  %v556 = vunpack.c.h.b16 %v500
  %v557 = vunpack.c.l.b16 %v501
  %v558 = vunpack.c.h.b16 %v501
  %v559 = vunpack.c.l.b16 %v502
  %v560 = vunpack.c.h.b16 %v502
  %v561 = vunpack.c.l.b16 %v503
  %v562 = vunpack.c.h.b16 %v503
  %v563 = vunpack.c.l.b16 %v504
  %v564 = vunpack.c.h.b16 %v504
  %v565 = vunpack.c.l.b16 %v505
  %v566 = vunpack.c.h.b16 %v505
  %v567 = vunpack.c.l.b16 %v506
  %v568 = vunpack.c.h.b16 %v506
  %v569 = vunpack.c.l.b16 %v507
  %v570 = vunpack.c.h.b16 %v507
  %v571 = vunpack.c.l.b16 %v508
  %v572 = vunpack.c.h.b16 %v508
  %v573 = vunpack.c.l.b16 %v509
  %v574 = vunpack.c.h.b16 %v509
  %v575 = vunpack.c.l.b16 %v510
  %v576 = vunpack.c.h.b16 %v510
  %v577 = vunpack.c.l.b16 %v511
  %v578 = vunpack.c.h.b16 %v511
  %v579 = vunpack.c.l.b16 %v512
  %v580 = vunpack.c.h.b16 %v512
  %v581 = vunpack.c.l.b16 %v513
  %v582 = vunpack.c.h.b16 %v513
  %v583 = vunpack.c.l.b16 %v514
  %v584 = vunpack.c.h.b16 %v514
  %v585 = vunpack.c.l.b16 %v515
  %v586 = vunpack.c.h.b16 %v515
  %v587 = vunpack.c.l.b16 %v516
  %v588 = vunpack.c.h.b16 %v516
  %v589 = vpack.c.b16 %v541, %v541
  %v590 = vpack.c.b16 %v542, %v542
  %v591 = vpack.c.b16 %v543, %v543
  %v592 = vpack.c.b16 %v544, %v544
  %v593 = vpack.c.b16 %v545, %v545
  %v594 = vpack.c.b16 %v546, %v546
  %v595 = vpack.c.b16 %v547, %v547
  %v596 = vpack.c.b16 %v548, %v548
  %v597 = vpack.c.b16 %v549, %v549
  %v598 = vpack.c.b16 %v550, %v550
  %v599 = vpack.c.b16 %v551, %v551
  %v600 = vpack.c.b16 %v552, %v552
  %v601 = vpack.c.b16 %v553, %v553
  %v602 = vpack.c.b16 %v554, %v554
  %v603 = vpack.c.b16 %v555, %v555
  %v604 = vpack.c.b16 %v556, %v556
  %v605 = vpack.c.b16 %v557, %v557
  %v606 = vpack.c.b16 %v558, %v558
  %v607 = vpack.c.b16 %v559, %v559
  %v608 = vpack.c.b16 %v560, %v560
  %v609 = vpack.c.b16 %v561, %v561
  %v610 = vpack.c.b16 %v562, %v562
  %v611 = vpack.c.b16 %v563, %v563
  %v612 = vpack.c.b16 %v564, %v564
  %v613 = vpack.c.b16 %v565, %v565
  %v614 = vpack.c.b16 %v566, %v566
  %v615 = vpack.c.b16 %v567, %v567
  %v616 = vpack.c.b16 %v568, %v568
  %v617 = vpack.c.b16 %v569, %v569
  %v618 = vpack.c.b16 %v570, %v570
  %v619 = vpack.c.b16 %v571, %v571
  %v620 = vpack.c.b16 %v572, %v572
  %v621 = vpack.c.b16 %v573, %v573
  %v622 = vpack.c.b16 %v574, %v574
  %v623 = vpack.c.b16 %v575, %v575
  %v624 = vpack.c.b16 %v576, %v576
  %v625 = vpack.c.b16 %v577, %v577
  %v626 = vpack.c.b16 %v578, %v578
  %v627 = vpack.c.b16 %v579, %v579
  %v628 = vpack.c.b16 %v580, %v580
  %v629 = vpack.c.b16 %v581, %v581
  %v630 = vpack.c.b16 %v582, %v582
  %v631 = vpack.c.b16 %v583, %v583
  %v632 = vpack.c.b16 %v584, %v584
  %v633 = vpack.c.b16 %v585, %v585
  %v634 = vpack.c.b16 %v586, %v586
  %v635 = vpack.c.b16 %v587, %v587
  %v636 = vpack.c.b16 %v588, %v588
  %685 = vst [vmem:[%s2] sm:$0xf] %v589
  %686 = vst [vmem:[%s2 + $0x4] sm:$0xf] %v590
  %687 = vst [vmem:[%s2 + $0x8] sm:$0xf] %v591
  %688 = vst [vmem:[%s2 + $0xc] sm:$0xf] %v592
  %689 = vst [vmem:[%s2 + $0x10] sm:$0xf] %v593
  %690 = vst [vmem:[%s2 + $0x14] sm:$0xf] %v594
  %691 = vst [vmem:[%s2 + $0x18] sm:$0xf] %v595
  %692 = vst [vmem:[%s2 + $0x1c] sm:$0xf] %v596
  %693 = vst [vmem:[%s2 + $0x20] sm:$0xf] %v597
  %694 = vst [vmem:[%s2 + $0x24] sm:$0xf] %v598
  %695 = vst [vmem:[%s2 + $0x28] sm:$0xf] %v599
  %696 = vst [vmem:[%s2 + $0x2c] sm:$0xf] %v600
  %697 = vst [vmem:[%s2 + $0x30] sm:$0xf] %v601
  %698 = vst [vmem:[%s2 + $0x34] sm:$0xf] %v602
  %699 = vst [vmem:[%s2 + $0x38] sm:$0xf] %v603
  %700 = vst [vmem:[%s2 + $0x3c] sm:$0xf] %v604
  %701 = vst [vmem:[%s2 + $0x40] sm:$0xf] %v605
  %702 = vst [vmem:[%s2 + $0x44] sm:$0xf] %v606
  %703 = vst [vmem:[%s2 + $0x48] sm:$0xf] %v607
  %704 = vst [vmem:[%s2 + $0x4c] sm:$0xf] %v608
  %705 = vst [vmem:[%s2 + $0x50] sm:$0xf] %v609
  %706 = vst [vmem:[%s2 + $0x54] sm:$0xf] %v610
  %707 = vst [vmem:[%s2 + $0x58] sm:$0xf] %v611
  %708 = vst [vmem:[%s2 + $0x5c] sm:$0xf] %v612
  %709 = vst [vmem:[%s2 + $0x60] sm:$0xf] %v613
  %710 = vst [vmem:[%s2 + $0x64] sm:$0xf] %v614
  %711 = vst [vmem:[%s2 + $0x68] sm:$0xf] %v615
  %712 = vst [vmem:[%s2 + $0x6c] sm:$0xf] %v616
  %713 = vst [vmem:[%s2 + $0x70] sm:$0xf] %v617
  %714 = vst [vmem:[%s2 + $0x74] sm:$0xf] %v618
  %715 = vst [vmem:[%s2 + $0x78] sm:$0xf] %v619
  %716 = vst [vmem:[%s2 + $0x7c] sm:$0xf] %v620
  %717 = vst [vmem:[%s2 + $0x80] sm:$0xf] %v621
  %718 = vst [vmem:[%s2 + $0x84] sm:$0xf] %v622
  %719 = vst [vmem:[%s2 + $0x88] sm:$0xf] %v623
  %720 = vst [vmem:[%s2 + $0x8c] sm:$0xf] %v624
  %721 = vst [vmem:[%s2 + $0x90] sm:$0xf] %v625
  %722 = vst [vmem:[%s2 + $0x94] sm:$0xf] %v626
  %723 = vst [vmem:[%s2 + $0x98] sm:$0xf] %v627
  %724 = vst [vmem:[%s2 + $0x9c] sm:$0xf] %v628
  %725 = vst [vmem:[%s2 + $0xa0] sm:$0xf] %v629
  %726 = vst [vmem:[%s2 + $0xa4] sm:$0xf] %v630
  %727 = vst [vmem:[%s2 + $0xa8] sm:$0xf] %v631
  %728 = vst [vmem:[%s2 + $0xac] sm:$0xf] %v632
  %729 = vst [vmem:[%s2 + $0xb0] sm:$0xf] %v633
  %730 = vst [vmem:[%s2 + $0xb4] sm:$0xf] %v634
  %731 = vst [vmem:[%s2 + $0xb8] sm:$0xf] %v635
  %732 = vst [vmem:[%s2 + $0xbc] sm:$0xf] %v636
  // Predicated region
  $region10: #{encoder_forward.4} parent=0 // pred_check
    _
  $region11: #{encoder_forward.4} parent=0 // pred_check_branch
    %734 = sbr.rel (0) target = $region13
  $region12: #{encoder_forward.4} parent=0 // pred_region
    _
  $region13: #{encoder_forward.4} parent=0 // pred_fallthru
    _
  // Predicated region
  $region14: #{encoder_forward.4} parent=0 // pred_check
    _
  $region15: #{encoder_forward.4} parent=0 // pred_check_branch
    %736 = sbr.rel (0) target = $region17
  $region16: #{encoder_forward.4} parent=0 // pred_region
    _
  $region17: #{encoder_forward.4} parent=0 // pred_fallthru
    _

// kernel: encoder_forward.7
$region0: #{encoder_forward.7}
  #allocation0 [shape = 'u32[]', space=smem, size = 0x4, offset = 0x4, fixed_abs, tag = 'smem constant byte address 0x4 - core index']
  #allocation1 [shape = 'u32[144,128]{1,0:T(1,128)}', space=vmem, size = 0x12000, scoped, tag = 'internal scratch']
  #allocation2 [shape = 'f32[192,128]{1,0:T(8,128)}', space=vmem, size = 0x18000, scoped, tag = 'scratch operand']
  %s0 = inlined_call_operand.vmem [shape: bf16[384,384], index: 0, kind: input, shape index: {}]
  %s1 = inlined_call_operand.vmem [shape: bf16[384,128], index: 1, kind: input, shape index: {}]
  %s2 = inlined_call_operand.vmem [shape: f32[1,128], index: 2, kind: input, shape index: {}]
  %s3 = inlined_call_operand.vmem [shape: f32[384,128], index: 3, kind: output, shape index: {}]
  %s4 = sld [smem:[#allocation0]]
  $region53: #{encoder_forward.7} parent=0
    _
  %s6 = ssub.s32 1, %s4
  %s7 = scalar_select 0, %s6, %s4
  loop: start=0, step=1, limit=4
  $region2: #{encoder_forward.7} parent=0 // loop_pre_header
    _
  $region3: #{encoder_forward.7} parent=0 // loop_header
    %s9 = sphi 0, %s13
    %p10 = scmp.ge.s32.totalorder %s9, 4
    %s16 = sphi 0, %s28
    %s17 = sphi 0, %s24
    %s18 = sphi 0, %s16
    %s19 = sphi 0, %s17
    %s20 = sphi 0, %s18
    %s21 = sphi 0, %s19
    %s33 = sphi 0, %s35
    %s36 = sphi 0, %s33
    %s37 = sphi 0, %s36
    %s53 = sphi 0, %s37
    %s57 = sphi 0, %s57
    %s59 = sphi 0, %s57
    %s60 = sphi 0, %s59
    %s74 = sphi 0, %s60
    %s78 = sphi 0, %s78
    %s80 = sphi 0, %s78
    %s81 = sphi 0, %s80
    %s95 = sphi 0, %s81
    %s101 = sphi 0, %s103
    %s104 = sphi 0, %s101
    %s105 = sphi 0, %s104
    %s121 = sphi 0, %s105
  $region4: #{encoder_forward.7} parent=0 // loop_header_branch
    %12 = sbr.rel (%p10) target = $region8
  $region5: #{encoder_forward.7} parent=0 // loop_body
    %s14 = ssub.s32 %s9, 1
    %s15 = ssub.s32 %s9, 2
    %s22 = sadd.s32 1, %s17
    %p23 = scmp.ge.s32.totalorder %s22, 1
    %s24 = scalar_select %p23, 0, %s22
    %s25 = sadd.s32 1, %s16
    %s26 = scalar_select %p23, %s25, %s16
    %p27 = scmp.ge.s32.totalorder %s26, 2
    %s28 = scalar_select %p27, 0, %s26
    %s29 = ssub.s32 %s16, %s28
    %s30 = ssub.s32 %s17, %s24
    %s31 = sor.u32 %s29, %s30
    %p32 = scmp.eq.s32.totalorder %s31, 0
    %s34 = sadd.s32 %s33, 1
    %s35 = scalar_select %p32, %s33, %s34
    %p38 = pneg %p32
    %p39 = scmp.eq.s32.totalorder %s9, 1
    %p40 = por %p38, %p39
    %p41 = scmp.ne.s32.totalorder %s33, %s36
    %p42 = scmp.eq.s32.totalorder %s9, 0
    %p43 = por %p41, %p42
    %p44 = scmp.ne.s32.totalorder %s33, %s36
    %p45 = scmp.eq.s32.totalorder %s14, 1
    %p46 = por %p44, %p45
    %p47 = scmp.ne.s32.totalorder %s36, %s37
    %p48 = scmp.eq.s32.totalorder %s14, 0
    %p49 = por %p47, %p48
    %p50 = scmp.ne.s32.totalorder %s36, %s37
    %p51 = scmp.eq.s32.totalorder %s15, 1
    %p52 = por %p50, %p51
    %p54 = scmp.ne.s32.totalorder %s37, %s53
    %p55 = scmp.eq.s32.totalorder %s15, 0
    %p56 = por %p54, %p55
    %s58 = sadd.s32 %s57, 1
    %p61 = scmp.eq.s32.totalorder %s9, 1
    %p62 = scmp.ne.s32.totalorder %s57, %s59
    %p63 = scmp.eq.s32.totalorder %s9, 0
    %p64 = por %p62, %p63
    %p65 = scmp.ne.s32.totalorder %s57, %s59
    %p66 = scmp.eq.s32.totalorder %s14, 1
    %p67 = por %p65, %p66
    %p68 = scmp.ne.s32.totalorder %s59, %s60
    %p69 = scmp.eq.s32.totalorder %s14, 0
    %p70 = por %p68, %p69
    %p71 = scmp.ne.s32.totalorder %s59, %s60
    %p72 = scmp.eq.s32.totalorder %s15, 1
    %p73 = por %p71, %p72
    %p75 = scmp.ne.s32.totalorder %s60, %s74
    %p76 = scmp.eq.s32.totalorder %s15, 0
    %p77 = por %p75, %p76
    %s79 = sadd.s32 %s78, 1
    %p82 = scmp.eq.s32.totalorder %s9, 1
    %p83 = scmp.ne.s32.totalorder %s78, %s80
    %p84 = scmp.eq.s32.totalorder %s9, 0
    %p85 = por %p83, %p84
    %p86 = scmp.ne.s32.totalorder %s78, %s80
    %p87 = scmp.eq.s32.totalorder %s14, 1
    %p88 = por %p86, %p87
    %p89 = scmp.ne.s32.totalorder %s80, %s81
    %p90 = scmp.eq.s32.totalorder %s14, 0
    %p91 = por %p89, %p90
    %p92 = scmp.ne.s32.totalorder %s80, %s81
    %p93 = scmp.eq.s32.totalorder %s15, 1
    %p94 = por %p92, %p93
    %p96 = scmp.ne.s32.totalorder %s81, %s95
    %p97 = scmp.eq.s32.totalorder %s15, 0
    %p98 = por %p96, %p97
    %s99 = ssub.s32 %s16, %s28
    %p100 = scmp.eq.s32.totalorder %s99, 0
    %s102 = sadd.s32 %s101, 1
    %s103 = scalar_select %p100, %s101, %s102
    %p106 = pneg %p100
    %p107 = scmp.eq.s32.totalorder %s9, 1
    %p108 = por %p106, %p107
    %p109 = scmp.ne.s32.totalorder %s101, %s104
    %p110 = scmp.eq.s32.totalorder %s9, 0
    %p111 = por %p109, %p110
    %p112 = scmp.ne.s32.totalorder %s101, %s104
    %p113 = scmp.eq.s32.totalorder %s14, 1
    %p114 = por %p112, %p113
    %p115 = scmp.ne.s32.totalorder %s104, %s105
    %p116 = scmp.eq.s32.totalorder %s14, 0
    %p117 = por %p115, %p116
    %p118 = scmp.ne.s32.totalorder %s104, %s105
    %p119 = scmp.eq.s32.totalorder %s15, 1
    %p120 = por %p118, %p119
    %p122 = scmp.ne.s32.totalorder %s105, %s121
    %p123 = scmp.eq.s32.totalorder %s15, 0
    %p124 = por %p122, %p123
    %p125 = scmp.le.s32.totalorder 1, %s9
    %p126 = scmp.lt.s32.totalorder %s9, 3
    %p127 = pnand %p125, %p126
    %p128 = pneg %p127
    // Predicated region
    $region9: #{encoder_forward.7} parent=5 // pred_check
      _
    $region10: #{encoder_forward.7} parent=5 // pred_check_branch
      %130 = sbr.rel (%p127) target = $region12
    $region11: #{encoder_forward.7} parent=5 // pred_region
      %s131 = ssub.s32 %s9, 1
      // Predicated region
      $region13: #{encoder_forward.7} parent=11 // pred_check
        %p132 = pneg %p70
      $region14: #{encoder_forward.7} parent=11 // pred_check_branch
        %134 = sbr.rel (%p132) target = $region16
      $region15: #{encoder_forward.7} parent=11 // pred_region
        _
      $region16: #{encoder_forward.7} parent=11 // pred_fallthru
        _
      // Predicated region
      $region17: #{encoder_forward.7} parent=11 // pred_check
        %p135 = pneg %p91
      $region18: #{encoder_forward.7} parent=11 // pred_check_branch
        %137 = sbr.rel (%p135) target = $region20
      $region19: #{encoder_forward.7} parent=11 // pred_region
        _
      $region20: #{encoder_forward.7} parent=11 // pred_fallthru
        _
    $region12: #{encoder_forward.7} parent=5 // pred_fallthru
      _
    %p138 = scmp.lt.s32.totalorder %s9, 2
    // Predicated region
    $region21: #{encoder_forward.7} parent=5 // pred_check
      %p139 = pneg %p138
    $region22: #{encoder_forward.7} parent=5 // pred_check_branch
      %141 = sbr.rel (%p139) target = $region24
    $region23: #{encoder_forward.7} parent=5 // pred_region
      // Predicated region
      $region25: #{encoder_forward.7} parent=23 // pred_check
        %p142 = pneg %p43
      $region26: #{encoder_forward.7} parent=23 // pred_check_branch
        %144 = sbr.rel (%p142) target = $region28
      $region27: #{encoder_forward.7} parent=23 // pred_region
        %s145 = smul.u32 24, %s16
        %s146 = smul.u32 3, %s17
        %p147 = scmp.lt.s32.totalorder %s145, 47
        %s148 = scalar_select %p147, %s145, 47
        %p149 = scmp.lt.s32.totalorder %s146, 2
        %s150 = scalar_select %p149, %s146, 2
        %s151 = smul.addr %s148, 3
        %s152 = sadd.s32 %s150, %s151
        %s153 = smul.addr %s152, 4
        %s154 = scalar_lea.vmem %s0, %s153
        %s155 = smul.u32 24, %s16
        %s156 = smul.u32 3, %s17
      $region28: #{encoder_forward.7} parent=23 // pred_fallthru
        _
    $region24: #{encoder_forward.7} parent=5 // pred_fallthru
      _
    %p157 = scmp.le.s32.totalorder 1, %s9
    %p158 = scmp.lt.s32.totalorder %s9, 3
    %p159 = pnand %p157, %p158
    %p160 = pneg %p159
    // Predicated region
    $region29: #{encoder_forward.7} parent=5 // pred_check
      _
    $region30: #{encoder_forward.7} parent=5 // pred_check_branch
      %162 = sbr.rel (%p159) target = $region32
    $region31: #{encoder_forward.7} parent=5 // pred_region
      %s163 = ssub.s32 %s9, 1
      %s164 = smul.u32 24, %s18
      %s165 = smul.u32 3, %s19
      %p166 = scmp.lt.s32.totalorder %s164, 47
      %s167 = scalar_select %p166, %s164, 47
      %p168 = scmp.lt.s32.totalorder %s165, 2
      %s169 = scalar_select %p168, %s165, 2
      %s170 = smul.addr %s167, 3
      %s171 = sadd.s32 %s169, %s170
      %s172 = smul.addr %s171, 4
      %s173 = scalar_lea.vmem %s0, %s172
      %p174 = pneg %p49
      %p175 = pneg %p46
      %p176 = pneg %p70
      %p177 = pneg %p67
      %p178 = pneg %p91
      %p179 = pneg %p88
      %p180 = pneg %p117
      %p181 = pneg %p114
      %s182 = smul.u32 24, %s18
      %p183 = scmp.lt.s32.totalorder %s182, 47
      %s184 = scalar_select %p183, %s182, 47
      %s185 = smul.addr %s184, 8
      %s186 = scalar_lea.vmem %s3, %s185
      %s187 = smul.u32 24, %s18
      %s188 = smul.u32 3, %s19
      %p189 = scmp.lt.s32.totalorder %s187, 47
      %s190 = scalar_select %p189, %s187, 47
      %p191 = scmp.lt.s32.totalorder %s188, 2
      %s192 = scalar_select %p191, %s188, 2
      %s193 = smul.addr %s190, 3
      %s194 = sadd.s32 %s192, %s193
      %s195 = smul.addr %s194, 4
      %s196 = scalar_lea.vmem %s0, %s195
      %s197 = smul.u32 24, %s18
      %s198 = smul.u32 3, %s19
      %s199 = smul.u32 24, %s18
      %p200 = scmp.lt.s32.totalorder %s199, 47
      %s201 = scalar_select %p200, %s199, 47
      %s202 = smul.addr %s201, 8
      %s203 = scalar_lea.vmem %s3, %s202
      %s204 = smul.u32 24, %s18
      %p206 = scmp.eq.s32.totalorder %s19, 0
      // Predicated region
      $region33: #{encoder_forward.7} parent=31 // pred_check
        %p207 = pneg %p206
      $region34: #{encoder_forward.7} parent=31 // pred_check_branch
        %209 = sbr.rel (%p207) target = $region36
      $region35: #{encoder_forward.7} parent=31 // pred_region
        %210 = vst [vmem:[#allocation2] sm:$0xff] 0.0
        %211 = vst [vmem:[#allocation2 + $0x8] sm:$0xff] 0.0
        %212 = vst [vmem:[#allocation2 + $0x10] sm:$0xff] 0.0
        %213 = vst [vmem:[#allocation2 + $0x18] sm:$0xff] 0.0
        %214 = vst [vmem:[#allocation2 + $0x20] sm:$0xff] 0.0
        %215 = vst [vmem:[#allocation2 + $0x28] sm:$0xff] 0.0
        %216 = vst [vmem:[#allocation2 + $0x30] sm:$0xff] 0.0
        %217 = vst [vmem:[#allocation2 + $0x38] sm:$0xff] 0.0
        %218 = vst [vmem:[#allocation2 + $0x40] sm:$0xff] 0.0
        %219 = vst [vmem:[#allocation2 + $0x48] sm:$0xff] 0.0
        %220 = vst [vmem:[#allocation2 + $0x50] sm:$0xff] 0.0
        %221 = vst [vmem:[#allocation2 + $0x58] sm:$0xff] 0.0
        %222 = vst [vmem:[#allocation2 + $0x60] sm:$0xff] 0.0
        %223 = vst [vmem:[#allocation2 + $0x68] sm:$0xff] 0.0
        %224 = vst [vmem:[#allocation2 + $0x70] sm:$0xff] 0.0
        %225 = vst [vmem:[#allocation2 + $0x78] sm:$0xff] 0.0
        %226 = vst [vmem:[#allocation2 + $0x80] sm:$0xff] 0.0
        %227 = vst [vmem:[#allocation2 + $0x88] sm:$0xff] 0.0
        %228 = vst [vmem:[#allocation2 + $0x90] sm:$0xff] 0.0
        %229 = vst [vmem:[#allocation2 + $0x98] sm:$0xff] 0.0
        %230 = vst [vmem:[#allocation2 + $0xa0] sm:$0xff] 0.0
        %231 = vst [vmem:[#allocation2 + $0xa8] sm:$0xff] 0.0
        %232 = vst [vmem:[#allocation2 + $0xb0] sm:$0xff] 0.0
        %233 = vst [vmem:[#allocation2 + $0xb8] sm:$0xff] 0.0
      $region36: #{encoder_forward.7} parent=31 // pred_fallthru
        _
      %s234 = smul.u32 %s19, 384
      %s235 = sshra.s32 %s234, 3
      %s236 = sand.u32 %s234, 7
      %s237 = smul.addr %s235, 4
      %s238 = scalar_lea.vmem %s1, %s237
      %v239 = vld [vmem:[%s238] sm:$0xf]
      %v240 = vld [vmem:[%s238 + $0x4] sm:$0xf]
      %v241 = vld [vmem:[%s238 + $0x8] sm:$0xf]
      %v242 = vld [vmem:[%s238 + $0xc] sm:$0xf]
      %v243 = vld [vmem:[%s238 + $0x10] sm:$0xf]
      %v244 = vld [vmem:[%s238 + $0x14] sm:$0xf]
      %v245 = vld [vmem:[%s238 + $0x18] sm:$0xf]
      %v246 = vld [vmem:[%s238 + $0x1c] sm:$0xf]
      %v247 = vld [vmem:[%s238 + $0x20] sm:$0xf]
      %v248 = vld [vmem:[%s238 + $0x24] sm:$0xf]
      %v249 = vld [vmem:[%s238 + $0x28] sm:$0xf]
      %v250 = vld [vmem:[%s238 + $0x2c] sm:$0xf]
      %v251 = vld [vmem:[%s238 + $0x30] sm:$0xf]
      %v252 = vld [vmem:[%s238 + $0x34] sm:$0xf]
      %v253 = vld [vmem:[%s238 + $0x38] sm:$0xf]
      %v254 = vld [vmem:[%s238 + $0x3c] sm:$0xf]
      %v255 = vld [vmem:[%s238 + $0x40] sm:$0xf]
      %v256 = vld [vmem:[%s238 + $0x44] sm:$0xf]
      %v257 = vld [vmem:[%s238 + $0x48] sm:$0xf]
      %v258 = vld [vmem:[%s238 + $0x4c] sm:$0xf]
      %v259 = vld [vmem:[%s238 + $0x50] sm:$0xf]
      %v260 = vld [vmem:[%s238 + $0x54] sm:$0xf]
      %v261 = vld [vmem:[%s238 + $0x58] sm:$0xf]
      %v262 = vld [vmem:[%s238 + $0x5c] sm:$0xf]
      %v263 = vld [vmem:[%s238 + $0x60] sm:$0xf]
      %v264 = vld [vmem:[%s238 + $0x64] sm:$0xf]
      %v265 = vld [vmem:[%s238 + $0x68] sm:$0xf]
      %v266 = vld [vmem:[%s238 + $0x6c] sm:$0xf]
      %v267 = vld [vmem:[%s238 + $0x70] sm:$0xf]
      %v268 = vld [vmem:[%s238 + $0x74] sm:$0xf]
      %v269 = vld [vmem:[%s238 + $0x78] sm:$0xf]
      %v270 = vld [vmem:[%s238 + $0x7c] sm:$0xf]
      %v271 = vld [vmem:[%s238 + $0x80] sm:$0xf]
      %v272 = vld [vmem:[%s238 + $0x84] sm:$0xf]
      %v273 = vld [vmem:[%s238 + $0x88] sm:$0xf]
      %v274 = vld [vmem:[%s238 + $0x8c] sm:$0xf]
      %v275 = vld [vmem:[%s238 + $0x90] sm:$0xf]
      %v276 = vld [vmem:[%s238 + $0x94] sm:$0xf]
      %v277 = vld [vmem:[%s238 + $0x98] sm:$0xf]
      %v278 = vld [vmem:[%s238 + $0x9c] sm:$0xf]
      %v279 = vld [vmem:[%s238 + $0xa0] sm:$0xf]
      %v280 = vld [vmem:[%s238 + $0xa4] sm:$0xf]
      %v281 = vld [vmem:[%s238 + $0xa8] sm:$0xf]
      %v282 = vld [vmem:[%s238 + $0xac] sm:$0xf]
      %v283 = vld [vmem:[%s238 + $0xb0] sm:$0xf]
      %v284 = vld [vmem:[%s238 + $0xb4] sm:$0xf]
      %v285 = vld [vmem:[%s238 + $0xb8] sm:$0xf]
      %v286 = vld [vmem:[%s238 + $0xbc] sm:$0xf]
      %v287 = vld [vmem:[#allocation2] sm:$0xff]
      %v288 = vld [vmem:[#allocation2 + $0x8] sm:$0xff]
      %v289 = vld [vmem:[#allocation2 + $0x10] sm:$0xff]
      %v290 = vld [vmem:[#allocation2 + $0x18] sm:$0xff]
      %v291 = vld [vmem:[#allocation2 + $0x20] sm:$0xff]
      %v292 = vld [vmem:[#allocation2 + $0x28] sm:$0xff]
      %v293 = vld [vmem:[#allocation2 + $0x30] sm:$0xff]
      %v294 = vld [vmem:[#allocation2 + $0x38] sm:$0xff]
      %v295 = vld [vmem:[#allocation2 + $0x40] sm:$0xff]
      %v296 = vld [vmem:[#allocation2 + $0x48] sm:$0xff]
      %v297 = vld [vmem:[#allocation2 + $0x50] sm:$0xff]
      %v298 = vld [vmem:[#allocation2 + $0x58] sm:$0xff]
      %v299 = vld [vmem:[#allocation2 + $0x60] sm:$0xff]
      %v300 = vld [vmem:[#allocation2 + $0x68] sm:$0xff]
      %v301 = vld [vmem:[#allocation2 + $0x70] sm:$0xff]
      %v302 = vld [vmem:[#allocation2 + $0x78] sm:$0xff]
      %v303 = vld [vmem:[#allocation2 + $0x80] sm:$0xff]
      %v304 = vld [vmem:[#allocation2 + $0x88] sm:$0xff]
      %v305 = vld [vmem:[#allocation2 + $0x90] sm:$0xff]
      %v306 = vld [vmem:[#allocation2 + $0x98] sm:$0xff]
      %v307 = vld [vmem:[#allocation2 + $0xa0] sm:$0xff]
      %v308 = vld [vmem:[#allocation2 + $0xa8] sm:$0xff]
      %v309 = vld [vmem:[#allocation2 + $0xb0] sm:$0xff]
      %v310 = vld [vmem:[#allocation2 + $0xb8] sm:$0xff]
      %v311 = vld [vmem:[%s196] sm:$0xff]
      %v312 = vld [vmem:[%s196 + $0x8] sm:$0xf]
      %v313 = vld [vmem:[%s196 + $0xc] sm:$0xff]
      %v314 = vld [vmem:[%s196 + $0x14] sm:$0xf]
      %v315 = vld [vmem:[%s196 + $0x18] sm:$0xff]
      %v316 = vld [vmem:[%s196 + $0x20] sm:$0xf]
      %v317 = vld [vmem:[%s196 + $0x24] sm:$0xff]
      %v318 = vld [vmem:[%s196 + $0x2c] sm:$0xf]
      %v319 = vld [vmem:[%s196 + $0x30] sm:$0xff]
      %v320 = vld [vmem:[%s196 + $0x38] sm:$0xf]
      %v321 = vld [vmem:[%s196 + $0x3c] sm:$0xff]
      %v322 = vld [vmem:[%s196 + $0x44] sm:$0xf]
      %v323 = vld [vmem:[%s196 + $0x48] sm:$0xff]
      %v324 = vld [vmem:[%s196 + $0x50] sm:$0xf]
      %v325 = vld [vmem:[%s196 + $0x54] sm:$0xff]
      %v326 = vld [vmem:[%s196 + $0x5c] sm:$0xf]
      %v327 = vld [vmem:[%s196 + $0x60] sm:$0xff]
      %v328 = vld [vmem:[%s196 + $0x68] sm:$0xf]
      %v329 = vld [vmem:[%s196 + $0x6c] sm:$0xff]
      %v330 = vld [vmem:[%s196 + $0x74] sm:$0xf]
      %v331 = vld [vmem:[%s196 + $0x78] sm:$0xff]
      %v332 = vld [vmem:[%s196 + $0x80] sm:$0xf]
      %v333 = vld [vmem:[%s196 + $0x84] sm:$0xff]
      %v334 = vld [vmem:[%s196 + $0x8c] sm:$0xf]
      %v335 = vld [vmem:[%s196 + $0x90] sm:$0xff]
      %v336 = vld [vmem:[%s196 + $0x98] sm:$0xf]
      %v337 = vld [vmem:[%s196 + $0x9c] sm:$0xff]
      %v338 = vld [vmem:[%s196 + $0xa4] sm:$0xf]
      %v339 = vld [vmem:[%s196 + $0xa8] sm:$0xff]
      %v340 = vld [vmem:[%s196 + $0xb0] sm:$0xf]
      %v341 = vld [vmem:[%s196 + $0xb4] sm:$0xff]
      %v342 = vld [vmem:[%s196 + $0xbc] sm:$0xf]
      %v343 = vld [vmem:[%s196 + $0xc0] sm:$0xff]
      %v344 = vld [vmem:[%s196 + $0xc8] sm:$0xf]
      %v345 = vld [vmem:[%s196 + $0xcc] sm:$0xff]
      %v346 = vld [vmem:[%s196 + $0xd4] sm:$0xf]
      %v347 = vld [vmem:[%s196 + $0xd8] sm:$0xff]
      %v348 = vld [vmem:[%s196 + $0xe0] sm:$0xf]
      %v349 = vld [vmem:[%s196 + $0xe4] sm:$0xff]
      %v350 = vld [vmem:[%s196 + $0xec] sm:$0xf]
      %v351 = vld [vmem:[%s196 + $0xf0] sm:$0xff]
      %v352 = vld [vmem:[%s196 + $0xf8] sm:$0xf]
      %v353 = vld [vmem:[%s196 + $0xfc] sm:$0xff]
      %v354 = vld [vmem:[%s196 + $0x104] sm:$0xf]
      %v355 = vld [vmem:[%s196 + $0x108] sm:$0xff]
      %v356 = vld [vmem:[%s196 + $0x110] sm:$0xf]
      %v357 = vld [vmem:[%s196 + $0x114] sm:$0xff]
      %v358 = vld [vmem:[%s196 + $0x11c] sm:$0xf]
      %v407 = vunpack.c.l.b16 %v311
      %v408 = vunpack.c.h.b16 %v311
      %v409 = vunpack.c.l.b16 %v312
      %v410 = vunpack.c.l.b16 %v313
      %v411 = vunpack.c.h.b16 %v313
      %v412 = vunpack.c.l.b16 %v314
      %v413 = vunpack.c.l.b16 %v315
      %v414 = vunpack.c.h.b16 %v315
      %v415 = vunpack.c.l.b16 %v316
      %v416 = vunpack.c.l.b16 %v317
      %v417 = vunpack.c.h.b16 %v317
      %v418 = vunpack.c.l.b16 %v318
      %v419 = vunpack.c.l.b16 %v319
      %v420 = vunpack.c.h.b16 %v319
      %v421 = vunpack.c.l.b16 %v320
      %v422 = vunpack.c.l.b16 %v321
      %v423 = vunpack.c.h.b16 %v321
      %v424 = vunpack.c.l.b16 %v322
      %v425 = vunpack.c.l.b16 %v323
      %v426 = vunpack.c.h.b16 %v323
      %v427 = vunpack.c.l.b16 %v324
      %v428 = vunpack.c.l.b16 %v325
      %v429 = vunpack.c.h.b16 %v325
      %v430 = vunpack.c.l.b16 %v326
      %v431 = vunpack.c.l.b16 %v327
      %v432 = vunpack.c.h.b16 %v327
      %v433 = vunpack.c.l.b16 %v328
      %v434 = vunpack.c.l.b16 %v329
      %v435 = vunpack.c.h.b16 %v329
      %v436 = vunpack.c.l.b16 %v330
      %v437 = vunpack.c.l.b16 %v331
      %v438 = vunpack.c.h.b16 %v331
      %v439 = vunpack.c.l.b16 %v332
      %v440 = vunpack.c.l.b16 %v333
      %v441 = vunpack.c.h.b16 %v333
      %v442 = vunpack.c.l.b16 %v334
      %v443 = vunpack.c.l.b16 %v335
      %v444 = vunpack.c.h.b16 %v335
      %v445 = vunpack.c.l.b16 %v336
      %v446 = vunpack.c.l.b16 %v337
      %v447 = vunpack.c.h.b16 %v337
      %v448 = vunpack.c.l.b16 %v338
      %v449 = vunpack.c.l.b16 %v339
      %v450 = vunpack.c.h.b16 %v339
      %v451 = vunpack.c.l.b16 %v340
      %v452 = vunpack.c.l.b16 %v341
      %v453 = vunpack.c.h.b16 %v341
      %v454 = vunpack.c.l.b16 %v342
      %v455 = vunpack.c.l.b16 %v343
      %v456 = vunpack.c.h.b16 %v343
      %v457 = vunpack.c.l.b16 %v344
      %v458 = vunpack.c.l.b16 %v345
      %v459 = vunpack.c.h.b16 %v345
      %v460 = vunpack.c.l.b16 %v346
      %v461 = vunpack.c.l.b16 %v347
      %v462 = vunpack.c.h.b16 %v347
      %v463 = vunpack.c.l.b16 %v348
      %v464 = vunpack.c.l.b16 %v349
      %v465 = vunpack.c.h.b16 %v349
      %v466 = vunpack.c.l.b16 %v350
      %v467 = vunpack.c.l.b16 %v351
      %v468 = vunpack.c.h.b16 %v351
      %v469 = vunpack.c.l.b16 %v352
      %v470 = vunpack.c.l.b16 %v353
      %v471 = vunpack.c.h.b16 %v353
      %v472 = vunpack.c.l.b16 %v354
      %v473 = vunpack.c.l.b16 %v355
      %v474 = vunpack.c.h.b16 %v355
      %v475 = vunpack.c.l.b16 %v356
      %v476 = vunpack.c.l.b16 %v357
      %v477 = vunpack.c.h.b16 %v357
      %v478 = vunpack.c.l.b16 %v358
      %v479 = vpack.c.b16 %v410, %v407
      %v480 = vpack.c.b16 %v411, %v408
      %v481 = vpack.c.b16 %v412, %v409
      %v482 = vpack.c.b16 %v416, %v413
      %v483 = vpack.c.b16 %v417, %v414
      %v484 = vpack.c.b16 %v418, %v415
      %v485 = vpack.c.b16 %v422, %v419
      %v486 = vpack.c.b16 %v423, %v420
      %v487 = vpack.c.b16 %v424, %v421
      %v488 = vpack.c.b16 %v428, %v425
      %v489 = vpack.c.b16 %v429, %v426
      %v490 = vpack.c.b16 %v430, %v427
      %v491 = vpack.c.b16 %v434, %v431
      %v492 = vpack.c.b16 %v435, %v432
      %v493 = vpack.c.b16 %v436, %v433
      %v494 = vpack.c.b16 %v440, %v437
      %v495 = vpack.c.b16 %v441, %v438
      %v496 = vpack.c.b16 %v442, %v439
      %v497 = vpack.c.b16 %v446, %v443
      %v498 = vpack.c.b16 %v447, %v444
      %v499 = vpack.c.b16 %v448, %v445
      %v500 = vpack.c.b16 %v452, %v449
      %v501 = vpack.c.b16 %v453, %v450
      %v502 = vpack.c.b16 %v454, %v451
      %v503 = vpack.c.b16 %v458, %v455
      %v504 = vpack.c.b16 %v459, %v456
      %v505 = vpack.c.b16 %v460, %v457
      %v506 = vpack.c.b16 %v464, %v461
      %v507 = vpack.c.b16 %v465, %v462
      %v508 = vpack.c.b16 %v466, %v463
      %v509 = vpack.c.b16 %v470, %v467
      %v510 = vpack.c.b16 %v471, %v468
      %v511 = vpack.c.b16 %v472, %v469
      %v512 = vpack.c.b16 %v476, %v473
      %v513 = vpack.c.b16 %v477, %v474
      %v514 = vpack.c.b16 %v478, %v475
      %v599 = vunpack.c.l.b16 %v239
      %v600 = vunpack.c.l.b16 %v240
      %v601 = vunpack.c.l.b16 %v241
      %v602 = vunpack.c.l.b16 %v242
      %v603 = vunpack.c.l.b16 %v243
      %v604 = vunpack.c.l.b16 %v244
      %v605 = vunpack.c.l.b16 %v245
      %v606 = vunpack.c.l.b16 %v246
      %v607 = vunpack.c.l.b16 %v247
      %v608 = vunpack.c.l.b16 %v248
      %v609 = vunpack.c.l.b16 %v249
      %v610 = vunpack.c.l.b16 %v250
      %v611 = vunpack.c.l.b16 %v251
      %v612 = vunpack.c.l.b16 %v252
      %v613 = vunpack.c.l.b16 %v253
      %v614 = vunpack.c.l.b16 %v254
      %v615 = vunpack.c.l.b16 %v255
      %v616 = vunpack.c.l.b16 %v256
      %v617 = vunpack.c.l.b16 %v257
      %v618 = vunpack.c.l.b16 %v258
      %v619 = vunpack.c.l.b16 %v259
      %v620 = vunpack.c.l.b16 %v260
      %v621 = vunpack.c.l.b16 %v261
      %v622 = vunpack.c.l.b16 %v262
      %v623 = vunpack.c.l.b16 %v263
      %v624 = vunpack.c.l.b16 %v264
      %v625 = vunpack.c.l.b16 %v265
      %v626 = vunpack.c.l.b16 %v266
      %v627 = vunpack.c.l.b16 %v267
      %v628 = vunpack.c.l.b16 %v268
      %v629 = vunpack.c.l.b16 %v269
      %v630 = vunpack.c.l.b16 %v270
      %v631 = vunpack.c.l.b16 %v271
      %v632 = vunpack.c.l.b16 %v272
      %v633 = vunpack.c.l.b16 %v273
      %v634 = vunpack.c.l.b16 %v274
      %v635 = vunpack.c.l.b16 %v275
      %v636 = vunpack.c.l.b16 %v276
      %v637 = vunpack.c.l.b16 %v277
      %v638 = vunpack.c.l.b16 %v278
      %v639 = vunpack.c.l.b16 %v279
      %v640 = vunpack.c.l.b16 %v280
      %v641 = vunpack.c.l.b16 %v281
      %v642 = vunpack.c.l.b16 %v282
      %v643 = vunpack.c.l.b16 %v283
      %v644 = vunpack.c.l.b16 %v284
      %v645 = vunpack.c.l.b16 %v285
      %v646 = vunpack.c.l.b16 %v286
      %v647 = vpack.c.b16 %v600, %v599
      %v648 = vpack.c.b16 %v602, %v601
      %v649 = vpack.c.b16 %v604, %v603
      %v650 = vpack.c.b16 %v606, %v605
      %v651 = vpack.c.b16 %v608, %v607
      %v652 = vpack.c.b16 %v610, %v609
      %v653 = vpack.c.b16 %v612, %v611
      %v654 = vpack.c.b16 %v614, %v613
      %v655 = vpack.c.b16 %v616, %v615
      %v656 = vpack.c.b16 %v618, %v617
      %v657 = vpack.c.b16 %v620, %v619
      %v658 = vpack.c.b16 %v622, %v621
      %v659 = vpack.c.b16 %v624, %v623
      %v660 = vpack.c.b16 %v626, %v625
      %v661 = vpack.c.b16 %v628, %v627
      %v662 = vpack.c.b16 %v630, %v629
      %v663 = vpack.c.b16 %v632, %v631
      %v664 = vpack.c.b16 %v634, %v633
      %v665 = vpack.c.b16 %v636, %v635
      %v666 = vpack.c.b16 %v638, %v637
      %v667 = vpack.c.b16 %v640, %v639
      %v668 = vpack.c.b16 %v642, %v641
      %v669 = vpack.c.b16 %v644, %v643
      %v670 = vpack.c.b16 %v646, %v645
      %695 = vmatprep.subr.bf16.mxu0 0
      %696 = vmatpush1.bf16.msra.mxu0 %v654
      %697 = vmatprep.subr.bf16.mxu0 0
      %698 = vmatpush1.bf16.msra.mxu0 %v653
      %699 = vmatprep.subr.bf16.mxu0 0
      %700 = vmatpush1.bf16.msra.mxu0 %v652
      %701 = vmatprep.subr.bf16.mxu0 0
      %702 = vmatpush1.bf16.msra.mxu0 %v651
      %703 = vmatprep.subr.bf16.mxu0 0
      %704 = vmatpush1.bf16.msra.mxu0 %v650
      %705 = vmatprep.subr.bf16.mxu0 0
      %706 = vmatpush1.bf16.msra.mxu0 %v649
      %707 = vmatprep.subr.bf16.mxu0 0
      %708 = vmatpush1.bf16.msra.mxu0 %v648
      %709 = vmatprep.subr.bf16.mxu0 0
      %710 = vmatpush1.bf16.msra.mxu0 %v647
      %711 = vmatprep.subr.bf16.mxu0 0
      %712 = vmatpush2.bf16.msra.mxu0 %v662
      %713 = vmatprep.subr.bf16.mxu0 0
      %714 = vmatpush2.bf16.msra.mxu0 %v661
      %715 = vmatprep.subr.bf16.mxu0 0
      %716 = vmatpush2.bf16.msra.mxu0 %v660
      %717 = vmatprep.subr.bf16.mxu0 0
      %718 = vmatpush2.bf16.msra.mxu0 %v659
      %719 = vmatprep.subr.bf16.mxu0 0
      %720 = vmatpush2.bf16.msra.mxu0 %v658
      %721 = vmatprep.subr.bf16.mxu0 0
      %722 = vmatpush2.bf16.msra.mxu0 %v657
      %723 = vmatprep.subr.bf16.mxu0 0
      %724 = vmatpush2.bf16.msra.mxu0 %v656
      %725 = vmatprep.subr.bf16.mxu0 0
      %726 = vmatpush2.bf16.msra.mxu0 %v655
      %727 = vmatprep.mubr.bf16.mxu0 %v480
      %728 = vmatmul.mubr.bf16.gmra.mxu0 %v479
      %v729 = vpop.f32.mrf.mxu0
      %v730 = vadd.f32 0.0, %v729
      %v731 = vpop.f32.mrf.mxu0
      %v732 = vpop.f32.mrf.mxu0
      %v733 = vadd.f32 0.0, %v732
      %v734 = vpop.f32.mrf.mxu0
      %735 = vmatprep.mubr.bf16.mxu0 %v483
      %736 = vmatmul.mubr.bf16.gmra.mxu0 %v482
      %v737 = vpop.f32.mrf.mxu0
      %v738 = vadd.f32 0.0, %v737
      %v739 = vpop.f32.mrf.mxu0
      %v740 = vpop.f32.mrf.mxu0
      %v741 = vadd.f32 0.0, %v740
      %v742 = vpop.f32.mrf.mxu0
      %743 = vmatprep.mubr.bf16.mxu0 %v486
      %744 = vmatmul.mubr.bf16.gmra.mxu0 %v485
      %v745 = vpop.f32.mrf.mxu0
      %v746 = vadd.f32 0.0, %v745
      %v747 = vpop.f32.mrf.mxu0
      %v748 = vpop.f32.mrf.mxu0
      %v749 = vadd.f32 0.0, %v748
      %v750 = vpop.f32.mrf.mxu0
      %751 = vmatprep.mubr.bf16.mxu0 %v489
      %752 = vmatmul.mubr.bf16.gmra.mxu0 %v488
      %v753 = vpop.f32.mrf.mxu0
      %v754 = vadd.f32 0.0, %v753
      %v755 = vpop.f32.mrf.mxu0
      %v756 = vpop.f32.mrf.mxu0
      %v757 = vadd.f32 0.0, %v756
      %v758 = vpop.f32.mrf.mxu0
      %759 = vmatprep.mubr.bf16.mxu0 %v492
      %760 = vmatmul.mubr.bf16.gmra.mxu0 %v491
      %v761 = vpop.f32.mrf.mxu0
      %v762 = vadd.f32 0.0, %v761
      %v763 = vpop.f32.mrf.mxu0
      %v764 = vpop.f32.mrf.mxu0
      %v765 = vadd.f32 0.0, %v764
      %v766 = vpop.f32.mrf.mxu0
      %767 = vmatprep.mubr.bf16.mxu0 %v495
      %768 = vmatmul.mubr.bf16.gmra.mxu0 %v494
      %v769 = vpop.f32.mrf.mxu0
      %v770 = vadd.f32 0.0, %v769
      %v771 = vpop.f32.mrf.mxu0
      %v772 = vpop.f32.mrf.mxu0
      %v773 = vadd.f32 0.0, %v772
      %v774 = vpop.f32.mrf.mxu0
      %775 = vmatprep.mubr.bf16.mxu0 %v498
      %776 = vmatmul.mubr.bf16.gmra.mxu0 %v497
      %v777 = vpop.f32.mrf.mxu0
      %v778 = vadd.f32 0.0, %v777
      %v779 = vpop.f32.mrf.mxu0
      %v780 = vpop.f32.mrf.mxu0
      %v781 = vadd.f32 0.0, %v780
      %v782 = vpop.f32.mrf.mxu0
      %783 = vmatprep.mubr.bf16.mxu0 %v501
      %784 = vmatmul.mubr.bf16.gmra.mxu0 %v500
      %v785 = vpop.f32.mrf.mxu0
      %v786 = vadd.f32 0.0, %v785
      %v787 = vpop.f32.mrf.mxu0
      %v788 = vpop.f32.mrf.mxu0
      %v789 = vadd.f32 0.0, %v788
      %v790 = vpop.f32.mrf.mxu0
      %791 = vmatprep.mubr.bf16.mxu0 %v504
      %792 = vmatmul.mubr.bf16.gmra.mxu0 %v503
      %v793 = vpop.f32.mrf.mxu0
      %v794 = vadd.f32 0.0, %v793
      %v795 = vpop.f32.mrf.mxu0
      %v796 = vpop.f32.mrf.mxu0
      %v797 = vadd.f32 0.0, %v796
      %v798 = vpop.f32.mrf.mxu0
      %799 = vmatprep.mubr.bf16.mxu0 %v507
      %800 = vmatmul.mubr.bf16.gmra.mxu0 %v506
      %v801 = vpop.f32.mrf.mxu0
      %v802 = vadd.f32 0.0, %v801
      %v803 = vpop.f32.mrf.mxu0
      %v804 = vpop.f32.mrf.mxu0
      %v805 = vadd.f32 0.0, %v804
      %v806 = vpop.f32.mrf.mxu0
      %807 = vmatprep.mubr.bf16.mxu0 %v510
      %808 = vmatmul.mubr.bf16.gmra.mxu0 %v509
      %v809 = vpop.f32.mrf.mxu0
      %v810 = vadd.f32 0.0, %v809
      %v811 = vpop.f32.mrf.mxu0
      %v812 = vpop.f32.mrf.mxu0
      %v813 = vadd.f32 0.0, %v812
      %v814 = vpop.f32.mrf.mxu0
      %815 = vmatprep.mubr.bf16.mxu0 %v513
      %816 = vmatmul.mubr.bf16.gmra.mxu0 %v512
      %v817 = vpop.f32.mrf.mxu0
      %v818 = vadd.f32 0.0, %v817
      %v819 = vpop.f32.mrf.mxu0
      %v820 = vpop.f32.mrf.mxu0
      %v821 = vadd.f32 0.0, %v820
      %v822 = vpop.f32.mrf.mxu0
      %823 = vdwg.mxu0
      %824 = vmatprep.subr.bf16.mxu0 0
      %825 = vmatpush1.bf16.msra.mxu0 %v670
      %826 = vmatprep.subr.bf16.mxu0 0
      %827 = vmatpush1.bf16.msra.mxu0 %v669
      %828 = vmatprep.subr.bf16.mxu0 0
      %829 = vmatpush1.bf16.msra.mxu0 %v668
      %830 = vmatprep.subr.bf16.mxu0 0
      %831 = vmatpush1.bf16.msra.mxu0 %v667
      %832 = vmatprep.subr.bf16.mxu0 0
      %833 = vmatpush1.bf16.msra.mxu0 %v666
      %834 = vmatprep.subr.bf16.mxu0 0
      %835 = vmatpush1.bf16.msra.mxu0 %v665
      %836 = vmatprep.subr.bf16.mxu0 0
      %837 = vmatpush1.bf16.msra.mxu0 %v664
      %838 = vmatprep.subr.bf16.mxu0 0
      %839 = vmatpush1.bf16.msra.mxu0 %v663
      %840 = vmatprep.subr.bf16.mxu0 0
      %841 = vmatpush2.bf16.msra.mxu0 0
      %842 = vmatprep.subr.bf16.mxu0 0
      %843 = vmatpush2.bf16.msra.mxu0 0
      %844 = vmatprep.subr.bf16.mxu0 0
      %845 = vmatpush2.bf16.msra.mxu0 0
      %846 = vmatprep.subr.bf16.mxu0 0
      %847 = vmatpush2.bf16.msra.mxu0 0
      %848 = vmatprep.subr.bf16.mxu0 0
      %849 = vmatpush2.bf16.msra.mxu0 0
      %850 = vmatprep.subr.bf16.mxu0 0
      %851 = vmatpush2.bf16.msra.mxu0 0
      %852 = vmatprep.subr.bf16.mxu0 0
      %853 = vmatpush2.bf16.msra.mxu0 0
      %854 = vmatprep.subr.bf16.mxu0 0
      %855 = vmatpush2.bf16.msra.mxu0 0
      %856 = vmatprep.mubr.bf16.mxu0 0
      %857 = vmatmul.mubr.bf16.gmra.mxu0 %v481
      %v858 = vpop.f32.mrf.mxu0
      %v859 = vadd.f32 %v730, %v858
      %v860 = vpop.f32.mrf.mxu0
      %v861 = vpop.f32.mrf.mxu0
      %v862 = vadd.f32 %v733, %v861
      %v863 = vpop.f32.mrf.mxu0
      %864 = vmatprep.mubr.bf16.mxu0 0
      %865 = vmatmul.mubr.bf16.gmra.mxu0 %v484
      %v866 = vpop.f32.mrf.mxu0
      %v867 = vadd.f32 %v738, %v866
      %v868 = vpop.f32.mrf.mxu0
      %v869 = vpop.f32.mrf.mxu0
      %v870 = vadd.f32 %v741, %v869
      %v871 = vpop.f32.mrf.mxu0
      %872 = vmatprep.mubr.bf16.mxu0 0
      %873 = vmatmul.mubr.bf16.gmra.mxu0 %v487
      %v874 = vpop.f32.mrf.mxu0
      %v875 = vadd.f32 %v746, %v874
      %v876 = vpop.f32.mrf.mxu0
      %v877 = vpop.f32.mrf.mxu0
      %v878 = vadd.f32 %v749, %v877
      %v879 = vpop.f32.mrf.mxu0
      %880 = vmatprep.mubr.bf16.mxu0 0
      %881 = vmatmul.mubr.bf16.gmra.mxu0 %v490
      %v882 = vpop.f32.mrf.mxu0
      %v883 = vadd.f32 %v754, %v882
      %v884 = vpop.f32.mrf.mxu0
      %v885 = vpop.f32.mrf.mxu0
      %v886 = vadd.f32 %v757, %v885
      %v887 = vpop.f32.mrf.mxu0
      %888 = vmatprep.mubr.bf16.mxu0 0
      %889 = vmatmul.mubr.bf16.gmra.mxu0 %v493
      %v890 = vpop.f32.mrf.mxu0
      %v891 = vadd.f32 %v762, %v890
      %v892 = vpop.f32.mrf.mxu0
      %v893 = vpop.f32.mrf.mxu0
      %v894 = vadd.f32 %v765, %v893
      %v895 = vpop.f32.mrf.mxu0
      %896 = vmatprep.mubr.bf16.mxu0 0
      %897 = vmatmul.mubr.bf16.gmra.mxu0 %v496
      %v898 = vpop.f32.mrf.mxu0
      %v899 = vadd.f32 %v770, %v898
      %v900 = vpop.f32.mrf.mxu0
      %v901 = vpop.f32.mrf.mxu0
      %v902 = vadd.f32 %v773, %v901
      %v903 = vpop.f32.mrf.mxu0
      %904 = vmatprep.mubr.bf16.mxu0 0
      %905 = vmatmul.mubr.bf16.gmra.mxu0 %v499
      %v906 = vpop.f32.mrf.mxu0
      %v907 = vadd.f32 %v778, %v906
      %v908 = vpop.f32.mrf.mxu0
      %v909 = vpop.f32.mrf.mxu0
      %v910 = vadd.f32 %v781, %v909
      %v911 = vpop.f32.mrf.mxu0
      %912 = vmatprep.mubr.bf16.mxu0 0
      %913 = vmatmul.mubr.bf16.gmra.mxu0 %v502
      %v914 = vpop.f32.mrf.mxu0
      %v915 = vadd.f32 %v786, %v914
      %v916 = vpop.f32.mrf.mxu0
      %v917 = vpop.f32.mrf.mxu0
      %v918 = vadd.f32 %v789, %v917
      %v919 = vpop.f32.mrf.mxu0
      %920 = vmatprep.mubr.bf16.mxu0 0
      %921 = vmatmul.mubr.bf16.gmra.mxu0 %v505
      %v922 = vpop.f32.mrf.mxu0
      %v923 = vadd.f32 %v794, %v922
      %v924 = vpop.f32.mrf.mxu0
      %v925 = vpop.f32.mrf.mxu0
      %v926 = vadd.f32 %v797, %v925
      %v927 = vpop.f32.mrf.mxu0
      %928 = vmatprep.mubr.bf16.mxu0 0
      %929 = vmatmul.mubr.bf16.gmra.mxu0 %v508
      %v930 = vpop.f32.mrf.mxu0
      %v931 = vadd.f32 %v802, %v930
      %v932 = vpop.f32.mrf.mxu0
      %v933 = vpop.f32.mrf.mxu0
      %v934 = vadd.f32 %v805, %v933
      %v935 = vpop.f32.mrf.mxu0
      %936 = vmatprep.mubr.bf16.mxu0 0
      %937 = vmatmul.mubr.bf16.gmra.mxu0 %v511
      %v938 = vpop.f32.mrf.mxu0
      %v939 = vadd.f32 %v810, %v938
      %v940 = vpop.f32.mrf.mxu0
      %v941 = vpop.f32.mrf.mxu0
      %v942 = vadd.f32 %v813, %v941
      %v943 = vpop.f32.mrf.mxu0
      %944 = vmatprep.mubr.bf16.mxu0 0
      %945 = vmatmul.mubr.bf16.gmra.mxu0 %v514
      %v946 = vpop.f32.mrf.mxu0
      %v947 = vadd.f32 %v818, %v946
      %v948 = vpop.f32.mrf.mxu0
      %v949 = vpop.f32.mrf.mxu0
      %v950 = vadd.f32 %v821, %v949
      %v951 = vpop.f32.mrf.mxu0
      %952 = vdwg.mxu0
      %v953 = vadd.f32 %v287, %v859
      %v954 = vadd.f32 %v288, %v862
      %v955 = vadd.f32 %v289, %v867
      %v956 = vadd.f32 %v290, %v870
      %v957 = vadd.f32 %v291, %v875
      %v958 = vadd.f32 %v292, %v878
      %v959 = vadd.f32 %v293, %v883
      %v960 = vadd.f32 %v294, %v886
      %v961 = vadd.f32 %v295, %v891
      %v962 = vadd.f32 %v296, %v894
      %v963 = vadd.f32 %v297, %v899
      %v964 = vadd.f32 %v298, %v902
      %v965 = vadd.f32 %v299, %v907
      %v966 = vadd.f32 %v300, %v910
      %v967 = vadd.f32 %v301, %v915
      %v968 = vadd.f32 %v302, %v918
      %v969 = vadd.f32 %v303, %v923
      %v970 = vadd.f32 %v304, %v926
      %v971 = vadd.f32 %v305, %v931
      %v972 = vadd.f32 %v306, %v934
      %v973 = vadd.f32 %v307, %v939
      %v974 = vadd.f32 %v308, %v942
      %v975 = vadd.f32 %v309, %v947
      %v976 = vadd.f32 %v310, %v950
      %977 = vst [vmem:[#allocation2] sm:$0xff] %v953
      %978 = vst [vmem:[#allocation2 + $0x8] sm:$0xff] %v954
      %979 = vst [vmem:[#allocation2 + $0x10] sm:$0xff] %v955
      %980 = vst [vmem:[#allocation2 + $0x18] sm:$0xff] %v956
      %981 = vst [vmem:[#allocation2 + $0x20] sm:$0xff] %v957
      %982 = vst [vmem:[#allocation2 + $0x28] sm:$0xff] %v958
      %983 = vst [vmem:[#allocation2 + $0x30] sm:$0xff] %v959
      %984 = vst [vmem:[#allocation2 + $0x38] sm:$0xff] %v960
      %985 = vst [vmem:[#allocation2 + $0x40] sm:$0xff] %v961
      %986 = vst [vmem:[#allocation2 + $0x48] sm:$0xff] %v962
      %987 = vst [vmem:[#allocation2 + $0x50] sm:$0xff] %v963
      %988 = vst [vmem:[#allocation2 + $0x58] sm:$0xff] %v964
      %989 = vst [vmem:[#allocation2 + $0x60] sm:$0xff] %v965
      %990 = vst [vmem:[#allocation2 + $0x68] sm:$0xff] %v966
      %991 = vst [vmem:[#allocation2 + $0x70] sm:$0xff] %v967
      %992 = vst [vmem:[#allocation2 + $0x78] sm:$0xff] %v968
      %993 = vst [vmem:[#allocation2 + $0x80] sm:$0xff] %v969
      %994 = vst [vmem:[#allocation2 + $0x88] sm:$0xff] %v970
      %995 = vst [vmem:[#allocation2 + $0x90] sm:$0xff] %v971
      %996 = vst [vmem:[#allocation2 + $0x98] sm:$0xff] %v972
      %997 = vst [vmem:[#allocation2 + $0xa0] sm:$0xff] %v973
      %998 = vst [vmem:[#allocation2 + $0xa8] sm:$0xff] %v974
      %999 = vst [vmem:[#allocation2 + $0xb0] sm:$0xff] %v975
      %1000 = vst [vmem:[#allocation2 + $0xb8] sm:$0xff] %v976
      // Predicated region
      $region37: #{encoder_forward.7} parent=31 // pred_check
        %p1001 = pneg %p206
      $region38: #{encoder_forward.7} parent=31 // pred_check_branch
        %1003 = sbr.rel (%p1001) target = $region40
      $region39: #{encoder_forward.7} parent=31 // pred_region
        %v1004 = vld [vmem:[#allocation2] sm:$0xff]
        %v1005 = vld [vmem:[#allocation2 + $0x8] sm:$0xff]
        %v1006 = vld [vmem:[#allocation2 + $0x10] sm:$0xff]
        %v1007 = vld [vmem:[#allocation2 + $0x18] sm:$0xff]
        %v1008 = vld [vmem:[#allocation2 + $0x20] sm:$0xff]
        %v1009 = vld [vmem:[#allocation2 + $0x28] sm:$0xff]
        %v1010 = vld [vmem:[#allocation2 + $0x30] sm:$0xff]
        %v1011 = vld [vmem:[#allocation2 + $0x38] sm:$0xff]
        %v1012 = vld [vmem:[#allocation2 + $0x40] sm:$0xff]
        %v1013 = vld [vmem:[#allocation2 + $0x48] sm:$0xff]
        %v1014 = vld [vmem:[#allocation2 + $0x50] sm:$0xff]
        %v1015 = vld [vmem:[#allocation2 + $0x58] sm:$0xff]
        %v1016 = vld [vmem:[#allocation2 + $0x60] sm:$0xff]
        %v1017 = vld [vmem:[#allocation2 + $0x68] sm:$0xff]
        %v1018 = vld [vmem:[#allocation2 + $0x70] sm:$0xff]
        %v1019 = vld [vmem:[#allocation2 + $0x78] sm:$0xff]
        %v1020 = vld [vmem:[#allocation2 + $0x80] sm:$0xff]
        %v1021 = vld [vmem:[#allocation2 + $0x88] sm:$0xff]
        %v1022 = vld [vmem:[#allocation2 + $0x90] sm:$0xff]
        %v1023 = vld [vmem:[#allocation2 + $0x98] sm:$0xff]
        %v1024 = vld [vmem:[#allocation2 + $0xa0] sm:$0xff]
        %v1025 = vld [vmem:[#allocation2 + $0xa8] sm:$0xff]
        %v1026 = vld [vmem:[#allocation2 + $0xb0] sm:$0xff]
        %v1027 = vld [vmem:[#allocation2 + $0xb8] sm:$0xff]
        %v1028 = vld [vmem:[%s2] sm:$0x1]
        %v1030 = vlaneseq
        %v1031 = vshrl.u32 %v1030, 7
        %v1032 = vsub.s32 0, %v1031
        %v1033 = vrot.slane %v1028, %v1032
        %v1035 = vadd.f32 %v1004, %v1033
        %v1036 = vadd.f32 %v1005, %v1033
        %v1037 = vadd.f32 %v1006, %v1033
        %v1038 = vadd.f32 %v1007, %v1033
        %v1039 = vadd.f32 %v1008, %v1033
        %v1040 = vadd.f32 %v1009, %v1033
        %v1041 = vadd.f32 %v1010, %v1033
        %v1042 = vadd.f32 %v1011, %v1033
        %v1043 = vadd.f32 %v1012, %v1033
        %v1044 = vadd.f32 %v1013, %v1033
        %v1045 = vadd.f32 %v1014, %v1033
        %v1046 = vadd.f32 %v1015, %v1033
        %v1047 = vadd.f32 %v1016, %v1033
        %v1048 = vadd.f32 %v1017, %v1033
        %v1049 = vadd.f32 %v1018, %v1033
        %v1050 = vadd.f32 %v1019, %v1033
        %v1051 = vadd.f32 %v1020, %v1033
        %v1052 = vadd.f32 %v1021, %v1033
        %v1053 = vadd.f32 %v1022, %v1033
        %v1054 = vadd.f32 %v1023, %v1033
        %v1055 = vadd.f32 %v1024, %v1033
        %v1056 = vadd.f32 %v1025, %v1033
        %v1057 = vadd.f32 %v1026, %v1033
        %v1058 = vadd.f32 %v1027, %v1033
        %v1059 = vmax.f32 %v1035, 0.0
        %v1060 = vmax.f32 %v1036, 0.0
        %v1061 = vmax.f32 %v1037, 0.0
        %v1062 = vmax.f32 %v1038, 0.0
        %v1063 = vmax.f32 %v1039, 0.0
        %v1064 = vmax.f32 %v1040, 0.0
        %v1065 = vmax.f32 %v1041, 0.0
        %v1066 = vmax.f32 %v1042, 0.0
        %v1067 = vmax.f32 %v1043, 0.0
        %v1068 = vmax.f32 %v1044, 0.0
        %v1069 = vmax.f32 %v1045, 0.0
        %v1070 = vmax.f32 %v1046, 0.0
        %v1071 = vmax.f32 %v1047, 0.0
        %v1072 = vmax.f32 %v1048, 0.0
        %v1073 = vmax.f32 %v1049, 0.0
        %v1074 = vmax.f32 %v1050, 0.0
        %v1075 = vmax.f32 %v1051, 0.0
        %v1076 = vmax.f32 %v1052, 0.0
        %v1077 = vmax.f32 %v1053, 0.0
        %v1078 = vmax.f32 %v1054, 0.0
        %v1079 = vmax.f32 %v1055, 0.0
        %v1080 = vmax.f32 %v1056, 0.0
        %v1081 = vmax.f32 %v1057, 0.0
        %v1082 = vmax.f32 %v1058, 0.0
        %1083 = vst [vmem:[%s203] sm:$0xff] %v1059
        %1084 = vst [vmem:[%s203 + $0x8] sm:$0xff] %v1060
        %1085 = vst [vmem:[%s203 + $0x10] sm:$0xff] %v1061
        %1086 = vst [vmem:[%s203 + $0x18] sm:$0xff] %v1062
        %1087 = vst [vmem:[%s203 + $0x20] sm:$0xff] %v1063
        %1088 = vst [vmem:[%s203 + $0x28] sm:$0xff] %v1064
        %1089 = vst [vmem:[%s203 + $0x30] sm:$0xff] %v1065
        %1090 = vst [vmem:[%s203 + $0x38] sm:$0xff] %v1066
        %1091 = vst [vmem:[%s203 + $0x40] sm:$0xff] %v1067
        %1092 = vst [vmem:[%s203 + $0x48] sm:$0xff] %v1068
        %1093 = vst [vmem:[%s203 + $0x50] sm:$0xff] %v1069
        %1094 = vst [vmem:[%s203 + $0x58] sm:$0xff] %v1070
        %1095 = vst [vmem:[%s203 + $0x60] sm:$0xff] %v1071
        %1096 = vst [vmem:[%s203 + $0x68] sm:$0xff] %v1072
        %1097 = vst [vmem:[%s203 + $0x70] sm:$0xff] %v1073
        %1098 = vst [vmem:[%s203 + $0x78] sm:$0xff] %v1074
        %1099 = vst [vmem:[%s203 + $0x80] sm:$0xff] %v1075
        %1100 = vst [vmem:[%s203 + $0x88] sm:$0xff] %v1076
        %1101 = vst [vmem:[%s203 + $0x90] sm:$0xff] %v1077
        %1102 = vst [vmem:[%s203 + $0x98] sm:$0xff] %v1078
        %1103 = vst [vmem:[%s203 + $0xa0] sm:$0xff] %v1079
        %1104 = vst [vmem:[%s203 + $0xa8] sm:$0xff] %v1080
        %1105 = vst [vmem:[%s203 + $0xb0] sm:$0xff] %v1081
        %1106 = vst [vmem:[%s203 + $0xb8] sm:$0xff] %v1082
      $region40: #{encoder_forward.7} parent=31 // pred_fallthru
        _
      %s1107 = smul.u32 24, %s18
      %p1108 = scmp.lt.s32.totalorder %s1107, 47
      %s1109 = scalar_select %p1108, %s1107, 47
      %s1110 = smul.addr %s1109, 8
      %s1111 = scalar_lea.vmem %s3, %s1110
      // Predicated region
      $region41: #{encoder_forward.7} parent=31 // pred_check
        %p1112 = pneg %p114
      $region42: #{encoder_forward.7} parent=31 // pred_check_branch
        %1114 = sbr.rel (%p1112) target = $region44
      $region43: #{encoder_forward.7} parent=31 // pred_region
        %s1115 = smul.u32 24, %s18
      $region44: #{encoder_forward.7} parent=31 // pred_fallthru
        _
    $region32: #{encoder_forward.7} parent=5 // pred_fallthru
      _
    %p1116 = scmp.le.s32.totalorder 2, %s9
    // Predicated region
    $region45: #{encoder_forward.7} parent=5 // pred_check
      %p1117 = pneg %p1116
    $region46: #{encoder_forward.7} parent=5 // pred_check_branch
      %1119 = sbr.rel (%p1117) target = $region48
    $region47: #{encoder_forward.7} parent=5 // pred_region
      %s1120 = ssub.s32 %s9, 2
      // Predicated region
      $region49: #{encoder_forward.7} parent=47 // pred_check
        %p1121 = pneg %p120
      $region50: #{encoder_forward.7} parent=47 // pred_check_branch
        %1123 = sbr.rel (%p1121) target = $region52
      $region51: #{encoder_forward.7} parent=47 // pred_region
        %s1124 = smul.u32 24, %s20
        %p1125 = scmp.lt.s32.totalorder %s1124, 47
        %s1126 = scalar_select %p1125, %s1124, 47
        %s1127 = smul.addr %s1126, 8
        %s1128 = scalar_lea.vmem %s3, %s1127
      $region52: #{encoder_forward.7} parent=47 // pred_fallthru
        _
    $region48: #{encoder_forward.7} parent=5 // pred_fallthru
      _
  $region6: #{encoder_forward.7} parent=0 // loop_footer
    %s13 = sadd.s32 1, %s9
  $region7: #{encoder_forward.7} parent=0 // loop_footer_branch
    %8 = sbr.rel target = $region3
  $region8: #{encoder_forward.7} parent=0 // loop_exit
    _

// kernel: encoder_forward.5
$region0: #{encoder_forward.5}
  #allocation0 [shape = 'u32[]', space=smem, size = 0x4, offset = 0x4, fixed_abs, tag = 'smem constant byte address 0x4 - core index']
  #allocation1 [shape = 'u32[144,128]{1,0:T(1,128)}', space=vmem, size = 0x12000, scoped, tag = 'internal scratch']
  #allocation2 [shape = 'f32[192,128]{1,0:T(8,128)}', space=vmem, size = 0x18000, scoped, tag = 'scratch operand']
  %s0 = inlined_call_operand.vmem [shape: bf16[384,384], index: 0, kind: input, shape index: {}]
  %s1 = inlined_call_operand.vmem [shape: bf16[384,128], index: 1, kind: input, shape index: {}]
  %s2 = inlined_call_operand.vmem [shape: f32[1,128], index: 2, kind: input, shape index: {}]
  %s3 = inlined_call_operand.vmem [shape: bf16[128,128], index: 3, kind: input, shape index: {}]
  %s4 = inlined_call_operand.vmem [shape: bf16[384,128], index: 4, kind: output, shape index: {}]
  %s5 = sld [smem:[#allocation0]]
  $region57: #{encoder_forward.5} parent=0
    _
  %s7 = ssub.s32 1, %s5
  %s8 = scalar_select 0, %s7, %s5
  loop: start=0, step=1, limit=4
  $region2: #{encoder_forward.5} parent=0 // loop_pre_header
    _
  $region3: #{encoder_forward.5} parent=0 // loop_header
    %s10 = sphi 0, %s14
    %p11 = scmp.ge.s32.totalorder %s10, 4
    %s17 = sphi 0, %s29
    %s18 = sphi 0, %s25
    %s19 = sphi 0, %s17
    %s20 = sphi 0, %s18
    %s21 = sphi 0, %s19
    %s22 = sphi 0, %s20
    %s34 = sphi 0, %s36
    %s37 = sphi 0, %s34
    %s38 = sphi 0, %s37
    %s54 = sphi 0, %s38
    %s58 = sphi 0, %s58
    %s60 = sphi 0, %s58
    %s61 = sphi 0, %s60
    %s75 = sphi 0, %s61
    %s79 = sphi 0, %s79
    %s81 = sphi 0, %s79
    %s82 = sphi 0, %s81
    %s96 = sphi 0, %s82
    %s100 = sphi 0, %s100
    %s102 = sphi 0, %s100
    %s103 = sphi 0, %s102
    %s117 = sphi 0, %s103
    %s123 = sphi 0, %s125
    %s126 = sphi 0, %s123
    %s127 = sphi 0, %s126
    %s143 = sphi 0, %s127
  $region4: #{encoder_forward.5} parent=0 // loop_header_branch
    %13 = sbr.rel (%p11) target = $region8
  $region5: #{encoder_forward.5} parent=0 // loop_body
    %s15 = ssub.s32 %s10, 1
    %s16 = ssub.s32 %s10, 2
    %s23 = sadd.s32 1, %s18
    %p24 = scmp.ge.s32.totalorder %s23, 1
    %s25 = scalar_select %p24, 0, %s23
    %s26 = sadd.s32 1, %s17
    %s27 = scalar_select %p24, %s26, %s17
    %p28 = scmp.ge.s32.totalorder %s27, 2
    %s29 = scalar_select %p28, 0, %s27
    %s30 = ssub.s32 %s17, %s29
    %s31 = ssub.s32 %s18, %s25
    %s32 = sor.u32 %s30, %s31
    %p33 = scmp.eq.s32.totalorder %s32, 0
    %s35 = sadd.s32 %s34, 1
    %s36 = scalar_select %p33, %s34, %s35
    %p39 = pneg %p33
    %p40 = scmp.eq.s32.totalorder %s10, 1
    %p41 = por %p39, %p40
    %p42 = scmp.ne.s32.totalorder %s34, %s37
    %p43 = scmp.eq.s32.totalorder %s10, 0
    %p44 = por %p42, %p43
    %p45 = scmp.ne.s32.totalorder %s34, %s37
    %p46 = scmp.eq.s32.totalorder %s15, 1
    %p47 = por %p45, %p46
    %p48 = scmp.ne.s32.totalorder %s37, %s38
    %p49 = scmp.eq.s32.totalorder %s15, 0
    %p50 = por %p48, %p49
    %p51 = scmp.ne.s32.totalorder %s37, %s38
    %p52 = scmp.eq.s32.totalorder %s16, 1
    %p53 = por %p51, %p52
    %p55 = scmp.ne.s32.totalorder %s38, %s54
    %p56 = scmp.eq.s32.totalorder %s16, 0
    %p57 = por %p55, %p56
    %s59 = sadd.s32 %s58, 1
    %p62 = scmp.eq.s32.totalorder %s10, 1
    %p63 = scmp.ne.s32.totalorder %s58, %s60
    %p64 = scmp.eq.s32.totalorder %s10, 0
    %p65 = por %p63, %p64
    %p66 = scmp.ne.s32.totalorder %s58, %s60
    %p67 = scmp.eq.s32.totalorder %s15, 1
    %p68 = por %p66, %p67
    %p69 = scmp.ne.s32.totalorder %s60, %s61
    %p70 = scmp.eq.s32.totalorder %s15, 0
    %p71 = por %p69, %p70
    %p72 = scmp.ne.s32.totalorder %s60, %s61
    %p73 = scmp.eq.s32.totalorder %s16, 1
    %p74 = por %p72, %p73
    %p76 = scmp.ne.s32.totalorder %s61, %s75
    %p77 = scmp.eq.s32.totalorder %s16, 0
    %p78 = por %p76, %p77
    %s80 = sadd.s32 %s79, 1
    %p83 = scmp.eq.s32.totalorder %s10, 1
    %p84 = scmp.ne.s32.totalorder %s79, %s81
    %p85 = scmp.eq.s32.totalorder %s10, 0
    %p86 = por %p84, %p85
    %p87 = scmp.ne.s32.totalorder %s79, %s81
    %p88 = scmp.eq.s32.totalorder %s15, 1
    %p89 = por %p87, %p88
    %p90 = scmp.ne.s32.totalorder %s81, %s82
    %p91 = scmp.eq.s32.totalorder %s15, 0
    %p92 = por %p90, %p91
    %p93 = scmp.ne.s32.totalorder %s81, %s82
    %p94 = scmp.eq.s32.totalorder %s16, 1
    %p95 = por %p93, %p94
    %p97 = scmp.ne.s32.totalorder %s82, %s96
    %p98 = scmp.eq.s32.totalorder %s16, 0
    %p99 = por %p97, %p98
    %s101 = sadd.s32 %s100, 1
    %p104 = scmp.eq.s32.totalorder %s10, 1
    %p105 = scmp.ne.s32.totalorder %s100, %s102
    %p106 = scmp.eq.s32.totalorder %s10, 0
    %p107 = por %p105, %p106
    %p108 = scmp.ne.s32.totalorder %s100, %s102
    %p109 = scmp.eq.s32.totalorder %s15, 1
    %p110 = por %p108, %p109
    %p111 = scmp.ne.s32.totalorder %s102, %s103
    %p112 = scmp.eq.s32.totalorder %s15, 0
    %p113 = por %p111, %p112
    %p114 = scmp.ne.s32.totalorder %s102, %s103
    %p115 = scmp.eq.s32.totalorder %s16, 1
    %p116 = por %p114, %p115
    %p118 = scmp.ne.s32.totalorder %s103, %s117
    %p119 = scmp.eq.s32.totalorder %s16, 0
    %p120 = por %p118, %p119
    %s121 = ssub.s32 %s17, %s29
    %p122 = scmp.eq.s32.totalorder %s121, 0
    %s124 = sadd.s32 %s123, 1
    %s125 = scalar_select %p122, %s123, %s124
    %p128 = pneg %p122
    %p129 = scmp.eq.s32.totalorder %s10, 1
    %p130 = por %p128, %p129
    %p131 = scmp.ne.s32.totalorder %s123, %s126
    %p132 = scmp.eq.s32.totalorder %s10, 0
    %p133 = por %p131, %p132
    %p134 = scmp.ne.s32.totalorder %s123, %s126
    %p135 = scmp.eq.s32.totalorder %s15, 1
    %p136 = por %p134, %p135
    %p137 = scmp.ne.s32.totalorder %s126, %s127
    %p138 = scmp.eq.s32.totalorder %s15, 0
    %p139 = por %p137, %p138
    %p140 = scmp.ne.s32.totalorder %s126, %s127
    %p141 = scmp.eq.s32.totalorder %s16, 1
    %p142 = por %p140, %p141
    %p144 = scmp.ne.s32.totalorder %s127, %s143
    %p145 = scmp.eq.s32.totalorder %s16, 0
    %p146 = por %p144, %p145
    %p147 = scmp.le.s32.totalorder 1, %s10
    %p148 = scmp.lt.s32.totalorder %s10, 3
    %p149 = pnand %p147, %p148
    %p150 = pneg %p149
    // Predicated region
    $region9: #{encoder_forward.5} parent=5 // pred_check
      _
    $region10: #{encoder_forward.5} parent=5 // pred_check_branch
      %152 = sbr.rel (%p149) target = $region12
    $region11: #{encoder_forward.5} parent=5 // pred_region
      %s153 = ssub.s32 %s10, 1
      // Predicated region
      $region13: #{encoder_forward.5} parent=11 // pred_check
        %p154 = pneg %p71
      $region14: #{encoder_forward.5} parent=11 // pred_check_branch
        %156 = sbr.rel (%p154) target = $region16
      $region15: #{encoder_forward.5} parent=11 // pred_region
        _
      $region16: #{encoder_forward.5} parent=11 // pred_fallthru
        _
      // Predicated region
      $region17: #{encoder_forward.5} parent=11 // pred_check
        %p157 = pneg %p92
      $region18: #{encoder_forward.5} parent=11 // pred_check_branch
        %159 = sbr.rel (%p157) target = $region20
      $region19: #{encoder_forward.5} parent=11 // pred_region
        _
      $region20: #{encoder_forward.5} parent=11 // pred_fallthru
        _
      // Predicated region
      $region21: #{encoder_forward.5} parent=11 // pred_check
        %p160 = pneg %p113
      $region22: #{encoder_forward.5} parent=11 // pred_check_branch
        %162 = sbr.rel (%p160) target = $region24
      $region23: #{encoder_forward.5} parent=11 // pred_region
        _
      $region24: #{encoder_forward.5} parent=11 // pred_fallthru
        _
    $region12: #{encoder_forward.5} parent=5 // pred_fallthru
      _
    %p163 = scmp.lt.s32.totalorder %s10, 2
    // Predicated region
    $region25: #{encoder_forward.5} parent=5 // pred_check
      %p164 = pneg %p163
    $region26: #{encoder_forward.5} parent=5 // pred_check_branch
      %166 = sbr.rel (%p164) target = $region28
    $region27: #{encoder_forward.5} parent=5 // pred_region
      // Predicated region
      $region29: #{encoder_forward.5} parent=27 // pred_check
        %p167 = pneg %p44
      $region30: #{encoder_forward.5} parent=27 // pred_check_branch
        %169 = sbr.rel (%p167) target = $region32
      $region31: #{encoder_forward.5} parent=27 // pred_region
        %s170 = smul.u32 24, %s17
        %s171 = smul.u32 3, %s18
        %p172 = scmp.lt.s32.totalorder %s170, 47
        %s173 = scalar_select %p172, %s170, 47
        %p174 = scmp.lt.s32.totalorder %s171, 2
        %s175 = scalar_select %p174, %s171, 2
        %s176 = smul.addr %s173, 3
        %s177 = sadd.s32 %s175, %s176
        %s178 = smul.addr %s177, 4
        %s179 = scalar_lea.vmem %s0, %s178
        %s180 = smul.u32 24, %s17
        %s181 = smul.u32 3, %s18
      $region32: #{encoder_forward.5} parent=27 // pred_fallthru
        _
    $region28: #{encoder_forward.5} parent=5 // pred_fallthru
      _
    %p182 = scmp.le.s32.totalorder 1, %s10
    %p183 = scmp.lt.s32.totalorder %s10, 3
    %p184 = pnand %p182, %p183
    %p185 = pneg %p184
    // Predicated region
    $region33: #{encoder_forward.5} parent=5 // pred_check
      _
    $region34: #{encoder_forward.5} parent=5 // pred_check_branch
      %187 = sbr.rel (%p184) target = $region36
    $region35: #{encoder_forward.5} parent=5 // pred_region
      %s188 = ssub.s32 %s10, 1
      %s189 = smul.u32 24, %s19
      %s190 = smul.u32 3, %s20
      %p191 = scmp.lt.s32.totalorder %s189, 47
      %s192 = scalar_select %p191, %s189, 47
      %p193 = scmp.lt.s32.totalorder %s190, 2
      %s194 = scalar_select %p193, %s190, 2
      %s195 = smul.addr %s192, 3
      %s196 = sadd.s32 %s194, %s195
      %s197 = smul.addr %s196, 4
      %s198 = scalar_lea.vmem %s0, %s197
      %p199 = pneg %p50
      %p200 = pneg %p47
      %p201 = pneg %p71
      %p202 = pneg %p68
      %p203 = pneg %p92
      %p204 = pneg %p89
      %p205 = pneg %p113
      %p206 = pneg %p110
      %p207 = pneg %p139
      %p208 = pneg %p136
      %s209 = smul.u32 24, %s19
      %p210 = scmp.lt.s32.totalorder %s209, 47
      %s211 = scalar_select %p210, %s209, 47
      %s212 = smul.addr %s211, 4
      %s213 = scalar_lea.vmem %s4, %s212
      %s214 = smul.u32 24, %s19
      %s215 = smul.u32 3, %s20
      %p216 = scmp.lt.s32.totalorder %s214, 47
      %s217 = scalar_select %p216, %s214, 47
      %p218 = scmp.lt.s32.totalorder %s215, 2
      %s219 = scalar_select %p218, %s215, 2
      %s220 = smul.addr %s217, 3
      %s221 = sadd.s32 %s219, %s220
      %s222 = smul.addr %s221, 4
      %s223 = scalar_lea.vmem %s0, %s222
      %s224 = smul.u32 24, %s19
      %s225 = smul.u32 3, %s20
      %s226 = smul.u32 24, %s19
      %p227 = scmp.lt.s32.totalorder %s226, 47
      %s228 = scalar_select %p227, %s226, 47
      %s229 = smul.addr %s228, 4
      %s230 = scalar_lea.vmem %s4, %s229
      %s231 = smul.u32 24, %s19
      %p233 = scmp.eq.s32.totalorder %s20, 0
      // Predicated region
      $region37: #{encoder_forward.5} parent=35 // pred_check
        %p234 = pneg %p233
      $region38: #{encoder_forward.5} parent=35 // pred_check_branch
        %236 = sbr.rel (%p234) target = $region40
      $region39: #{encoder_forward.5} parent=35 // pred_region
        %237 = vst [vmem:[#allocation2] sm:$0xff] 0.0
        %238 = vst [vmem:[#allocation2 + $0x8] sm:$0xff] 0.0
        %239 = vst [vmem:[#allocation2 + $0x10] sm:$0xff] 0.0
        %240 = vst [vmem:[#allocation2 + $0x18] sm:$0xff] 0.0
        %241 = vst [vmem:[#allocation2 + $0x20] sm:$0xff] 0.0
        %242 = vst [vmem:[#allocation2 + $0x28] sm:$0xff] 0.0
        %243 = vst [vmem:[#allocation2 + $0x30] sm:$0xff] 0.0
        %244 = vst [vmem:[#allocation2 + $0x38] sm:$0xff] 0.0
        %245 = vst [vmem:[#allocation2 + $0x40] sm:$0xff] 0.0
        %246 = vst [vmem:[#allocation2 + $0x48] sm:$0xff] 0.0
        %247 = vst [vmem:[#allocation2 + $0x50] sm:$0xff] 0.0
        %248 = vst [vmem:[#allocation2 + $0x58] sm:$0xff] 0.0
        %249 = vst [vmem:[#allocation2 + $0x60] sm:$0xff] 0.0
        %250 = vst [vmem:[#allocation2 + $0x68] sm:$0xff] 0.0
        %251 = vst [vmem:[#allocation2 + $0x70] sm:$0xff] 0.0
        %252 = vst [vmem:[#allocation2 + $0x78] sm:$0xff] 0.0
        %253 = vst [vmem:[#allocation2 + $0x80] sm:$0xff] 0.0
        %254 = vst [vmem:[#allocation2 + $0x88] sm:$0xff] 0.0
        %255 = vst [vmem:[#allocation2 + $0x90] sm:$0xff] 0.0
        %256 = vst [vmem:[#allocation2 + $0x98] sm:$0xff] 0.0
        %257 = vst [vmem:[#allocation2 + $0xa0] sm:$0xff] 0.0
        %258 = vst [vmem:[#allocation2 + $0xa8] sm:$0xff] 0.0
        %259 = vst [vmem:[#allocation2 + $0xb0] sm:$0xff] 0.0
        %260 = vst [vmem:[#allocation2 + $0xb8] sm:$0xff] 0.0
      $region40: #{encoder_forward.5} parent=35 // pred_fallthru
        _
      %s261 = smul.u32 %s20, 384
      %s262 = sshra.s32 %s261, 3
      %s263 = sand.u32 %s261, 7
      %s264 = smul.addr %s262, 4
      %s265 = scalar_lea.vmem %s1, %s264
      %v266 = vld [vmem:[%s265] sm:$0xf]
      %v267 = vld [vmem:[%s265 + $0x4] sm:$0xf]
      %v268 = vld [vmem:[%s265 + $0x8] sm:$0xf]
      %v269 = vld [vmem:[%s265 + $0xc] sm:$0xf]
      %v270 = vld [vmem:[%s265 + $0x10] sm:$0xf]
      %v271 = vld [vmem:[%s265 + $0x14] sm:$0xf]
      %v272 = vld [vmem:[%s265 + $0x18] sm:$0xf]
      %v273 = vld [vmem:[%s265 + $0x1c] sm:$0xf]
      %v274 = vld [vmem:[%s265 + $0x20] sm:$0xf]
      %v275 = vld [vmem:[%s265 + $0x24] sm:$0xf]
      %v276 = vld [vmem:[%s265 + $0x28] sm:$0xf]
      %v277 = vld [vmem:[%s265 + $0x2c] sm:$0xf]
      %v278 = vld [vmem:[%s265 + $0x30] sm:$0xf]
      %v279 = vld [vmem:[%s265 + $0x34] sm:$0xf]
      %v280 = vld [vmem:[%s265 + $0x38] sm:$0xf]
      %v281 = vld [vmem:[%s265 + $0x3c] sm:$0xf]
      %v282 = vld [vmem:[%s265 + $0x40] sm:$0xf]
      %v283 = vld [vmem:[%s265 + $0x44] sm:$0xf]
      %v284 = vld [vmem:[%s265 + $0x48] sm:$0xf]
      %v285 = vld [vmem:[%s265 + $0x4c] sm:$0xf]
      %v286 = vld [vmem:[%s265 + $0x50] sm:$0xf]
      %v287 = vld [vmem:[%s265 + $0x54] sm:$0xf]
      %v288 = vld [vmem:[%s265 + $0x58] sm:$0xf]
      %v289 = vld [vmem:[%s265 + $0x5c] sm:$0xf]
      %v290 = vld [vmem:[%s265 + $0x60] sm:$0xf]
      %v291 = vld [vmem:[%s265 + $0x64] sm:$0xf]
      %v292 = vld [vmem:[%s265 + $0x68] sm:$0xf]
      %v293 = vld [vmem:[%s265 + $0x6c] sm:$0xf]
      %v294 = vld [vmem:[%s265 + $0x70] sm:$0xf]
      %v295 = vld [vmem:[%s265 + $0x74] sm:$0xf]
      %v296 = vld [vmem:[%s265 + $0x78] sm:$0xf]
      %v297 = vld [vmem:[%s265 + $0x7c] sm:$0xf]
      %v298 = vld [vmem:[%s265 + $0x80] sm:$0xf]
      %v299 = vld [vmem:[%s265 + $0x84] sm:$0xf]
      %v300 = vld [vmem:[%s265 + $0x88] sm:$0xf]
      %v301 = vld [vmem:[%s265 + $0x8c] sm:$0xf]
      %v302 = vld [vmem:[%s265 + $0x90] sm:$0xf]
      %v303 = vld [vmem:[%s265 + $0x94] sm:$0xf]
      %v304 = vld [vmem:[%s265 + $0x98] sm:$0xf]
      %v305 = vld [vmem:[%s265 + $0x9c] sm:$0xf]
      %v306 = vld [vmem:[%s265 + $0xa0] sm:$0xf]
      %v307 = vld [vmem:[%s265 + $0xa4] sm:$0xf]
      %v308 = vld [vmem:[%s265 + $0xa8] sm:$0xf]
      %v309 = vld [vmem:[%s265 + $0xac] sm:$0xf]
      %v310 = vld [vmem:[%s265 + $0xb0] sm:$0xf]
      %v311 = vld [vmem:[%s265 + $0xb4] sm:$0xf]
      %v312 = vld [vmem:[%s265 + $0xb8] sm:$0xf]
      %v313 = vld [vmem:[%s265 + $0xbc] sm:$0xf]
      %v314 = vld [vmem:[#allocation2] sm:$0xff]
      %v315 = vld [vmem:[#allocation2 + $0x8] sm:$0xff]
      %v316 = vld [vmem:[#allocation2 + $0x10] sm:$0xff]
      %v317 = vld [vmem:[#allocation2 + $0x18] sm:$0xff]
      %v318 = vld [vmem:[#allocation2 + $0x20] sm:$0xff]
      %v319 = vld [vmem:[#allocation2 + $0x28] sm:$0xff]
      %v320 = vld [vmem:[#allocation2 + $0x30] sm:$0xff]
      %v321 = vld [vmem:[#allocation2 + $0x38] sm:$0xff]
      %v322 = vld [vmem:[#allocation2 + $0x40] sm:$0xff]
      %v323 = vld [vmem:[#allocation2 + $0x48] sm:$0xff]
      %v324 = vld [vmem:[#allocation2 + $0x50] sm:$0xff]
      %v325 = vld [vmem:[#allocation2 + $0x58] sm:$0xff]
      %v326 = vld [vmem:[#allocation2 + $0x60] sm:$0xff]
      %v327 = vld [vmem:[#allocation2 + $0x68] sm:$0xff]
      %v328 = vld [vmem:[#allocation2 + $0x70] sm:$0xff]
      %v329 = vld [vmem:[#allocation2 + $0x78] sm:$0xff]
      %v330 = vld [vmem:[#allocation2 + $0x80] sm:$0xff]
      %v331 = vld [vmem:[#allocation2 + $0x88] sm:$0xff]
      %v332 = vld [vmem:[#allocation2 + $0x90] sm:$0xff]
      %v333 = vld [vmem:[#allocation2 + $0x98] sm:$0xff]
      %v334 = vld [vmem:[#allocation2 + $0xa0] sm:$0xff]
      %v335 = vld [vmem:[#allocation2 + $0xa8] sm:$0xff]
      %v336 = vld [vmem:[#allocation2 + $0xb0] sm:$0xff]
      %v337 = vld [vmem:[#allocation2 + $0xb8] sm:$0xff]
      %v338 = vld [vmem:[%s223] sm:$0xff]
      %v339 = vld [vmem:[%s223 + $0x8] sm:$0xf]
      %v340 = vld [vmem:[%s223 + $0xc] sm:$0xff]
      %v341 = vld [vmem:[%s223 + $0x14] sm:$0xf]
      %v342 = vld [vmem:[%s223 + $0x18] sm:$0xff]
      %v343 = vld [vmem:[%s223 + $0x20] sm:$0xf]
      %v344 = vld [vmem:[%s223 + $0x24] sm:$0xff]
      %v345 = vld [vmem:[%s223 + $0x2c] sm:$0xf]
      %v346 = vld [vmem:[%s223 + $0x30] sm:$0xff]
      %v347 = vld [vmem:[%s223 + $0x38] sm:$0xf]
      %v348 = vld [vmem:[%s223 + $0x3c] sm:$0xff]
      %v349 = vld [vmem:[%s223 + $0x44] sm:$0xf]
      %v350 = vld [vmem:[%s223 + $0x48] sm:$0xff]
      %v351 = vld [vmem:[%s223 + $0x50] sm:$0xf]
      %v352 = vld [vmem:[%s223 + $0x54] sm:$0xff]
      %v353 = vld [vmem:[%s223 + $0x5c] sm:$0xf]
      %v354 = vld [vmem:[%s223 + $0x60] sm:$0xff]
      %v355 = vld [vmem:[%s223 + $0x68] sm:$0xf]
      %v356 = vld [vmem:[%s223 + $0x6c] sm:$0xff]
      %v357 = vld [vmem:[%s223 + $0x74] sm:$0xf]
      %v358 = vld [vmem:[%s223 + $0x78] sm:$0xff]
      %v359 = vld [vmem:[%s223 + $0x80] sm:$0xf]
      %v360 = vld [vmem:[%s223 + $0x84] sm:$0xff]
      %v361 = vld [vmem:[%s223 + $0x8c] sm:$0xf]
      %v362 = vld [vmem:[%s223 + $0x90] sm:$0xff]
      %v363 = vld [vmem:[%s223 + $0x98] sm:$0xf]
      %v364 = vld [vmem:[%s223 + $0x9c] sm:$0xff]
      %v365 = vld [vmem:[%s223 + $0xa4] sm:$0xf]
      %v366 = vld [vmem:[%s223 + $0xa8] sm:$0xff]
      %v367 = vld [vmem:[%s223 + $0xb0] sm:$0xf]
      %v368 = vld [vmem:[%s223 + $0xb4] sm:$0xff]
      %v369 = vld [vmem:[%s223 + $0xbc] sm:$0xf]
      %v370 = vld [vmem:[%s223 + $0xc0] sm:$0xff]
      %v371 = vld [vmem:[%s223 + $0xc8] sm:$0xf]
      %v372 = vld [vmem:[%s223 + $0xcc] sm:$0xff]
      %v373 = vld [vmem:[%s223 + $0xd4] sm:$0xf]
      %v374 = vld [vmem:[%s223 + $0xd8] sm:$0xff]
      %v375 = vld [vmem:[%s223 + $0xe0] sm:$0xf]
      %v376 = vld [vmem:[%s223 + $0xe4] sm:$0xff]
      %v377 = vld [vmem:[%s223 + $0xec] sm:$0xf]
      %v378 = vld [vmem:[%s223 + $0xf0] sm:$0xff]
      %v379 = vld [vmem:[%s223 + $0xf8] sm:$0xf]
      %v380 = vld [vmem:[%s223 + $0xfc] sm:$0xff]
      %v381 = vld [vmem:[%s223 + $0x104] sm:$0xf]
      %v382 = vld [vmem:[%s223 + $0x108] sm:$0xff]
      %v383 = vld [vmem:[%s223 + $0x110] sm:$0xf]
      %v384 = vld [vmem:[%s223 + $0x114] sm:$0xff]
      %v385 = vld [vmem:[%s223 + $0x11c] sm:$0xf]
      %v434 = vunpack.c.l.b16 %v338
      %v435 = vunpack.c.h.b16 %v338
      %v436 = vunpack.c.l.b16 %v339
      %v437 = vunpack.c.l.b16 %v340
      %v438 = vunpack.c.h.b16 %v340
      %v439 = vunpack.c.l.b16 %v341
      %v440 = vunpack.c.l.b16 %v342
      %v441 = vunpack.c.h.b16 %v342
      %v442 = vunpack.c.l.b16 %v343
      %v443 = vunpack.c.l.b16 %v344
      %v444 = vunpack.c.h.b16 %v344
      %v445 = vunpack.c.l.b16 %v345
      %v446 = vunpack.c.l.b16 %v346
      %v447 = vunpack.c.h.b16 %v346
      %v448 = vunpack.c.l.b16 %v347
      %v449 = vunpack.c.l.b16 %v348
      %v450 = vunpack.c.h.b16 %v348
      %v451 = vunpack.c.l.b16 %v349
      %v452 = vunpack.c.l.b16 %v350
      %v453 = vunpack.c.h.b16 %v350
      %v454 = vunpack.c.l.b16 %v351
      %v455 = vunpack.c.l.b16 %v352
      %v456 = vunpack.c.h.b16 %v352
      %v457 = vunpack.c.l.b16 %v353
      %v458 = vunpack.c.l.b16 %v354
      %v459 = vunpack.c.h.b16 %v354
      %v460 = vunpack.c.l.b16 %v355
      %v461 = vunpack.c.l.b16 %v356
      %v462 = vunpack.c.h.b16 %v356
      %v463 = vunpack.c.l.b16 %v357
      %v464 = vunpack.c.l.b16 %v358
      %v465 = vunpack.c.h.b16 %v358
      %v466 = vunpack.c.l.b16 %v359
      %v467 = vunpack.c.l.b16 %v360
      %v468 = vunpack.c.h.b16 %v360
      %v469 = vunpack.c.l.b16 %v361
      %v470 = vunpack.c.l.b16 %v362
      %v471 = vunpack.c.h.b16 %v362
      %v472 = vunpack.c.l.b16 %v363
      %v473 = vunpack.c.l.b16 %v364
      %v474 = vunpack.c.h.b16 %v364
      %v475 = vunpack.c.l.b16 %v365
      %v476 = vunpack.c.l.b16 %v366
      %v477 = vunpack.c.h.b16 %v366
      %v478 = vunpack.c.l.b16 %v367
      %v479 = vunpack.c.l.b16 %v368
      %v480 = vunpack.c.h.b16 %v368
      %v481 = vunpack.c.l.b16 %v369
      %v482 = vunpack.c.l.b16 %v370
      %v483 = vunpack.c.h.b16 %v370
      %v484 = vunpack.c.l.b16 %v371
      %v485 = vunpack.c.l.b16 %v372
      %v486 = vunpack.c.h.b16 %v372
      %v487 = vunpack.c.l.b16 %v373
      %v488 = vunpack.c.l.b16 %v374
      %v489 = vunpack.c.h.b16 %v374
      %v490 = vunpack.c.l.b16 %v375
      %v491 = vunpack.c.l.b16 %v376
      %v492 = vunpack.c.h.b16 %v376
      %v493 = vunpack.c.l.b16 %v377
      %v494 = vunpack.c.l.b16 %v378
      %v495 = vunpack.c.h.b16 %v378
      %v496 = vunpack.c.l.b16 %v379
      %v497 = vunpack.c.l.b16 %v380
      %v498 = vunpack.c.h.b16 %v380
      %v499 = vunpack.c.l.b16 %v381
      %v500 = vunpack.c.l.b16 %v382
      %v501 = vunpack.c.h.b16 %v382
      %v502 = vunpack.c.l.b16 %v383
      %v503 = vunpack.c.l.b16 %v384
      %v504 = vunpack.c.h.b16 %v384
      %v505 = vunpack.c.l.b16 %v385
      %v506 = vpack.c.b16 %v437, %v434
      %v507 = vpack.c.b16 %v438, %v435
      %v508 = vpack.c.b16 %v439, %v436
      %v509 = vpack.c.b16 %v443, %v440
      %v510 = vpack.c.b16 %v444, %v441
      %v511 = vpack.c.b16 %v445, %v442
      %v512 = vpack.c.b16 %v449, %v446
      %v513 = vpack.c.b16 %v450, %v447
      %v514 = vpack.c.b16 %v451, %v448
      %v515 = vpack.c.b16 %v455, %v452
      %v516 = vpack.c.b16 %v456, %v453
      %v517 = vpack.c.b16 %v457, %v454
      %v518 = vpack.c.b16 %v461, %v458
      %v519 = vpack.c.b16 %v462, %v459
      %v520 = vpack.c.b16 %v463, %v460
      %v521 = vpack.c.b16 %v467, %v464
      %v522 = vpack.c.b16 %v468, %v465
      %v523 = vpack.c.b16 %v469, %v466
      %v524 = vpack.c.b16 %v473, %v470
      %v525 = vpack.c.b16 %v474, %v471
      %v526 = vpack.c.b16 %v475, %v472
      %v527 = vpack.c.b16 %v479, %v476
      %v528 = vpack.c.b16 %v480, %v477
      %v529 = vpack.c.b16 %v481, %v478
      %v530 = vpack.c.b16 %v485, %v482
      %v531 = vpack.c.b16 %v486, %v483
      %v532 = vpack.c.b16 %v487, %v484
      %v533 = vpack.c.b16 %v491, %v488
      %v534 = vpack.c.b16 %v492, %v489
      %v535 = vpack.c.b16 %v493, %v490
      %v536 = vpack.c.b16 %v497, %v494
      %v537 = vpack.c.b16 %v498, %v495
      %v538 = vpack.c.b16 %v499, %v496
      %v539 = vpack.c.b16 %v503, %v500
      %v540 = vpack.c.b16 %v504, %v501
      %v541 = vpack.c.b16 %v505, %v502
      %v626 = vunpack.c.l.b16 %v266
      %v627 = vunpack.c.l.b16 %v267
      %v628 = vunpack.c.l.b16 %v268
      %v629 = vunpack.c.l.b16 %v269
      %v630 = vunpack.c.l.b16 %v270
      %v631 = vunpack.c.l.b16 %v271
      %v632 = vunpack.c.l.b16 %v272
      %v633 = vunpack.c.l.b16 %v273
      %v634 = vunpack.c.l.b16 %v274
      %v635 = vunpack.c.l.b16 %v275
      %v636 = vunpack.c.l.b16 %v276
      %v637 = vunpack.c.l.b16 %v277
      %v638 = vunpack.c.l.b16 %v278
      %v639 = vunpack.c.l.b16 %v279
      %v640 = vunpack.c.l.b16 %v280
      %v641 = vunpack.c.l.b16 %v281
      %v642 = vunpack.c.l.b16 %v282
      %v643 = vunpack.c.l.b16 %v283
      %v644 = vunpack.c.l.b16 %v284
      %v645 = vunpack.c.l.b16 %v285
      %v646 = vunpack.c.l.b16 %v286
      %v647 = vunpack.c.l.b16 %v287
      %v648 = vunpack.c.l.b16 %v288
      %v649 = vunpack.c.l.b16 %v289
      %v650 = vunpack.c.l.b16 %v290
      %v651 = vunpack.c.l.b16 %v291
      %v652 = vunpack.c.l.b16 %v292
      %v653 = vunpack.c.l.b16 %v293
      %v654 = vunpack.c.l.b16 %v294
      %v655 = vunpack.c.l.b16 %v295
      %v656 = vunpack.c.l.b16 %v296
      %v657 = vunpack.c.l.b16 %v297
      %v658 = vunpack.c.l.b16 %v298
      %v659 = vunpack.c.l.b16 %v299
      %v660 = vunpack.c.l.b16 %v300
      %v661 = vunpack.c.l.b16 %v301
      %v662 = vunpack.c.l.b16 %v302
      %v663 = vunpack.c.l.b16 %v303
      %v664 = vunpack.c.l.b16 %v304
      %v665 = vunpack.c.l.b16 %v305
      %v666 = vunpack.c.l.b16 %v306
      %v667 = vunpack.c.l.b16 %v307
      %v668 = vunpack.c.l.b16 %v308
      %v669 = vunpack.c.l.b16 %v309
      %v670 = vunpack.c.l.b16 %v310
      %v671 = vunpack.c.l.b16 %v311
      %v672 = vunpack.c.l.b16 %v312
      %v673 = vunpack.c.l.b16 %v313
      %v674 = vpack.c.b16 %v627, %v626
      %v675 = vpack.c.b16 %v629, %v628
      %v676 = vpack.c.b16 %v631, %v630
      %v677 = vpack.c.b16 %v633, %v632
      %v678 = vpack.c.b16 %v635, %v634
      %v679 = vpack.c.b16 %v637, %v636
      %v680 = vpack.c.b16 %v639, %v638
      %v681 = vpack.c.b16 %v641, %v640
      %v682 = vpack.c.b16 %v643, %v642
      %v683 = vpack.c.b16 %v645, %v644
      %v684 = vpack.c.b16 %v647, %v646
      %v685 = vpack.c.b16 %v649, %v648
      %v686 = vpack.c.b16 %v651, %v650
      %v687 = vpack.c.b16 %v653, %v652
      %v688 = vpack.c.b16 %v655, %v654
      %v689 = vpack.c.b16 %v657, %v656
      %v690 = vpack.c.b16 %v659, %v658
      %v691 = vpack.c.b16 %v661, %v660
      %v692 = vpack.c.b16 %v663, %v662
      %v693 = vpack.c.b16 %v665, %v664
      %v694 = vpack.c.b16 %v667, %v666
      %v695 = vpack.c.b16 %v669, %v668
      %v696 = vpack.c.b16 %v671, %v670
      %v697 = vpack.c.b16 %v673, %v672
      %722 = vmatprep.subr.bf16.mxu0 0
      %723 = vmatpush1.bf16.msra.mxu0 %v681
      %724 = vmatprep.subr.bf16.mxu0 0
      %725 = vmatpush1.bf16.msra.mxu0 %v680
      %726 = vmatprep.subr.bf16.mxu0 0
      %727 = vmatpush1.bf16.msra.mxu0 %v679
      %728 = vmatprep.subr.bf16.mxu0 0
      %729 = vmatpush1.bf16.msra.mxu0 %v678
      %730 = vmatprep.subr.bf16.mxu0 0
      %731 = vmatpush1.bf16.msra.mxu0 %v677
      %732 = vmatprep.subr.bf16.mxu0 0
      %733 = vmatpush1.bf16.msra.mxu0 %v676
      %734 = vmatprep.subr.bf16.mxu0 0
      %735 = vmatpush1.bf16.msra.mxu0 %v675
      %736 = vmatprep.subr.bf16.mxu0 0
      %737 = vmatpush1.bf16.msra.mxu0 %v674
      %738 = vmatprep.subr.bf16.mxu0 0
      %739 = vmatpush2.bf16.msra.mxu0 %v689
      %740 = vmatprep.subr.bf16.mxu0 0
      %741 = vmatpush2.bf16.msra.mxu0 %v688
      %742 = vmatprep.subr.bf16.mxu0 0
      %743 = vmatpush2.bf16.msra.mxu0 %v687
      %744 = vmatprep.subr.bf16.mxu0 0
      %745 = vmatpush2.bf16.msra.mxu0 %v686
      %746 = vmatprep.subr.bf16.mxu0 0
      %747 = vmatpush2.bf16.msra.mxu0 %v685
      %748 = vmatprep.subr.bf16.mxu0 0
      %749 = vmatpush2.bf16.msra.mxu0 %v684
      %750 = vmatprep.subr.bf16.mxu0 0
      %751 = vmatpush2.bf16.msra.mxu0 %v683
      %752 = vmatprep.subr.bf16.mxu0 0
      %753 = vmatpush2.bf16.msra.mxu0 %v682
      %754 = vmatprep.mubr.bf16.mxu0 %v507
      %755 = vmatmul.mubr.bf16.gmra.mxu0 %v506
      %v756 = vpop.f32.mrf.mxu0
      %v757 = vadd.f32 0.0, %v756
      %v758 = vpop.f32.mrf.mxu0
      %v759 = vpop.f32.mrf.mxu0
      %v760 = vadd.f32 0.0, %v759
      %v761 = vpop.f32.mrf.mxu0
      %762 = vmatprep.mubr.bf16.mxu0 %v510
      %763 = vmatmul.mubr.bf16.gmra.mxu0 %v509
      %v764 = vpop.f32.mrf.mxu0
      %v765 = vadd.f32 0.0, %v764
      %v766 = vpop.f32.mrf.mxu0
      %v767 = vpop.f32.mrf.mxu0
      %v768 = vadd.f32 0.0, %v767
      %v769 = vpop.f32.mrf.mxu0
      %770 = vmatprep.mubr.bf16.mxu0 %v513
      %771 = vmatmul.mubr.bf16.gmra.mxu0 %v512
      %v772 = vpop.f32.mrf.mxu0
      %v773 = vadd.f32 0.0, %v772
      %v774 = vpop.f32.mrf.mxu0
      %v775 = vpop.f32.mrf.mxu0
      %v776 = vadd.f32 0.0, %v775
      %v777 = vpop.f32.mrf.mxu0
      %778 = vmatprep.mubr.bf16.mxu0 %v516
      %779 = vmatmul.mubr.bf16.gmra.mxu0 %v515
      %v780 = vpop.f32.mrf.mxu0
      %v781 = vadd.f32 0.0, %v780
      %v782 = vpop.f32.mrf.mxu0
      %v783 = vpop.f32.mrf.mxu0
      %v784 = vadd.f32 0.0, %v783
      %v785 = vpop.f32.mrf.mxu0
      %786 = vmatprep.mubr.bf16.mxu0 %v519
      %787 = vmatmul.mubr.bf16.gmra.mxu0 %v518
      %v788 = vpop.f32.mrf.mxu0
      %v789 = vadd.f32 0.0, %v788
      %v790 = vpop.f32.mrf.mxu0
      %v791 = vpop.f32.mrf.mxu0
      %v792 = vadd.f32 0.0, %v791
      %v793 = vpop.f32.mrf.mxu0
      %794 = vmatprep.mubr.bf16.mxu0 %v522
      %795 = vmatmul.mubr.bf16.gmra.mxu0 %v521
      %v796 = vpop.f32.mrf.mxu0
      %v797 = vadd.f32 0.0, %v796
      %v798 = vpop.f32.mrf.mxu0
      %v799 = vpop.f32.mrf.mxu0
      %v800 = vadd.f32 0.0, %v799
      %v801 = vpop.f32.mrf.mxu0
      %802 = vmatprep.mubr.bf16.mxu0 %v525
      %803 = vmatmul.mubr.bf16.gmra.mxu0 %v524
      %v804 = vpop.f32.mrf.mxu0
      %v805 = vadd.f32 0.0, %v804
      %v806 = vpop.f32.mrf.mxu0
      %v807 = vpop.f32.mrf.mxu0
      %v808 = vadd.f32 0.0, %v807
      %v809 = vpop.f32.mrf.mxu0
      %810 = vmatprep.mubr.bf16.mxu0 %v528
      %811 = vmatmul.mubr.bf16.gmra.mxu0 %v527
      %v812 = vpop.f32.mrf.mxu0
      %v813 = vadd.f32 0.0, %v812
      %v814 = vpop.f32.mrf.mxu0
      %v815 = vpop.f32.mrf.mxu0
      %v816 = vadd.f32 0.0, %v815
      %v817 = vpop.f32.mrf.mxu0
      %818 = vmatprep.mubr.bf16.mxu0 %v531
      %819 = vmatmul.mubr.bf16.gmra.mxu0 %v530
      %v820 = vpop.f32.mrf.mxu0
      %v821 = vadd.f32 0.0, %v820
      %v822 = vpop.f32.mrf.mxu0
      %v823 = vpop.f32.mrf.mxu0
      %v824 = vadd.f32 0.0, %v823
      %v825 = vpop.f32.mrf.mxu0
      %826 = vmatprep.mubr.bf16.mxu0 %v534
      %827 = vmatmul.mubr.bf16.gmra.mxu0 %v533
      %v828 = vpop.f32.mrf.mxu0
      %v829 = vadd.f32 0.0, %v828
      %v830 = vpop.f32.mrf.mxu0
      %v831 = vpop.f32.mrf.mxu0
      %v832 = vadd.f32 0.0, %v831
      %v833 = vpop.f32.mrf.mxu0
      %834 = vmatprep.mubr.bf16.mxu0 %v537
      %835 = vmatmul.mubr.bf16.gmra.mxu0 %v536
      %v836 = vpop.f32.mrf.mxu0
      %v837 = vadd.f32 0.0, %v836
      %v838 = vpop.f32.mrf.mxu0
      %v839 = vpop.f32.mrf.mxu0
      %v840 = vadd.f32 0.0, %v839
      %v841 = vpop.f32.mrf.mxu0
      %842 = vmatprep.mubr.bf16.mxu0 %v540
      %843 = vmatmul.mubr.bf16.gmra.mxu0 %v539
      %v844 = vpop.f32.mrf.mxu0
      %v845 = vadd.f32 0.0, %v844
      %v846 = vpop.f32.mrf.mxu0
      %v847 = vpop.f32.mrf.mxu0
      %v848 = vadd.f32 0.0, %v847
      %v849 = vpop.f32.mrf.mxu0
      %850 = vdwg.mxu0
      %851 = vmatprep.subr.bf16.mxu0 0
      %852 = vmatpush1.bf16.msra.mxu0 %v697
      %853 = vmatprep.subr.bf16.mxu0 0
      %854 = vmatpush1.bf16.msra.mxu0 %v696
      %855 = vmatprep.subr.bf16.mxu0 0
      %856 = vmatpush1.bf16.msra.mxu0 %v695
      %857 = vmatprep.subr.bf16.mxu0 0
      %858 = vmatpush1.bf16.msra.mxu0 %v694
      %859 = vmatprep.subr.bf16.mxu0 0
      %860 = vmatpush1.bf16.msra.mxu0 %v693
      %861 = vmatprep.subr.bf16.mxu0 0
      %862 = vmatpush1.bf16.msra.mxu0 %v692
      %863 = vmatprep.subr.bf16.mxu0 0
      %864 = vmatpush1.bf16.msra.mxu0 %v691
      %865 = vmatprep.subr.bf16.mxu0 0
      %866 = vmatpush1.bf16.msra.mxu0 %v690
      %867 = vmatprep.subr.bf16.mxu0 0
      %868 = vmatpush2.bf16.msra.mxu0 0
      %869 = vmatprep.subr.bf16.mxu0 0
      %870 = vmatpush2.bf16.msra.mxu0 0
      %871 = vmatprep.subr.bf16.mxu0 0
      %872 = vmatpush2.bf16.msra.mxu0 0
      %873 = vmatprep.subr.bf16.mxu0 0
      %874 = vmatpush2.bf16.msra.mxu0 0
      %875 = vmatprep.subr.bf16.mxu0 0
      %876 = vmatpush2.bf16.msra.mxu0 0
      %877 = vmatprep.subr.bf16.mxu0 0
      %878 = vmatpush2.bf16.msra.mxu0 0
      %879 = vmatprep.subr.bf16.mxu0 0
      %880 = vmatpush2.bf16.msra.mxu0 0
      %881 = vmatprep.subr.bf16.mxu0 0
      %882 = vmatpush2.bf16.msra.mxu0 0
      %883 = vmatprep.mubr.bf16.mxu0 0
      %884 = vmatmul.mubr.bf16.gmra.mxu0 %v508
      %v885 = vpop.f32.mrf.mxu0
      %v886 = vadd.f32 %v757, %v885
      %v887 = vpop.f32.mrf.mxu0
      %v888 = vpop.f32.mrf.mxu0
      %v889 = vadd.f32 %v760, %v888
      %v890 = vpop.f32.mrf.mxu0
      %891 = vmatprep.mubr.bf16.mxu0 0
      %892 = vmatmul.mubr.bf16.gmra.mxu0 %v511
      %v893 = vpop.f32.mrf.mxu0
      %v894 = vadd.f32 %v765, %v893
      %v895 = vpop.f32.mrf.mxu0
      %v896 = vpop.f32.mrf.mxu0
      %v897 = vadd.f32 %v768, %v896
      %v898 = vpop.f32.mrf.mxu0
      %899 = vmatprep.mubr.bf16.mxu0 0
      %900 = vmatmul.mubr.bf16.gmra.mxu0 %v514
      %v901 = vpop.f32.mrf.mxu0
      %v902 = vadd.f32 %v773, %v901
      %v903 = vpop.f32.mrf.mxu0
      %v904 = vpop.f32.mrf.mxu0
      %v905 = vadd.f32 %v776, %v904
      %v906 = vpop.f32.mrf.mxu0
      %907 = vmatprep.mubr.bf16.mxu0 0
      %908 = vmatmul.mubr.bf16.gmra.mxu0 %v517
      %v909 = vpop.f32.mrf.mxu0
      %v910 = vadd.f32 %v781, %v909
      %v911 = vpop.f32.mrf.mxu0
      %v912 = vpop.f32.mrf.mxu0
      %v913 = vadd.f32 %v784, %v912
      %v914 = vpop.f32.mrf.mxu0
      %915 = vmatprep.mubr.bf16.mxu0 0
      %916 = vmatmul.mubr.bf16.gmra.mxu0 %v520
      %v917 = vpop.f32.mrf.mxu0
      %v918 = vadd.f32 %v789, %v917
      %v919 = vpop.f32.mrf.mxu0
      %v920 = vpop.f32.mrf.mxu0
      %v921 = vadd.f32 %v792, %v920
      %v922 = vpop.f32.mrf.mxu0
      %923 = vmatprep.mubr.bf16.mxu0 0
      %924 = vmatmul.mubr.bf16.gmra.mxu0 %v523
      %v925 = vpop.f32.mrf.mxu0
      %v926 = vadd.f32 %v797, %v925
      %v927 = vpop.f32.mrf.mxu0
      %v928 = vpop.f32.mrf.mxu0
      %v929 = vadd.f32 %v800, %v928
      %v930 = vpop.f32.mrf.mxu0
      %931 = vmatprep.mubr.bf16.mxu0 0
      %932 = vmatmul.mubr.bf16.gmra.mxu0 %v526
      %v933 = vpop.f32.mrf.mxu0
      %v934 = vadd.f32 %v805, %v933
      %v935 = vpop.f32.mrf.mxu0
      %v936 = vpop.f32.mrf.mxu0
      %v937 = vadd.f32 %v808, %v936
      %v938 = vpop.f32.mrf.mxu0
      %939 = vmatprep.mubr.bf16.mxu0 0
      %940 = vmatmul.mubr.bf16.gmra.mxu0 %v529
      %v941 = vpop.f32.mrf.mxu0
      %v942 = vadd.f32 %v813, %v941
      %v943 = vpop.f32.mrf.mxu0
      %v944 = vpop.f32.mrf.mxu0
      %v945 = vadd.f32 %v816, %v944
      %v946 = vpop.f32.mrf.mxu0
      %947 = vmatprep.mubr.bf16.mxu0 0
      %948 = vmatmul.mubr.bf16.gmra.mxu0 %v532
      %v949 = vpop.f32.mrf.mxu0
      %v950 = vadd.f32 %v821, %v949
      %v951 = vpop.f32.mrf.mxu0
      %v952 = vpop.f32.mrf.mxu0
      %v953 = vadd.f32 %v824, %v952
      %v954 = vpop.f32.mrf.mxu0
      %955 = vmatprep.mubr.bf16.mxu0 0
      %956 = vmatmul.mubr.bf16.gmra.mxu0 %v535
      %v957 = vpop.f32.mrf.mxu0
      %v958 = vadd.f32 %v829, %v957
      %v959 = vpop.f32.mrf.mxu0
      %v960 = vpop.f32.mrf.mxu0
      %v961 = vadd.f32 %v832, %v960
      %v962 = vpop.f32.mrf.mxu0
      %963 = vmatprep.mubr.bf16.mxu0 0
      %964 = vmatmul.mubr.bf16.gmra.mxu0 %v538
      %v965 = vpop.f32.mrf.mxu0
      %v966 = vadd.f32 %v837, %v965
      %v967 = vpop.f32.mrf.mxu0
      %v968 = vpop.f32.mrf.mxu0
      %v969 = vadd.f32 %v840, %v968
      %v970 = vpop.f32.mrf.mxu0
      %971 = vmatprep.mubr.bf16.mxu0 0
      %972 = vmatmul.mubr.bf16.gmra.mxu0 %v541
      %v973 = vpop.f32.mrf.mxu0
      %v974 = vadd.f32 %v845, %v973
      %v975 = vpop.f32.mrf.mxu0
      %v976 = vpop.f32.mrf.mxu0
      %v977 = vadd.f32 %v848, %v976
      %v978 = vpop.f32.mrf.mxu0
      %979 = vdwg.mxu0
      %v980 = vadd.f32 %v314, %v886
      %v981 = vadd.f32 %v315, %v889
      %v982 = vadd.f32 %v316, %v894
      %v983 = vadd.f32 %v317, %v897
      %v984 = vadd.f32 %v318, %v902
      %v985 = vadd.f32 %v319, %v905
      %v986 = vadd.f32 %v320, %v910
      %v987 = vadd.f32 %v321, %v913
      %v988 = vadd.f32 %v322, %v918
      %v989 = vadd.f32 %v323, %v921
      %v990 = vadd.f32 %v324, %v926
      %v991 = vadd.f32 %v325, %v929
      %v992 = vadd.f32 %v326, %v934
      %v993 = vadd.f32 %v327, %v937
      %v994 = vadd.f32 %v328, %v942
      %v995 = vadd.f32 %v329, %v945
      %v996 = vadd.f32 %v330, %v950
      %v997 = vadd.f32 %v331, %v953
      %v998 = vadd.f32 %v332, %v958
      %v999 = vadd.f32 %v333, %v961
      %v1000 = vadd.f32 %v334, %v966
      %v1001 = vadd.f32 %v335, %v969
      %v1002 = vadd.f32 %v336, %v974
      %v1003 = vadd.f32 %v337, %v977
      %1004 = vst [vmem:[#allocation2] sm:$0xff] %v980
      %1005 = vst [vmem:[#allocation2 + $0x8] sm:$0xff] %v981
      %1006 = vst [vmem:[#allocation2 + $0x10] sm:$0xff] %v982
      %1007 = vst [vmem:[#allocation2 + $0x18] sm:$0xff] %v983
      %1008 = vst [vmem:[#allocation2 + $0x20] sm:$0xff] %v984
      %1009 = vst [vmem:[#allocation2 + $0x28] sm:$0xff] %v985
      %1010 = vst [vmem:[#allocation2 + $0x30] sm:$0xff] %v986
      %1011 = vst [vmem:[#allocation2 + $0x38] sm:$0xff] %v987
      %1012 = vst [vmem:[#allocation2 + $0x40] sm:$0xff] %v988
      %1013 = vst [vmem:[#allocation2 + $0x48] sm:$0xff] %v989
      %1014 = vst [vmem:[#allocation2 + $0x50] sm:$0xff] %v990
      %1015 = vst [vmem:[#allocation2 + $0x58] sm:$0xff] %v991
      %1016 = vst [vmem:[#allocation2 + $0x60] sm:$0xff] %v992
      %1017 = vst [vmem:[#allocation2 + $0x68] sm:$0xff] %v993
      %1018 = vst [vmem:[#allocation2 + $0x70] sm:$0xff] %v994
      %1019 = vst [vmem:[#allocation2 + $0x78] sm:$0xff] %v995
      %1020 = vst [vmem:[#allocation2 + $0x80] sm:$0xff] %v996
      %1021 = vst [vmem:[#allocation2 + $0x88] sm:$0xff] %v997
      %1022 = vst [vmem:[#allocation2 + $0x90] sm:$0xff] %v998
      %1023 = vst [vmem:[#allocation2 + $0x98] sm:$0xff] %v999
      %1024 = vst [vmem:[#allocation2 + $0xa0] sm:$0xff] %v1000
      %1025 = vst [vmem:[#allocation2 + $0xa8] sm:$0xff] %v1001
      %1026 = vst [vmem:[#allocation2 + $0xb0] sm:$0xff] %v1002
      %1027 = vst [vmem:[#allocation2 + $0xb8] sm:$0xff] %v1003
      // Predicated region
      $region41: #{encoder_forward.5} parent=35 // pred_check
        %p1028 = pneg %p233
      $region42: #{encoder_forward.5} parent=35 // pred_check_branch
        %1030 = sbr.rel (%p1028) target = $region44
      $region43: #{encoder_forward.5} parent=35 // pred_region
        %v1031 = vld [vmem:[#allocation2] sm:$0xff]
        %v1032 = vld [vmem:[#allocation2 + $0x8] sm:$0xff]
        %v1033 = vld [vmem:[#allocation2 + $0x10] sm:$0xff]
        %v1034 = vld [vmem:[#allocation2 + $0x18] sm:$0xff]
        %v1035 = vld [vmem:[#allocation2 + $0x20] sm:$0xff]
        %v1036 = vld [vmem:[#allocation2 + $0x28] sm:$0xff]
        %v1037 = vld [vmem:[#allocation2 + $0x30] sm:$0xff]
        %v1038 = vld [vmem:[#allocation2 + $0x38] sm:$0xff]
        %v1039 = vld [vmem:[#allocation2 + $0x40] sm:$0xff]
        %v1040 = vld [vmem:[#allocation2 + $0x48] sm:$0xff]
        %v1041 = vld [vmem:[#allocation2 + $0x50] sm:$0xff]
        %v1042 = vld [vmem:[#allocation2 + $0x58] sm:$0xff]
        %v1043 = vld [vmem:[#allocation2 + $0x60] sm:$0xff]
        %v1044 = vld [vmem:[#allocation2 + $0x68] sm:$0xff]
        %v1045 = vld [vmem:[#allocation2 + $0x70] sm:$0xff]
        %v1046 = vld [vmem:[#allocation2 + $0x78] sm:$0xff]
        %v1047 = vld [vmem:[#allocation2 + $0x80] sm:$0xff]
        %v1048 = vld [vmem:[#allocation2 + $0x88] sm:$0xff]
        %v1049 = vld [vmem:[#allocation2 + $0x90] sm:$0xff]
        %v1050 = vld [vmem:[#allocation2 + $0x98] sm:$0xff]
        %v1051 = vld [vmem:[#allocation2 + $0xa0] sm:$0xff]
        %v1052 = vld [vmem:[#allocation2 + $0xa8] sm:$0xff]
        %v1053 = vld [vmem:[#allocation2 + $0xb0] sm:$0xff]
        %v1054 = vld [vmem:[#allocation2 + $0xb8] sm:$0xff]
        %v1055 = vld [vmem:[%s2] sm:$0x1]
        %v1057 = vlaneseq
        %v1058 = vshrl.u32 %v1057, 7
        %v1059 = vsub.s32 0, %v1058
        %v1060 = vrot.slane %v1055, %v1059
        %v1062 = vadd.f32 %v1031, %v1060
        %v1063 = vadd.f32 %v1032, %v1060
        %v1064 = vadd.f32 %v1033, %v1060
        %v1065 = vadd.f32 %v1034, %v1060
        %v1066 = vadd.f32 %v1035, %v1060
        %v1067 = vadd.f32 %v1036, %v1060
        %v1068 = vadd.f32 %v1037, %v1060
        %v1069 = vadd.f32 %v1038, %v1060
        %v1070 = vadd.f32 %v1039, %v1060
        %v1071 = vadd.f32 %v1040, %v1060
        %v1072 = vadd.f32 %v1041, %v1060
        %v1073 = vadd.f32 %v1042, %v1060
        %v1074 = vadd.f32 %v1043, %v1060
        %v1075 = vadd.f32 %v1044, %v1060
        %v1076 = vadd.f32 %v1045, %v1060
        %v1077 = vadd.f32 %v1046, %v1060
        %v1078 = vadd.f32 %v1047, %v1060
        %v1079 = vadd.f32 %v1048, %v1060
        %v1080 = vadd.f32 %v1049, %v1060
        %v1081 = vadd.f32 %v1050, %v1060
        %v1082 = vadd.f32 %v1051, %v1060
        %v1083 = vadd.f32 %v1052, %v1060
        %v1084 = vadd.f32 %v1053, %v1060
        %v1085 = vadd.f32 %v1054, %v1060
        %v1086 = vmax.f32 %v1062, 0.0
        %v1087 = vmax.f32 %v1063, 0.0
        %v1088 = vmax.f32 %v1064, 0.0
        %v1089 = vmax.f32 %v1065, 0.0
        %v1090 = vmax.f32 %v1066, 0.0
        %v1091 = vmax.f32 %v1067, 0.0
        %v1092 = vmax.f32 %v1068, 0.0
        %v1093 = vmax.f32 %v1069, 0.0
        %v1094 = vmax.f32 %v1070, 0.0
        %v1095 = vmax.f32 %v1071, 0.0
        %v1096 = vmax.f32 %v1072, 0.0
        %v1097 = vmax.f32 %v1073, 0.0
        %v1098 = vmax.f32 %v1074, 0.0
        %v1099 = vmax.f32 %v1075, 0.0
        %v1100 = vmax.f32 %v1076, 0.0
        %v1101 = vmax.f32 %v1077, 0.0
        %v1102 = vmax.f32 %v1078, 0.0
        %v1103 = vmax.f32 %v1079, 0.0
        %v1104 = vmax.f32 %v1080, 0.0
        %v1105 = vmax.f32 %v1081, 0.0
        %v1106 = vmax.f32 %v1082, 0.0
        %v1107 = vmax.f32 %v1083, 0.0
        %v1108 = vmax.f32 %v1084, 0.0
        %v1109 = vmax.f32 %v1085, 0.0
        %v1110 = vpack.c.bf16 %v1087, %v1086
        %v1111 = vpack.c.bf16 %v1089, %v1088
        %v1112 = vpack.c.bf16 %v1091, %v1090
        %v1113 = vpack.c.bf16 %v1093, %v1092
        %v1114 = vpack.c.bf16 %v1095, %v1094
        %v1115 = vpack.c.bf16 %v1097, %v1096
        %v1116 = vpack.c.bf16 %v1099, %v1098
        %v1117 = vpack.c.bf16 %v1101, %v1100
        %v1118 = vpack.c.bf16 %v1103, %v1102
        %v1119 = vpack.c.bf16 %v1105, %v1104
        %v1120 = vpack.c.bf16 %v1107, %v1106
        %v1121 = vpack.c.bf16 %v1109, %v1108
        %v1122 = vld [vmem:[%s3] sm:$0xf]
        %v1123 = vld [vmem:[%s3 + $0x4] sm:$0xf]
        %v1124 = vld [vmem:[%s3 + $0x8] sm:$0xf]
        %v1125 = vld [vmem:[%s3 + $0xc] sm:$0xf]
        %v1126 = vld [vmem:[%s3 + $0x10] sm:$0xf]
        %v1127 = vld [vmem:[%s3 + $0x14] sm:$0xf]
        %v1128 = vld [vmem:[%s3 + $0x18] sm:$0xf]
        %v1129 = vld [vmem:[%s3 + $0x1c] sm:$0xf]
        %v1130 = vld [vmem:[%s3 + $0x20] sm:$0xf]
        %v1131 = vld [vmem:[%s3 + $0x24] sm:$0xf]
        %v1132 = vld [vmem:[%s3 + $0x28] sm:$0xf]
        %v1133 = vld [vmem:[%s3 + $0x2c] sm:$0xf]
        %v1134 = vld [vmem:[%s3 + $0x30] sm:$0xf]
        %v1135 = vld [vmem:[%s3 + $0x34] sm:$0xf]
        %v1136 = vld [vmem:[%s3 + $0x38] sm:$0xf]
        %v1137 = vld [vmem:[%s3 + $0x3c] sm:$0xf]
        %v1154 = vunpack.c.l.b16 %v1122
        %v1155 = vunpack.c.l.b16 %v1123
        %v1156 = vunpack.c.l.b16 %v1124
        %v1157 = vunpack.c.l.b16 %v1125
        %v1158 = vunpack.c.l.b16 %v1126
        %v1159 = vunpack.c.l.b16 %v1127
        %v1160 = vunpack.c.l.b16 %v1128
        %v1161 = vunpack.c.l.b16 %v1129
        %v1162 = vunpack.c.l.b16 %v1130
        %v1163 = vunpack.c.l.b16 %v1131
        %v1164 = vunpack.c.l.b16 %v1132
        %v1165 = vunpack.c.l.b16 %v1133
        %v1166 = vunpack.c.l.b16 %v1134
        %v1167 = vunpack.c.l.b16 %v1135
        %v1168 = vunpack.c.l.b16 %v1136
        %v1169 = vunpack.c.l.b16 %v1137
        %v1170 = vpack.c.b16 %v1155, %v1154
        %v1171 = vpack.c.b16 %v1157, %v1156
        %v1172 = vpack.c.b16 %v1159, %v1158
        %v1173 = vpack.c.b16 %v1161, %v1160
        %v1174 = vpack.c.b16 %v1163, %v1162
        %v1175 = vpack.c.b16 %v1165, %v1164
        %v1176 = vpack.c.b16 %v1167, %v1166
        %v1177 = vpack.c.b16 %v1169, %v1168
        %1186 = vmatprep.subr.bf16.mxu0 0
        %1187 = vmatpush1.bf16.msra.mxu0 %v1177
        %1188 = vmatprep.subr.bf16.mxu0 0
        %1189 = vmatpush1.bf16.msra.mxu0 %v1176
        %1190 = vmatprep.subr.bf16.mxu0 0
        %1191 = vmatpush1.bf16.msra.mxu0 %v1175
        %1192 = vmatprep.subr.bf16.mxu0 0
        %1193 = vmatpush1.bf16.msra.mxu0 %v1174
        %1194 = vmatprep.subr.bf16.mxu0 0
        %1195 = vmatpush1.bf16.msra.mxu0 %v1173
        %1196 = vmatprep.subr.bf16.mxu0 0
        %1197 = vmatpush1.bf16.msra.mxu0 %v1172
        %1198 = vmatprep.subr.bf16.mxu0 0
        %1199 = vmatpush1.bf16.msra.mxu0 %v1171
        %1200 = vmatprep.subr.bf16.mxu0 0
        %1201 = vmatpush1.bf16.msra.mxu0 %v1170
        %1202 = vmatprep.subr.bf16.mxu0 0
        %1203 = vmatpush2.bf16.msra.mxu0 0
        %1204 = vmatprep.subr.bf16.mxu0 0
        %1205 = vmatpush2.bf16.msra.mxu0 0
        %1206 = vmatprep.subr.bf16.mxu0 0
        %1207 = vmatpush2.bf16.msra.mxu0 0
        %1208 = vmatprep.subr.bf16.mxu0 0
        %1209 = vmatpush2.bf16.msra.mxu0 0
        %1210 = vmatprep.subr.bf16.mxu0 0
        %1211 = vmatpush2.bf16.msra.mxu0 0
        %1212 = vmatprep.subr.bf16.mxu0 0
        %1213 = vmatpush2.bf16.msra.mxu0 0
        %1214 = vmatprep.subr.bf16.mxu0 0
        %1215 = vmatpush2.bf16.msra.mxu0 0
        %1216 = vmatprep.subr.bf16.mxu0 0
        %1217 = vmatpush2.bf16.msra.mxu0 0
        %1218 = vmatprep.mubr.bf16.mxu0 0
        %1219 = vmatmul.mubr.bf16.gmra.mxu0 %v1110
        %v1220 = vpop.f32.mrf.mxu0
        %v1221 = vadd.f32 0.0, %v1220
        %v1222 = vpop.f32.mrf.mxu0
        %v1223 = vpop.f32.mrf.mxu0
        %v1224 = vadd.f32 0.0, %v1223
        %v1225 = vpop.f32.mrf.mxu0
        %1226 = vmatprep.mubr.bf16.mxu0 0
        %1227 = vmatmul.mubr.bf16.gmra.mxu0 %v1111
        %v1228 = vpop.f32.mrf.mxu0
        %v1229 = vadd.f32 0.0, %v1228
        %v1230 = vpop.f32.mrf.mxu0
        %v1231 = vpop.f32.mrf.mxu0
        %v1232 = vadd.f32 0.0, %v1231
        %v1233 = vpop.f32.mrf.mxu0
        %1234 = vmatprep.mubr.bf16.mxu0 0
        %1235 = vmatmul.mubr.bf16.gmra.mxu0 %v1112
        %v1236 = vpop.f32.mrf.mxu0
        %v1237 = vadd.f32 0.0, %v1236
        %v1238 = vpop.f32.mrf.mxu0
        %v1239 = vpop.f32.mrf.mxu0
        %v1240 = vadd.f32 0.0, %v1239
        %v1241 = vpop.f32.mrf.mxu0
        %1242 = vmatprep.mubr.bf16.mxu0 0
        %1243 = vmatmul.mubr.bf16.gmra.mxu0 %v1113
        %v1244 = vpop.f32.mrf.mxu0
        %v1245 = vadd.f32 0.0, %v1244
        %v1246 = vpop.f32.mrf.mxu0
        %v1247 = vpop.f32.mrf.mxu0
        %v1248 = vadd.f32 0.0, %v1247
        %v1249 = vpop.f32.mrf.mxu0
        %1250 = vmatprep.mubr.bf16.mxu0 0
        %1251 = vmatmul.mubr.bf16.gmra.mxu0 %v1114
        %v1252 = vpop.f32.mrf.mxu0
        %v1253 = vadd.f32 0.0, %v1252
        %v1254 = vpop.f32.mrf.mxu0
        %v1255 = vpop.f32.mrf.mxu0
        %v1256 = vadd.f32 0.0, %v1255
        %v1257 = vpop.f32.mrf.mxu0
        %1258 = vmatprep.mubr.bf16.mxu0 0
        %1259 = vmatmul.mubr.bf16.gmra.mxu0 %v1115
        %v1260 = vpop.f32.mrf.mxu0
        %v1261 = vadd.f32 0.0, %v1260
        %v1262 = vpop.f32.mrf.mxu0
        %v1263 = vpop.f32.mrf.mxu0
        %v1264 = vadd.f32 0.0, %v1263
        %v1265 = vpop.f32.mrf.mxu0
        %1266 = vmatprep.mubr.bf16.mxu0 0
        %1267 = vmatmul.mubr.bf16.gmra.mxu0 %v1116
        %v1268 = vpop.f32.mrf.mxu0
        %v1269 = vadd.f32 0.0, %v1268
        %v1270 = vpop.f32.mrf.mxu0
        %v1271 = vpop.f32.mrf.mxu0
        %v1272 = vadd.f32 0.0, %v1271
        %v1273 = vpop.f32.mrf.mxu0
        %1274 = vmatprep.mubr.bf16.mxu0 0
        %1275 = vmatmul.mubr.bf16.gmra.mxu0 %v1117
        %v1276 = vpop.f32.mrf.mxu0
        %v1277 = vadd.f32 0.0, %v1276
        %v1278 = vpop.f32.mrf.mxu0
        %v1279 = vpop.f32.mrf.mxu0
        %v1280 = vadd.f32 0.0, %v1279
        %v1281 = vpop.f32.mrf.mxu0
        %1282 = vmatprep.mubr.bf16.mxu0 0
        %1283 = vmatmul.mubr.bf16.gmra.mxu0 %v1118
        %v1284 = vpop.f32.mrf.mxu0
        %v1285 = vadd.f32 0.0, %v1284
        %v1286 = vpop.f32.mrf.mxu0
        %v1287 = vpop.f32.mrf.mxu0
        %v1288 = vadd.f32 0.0, %v1287
        %v1289 = vpop.f32.mrf.mxu0
        %1290 = vmatprep.mubr.bf16.mxu0 0
        %1291 = vmatmul.mubr.bf16.gmra.mxu0 %v1119
        %v1292 = vpop.f32.mrf.mxu0
        %v1293 = vadd.f32 0.0, %v1292
        %v1294 = vpop.f32.mrf.mxu0
        %v1295 = vpop.f32.mrf.mxu0
        %v1296 = vadd.f32 0.0, %v1295
        %v1297 = vpop.f32.mrf.mxu0
        %1298 = vmatprep.mubr.bf16.mxu0 0
        %1299 = vmatmul.mubr.bf16.gmra.mxu0 %v1120
        %v1300 = vpop.f32.mrf.mxu0
        %v1301 = vadd.f32 0.0, %v1300
        %v1302 = vpop.f32.mrf.mxu0
        %v1303 = vpop.f32.mrf.mxu0
        %v1304 = vadd.f32 0.0, %v1303
        %v1305 = vpop.f32.mrf.mxu0
        %1306 = vmatprep.mubr.bf16.mxu0 0
        %1307 = vmatmul.mubr.bf16.gmra.mxu0 %v1121
        %v1308 = vpop.f32.mrf.mxu0
        %v1309 = vadd.f32 0.0, %v1308
        %v1310 = vpop.f32.mrf.mxu0
        %v1311 = vpop.f32.mrf.mxu0
        %v1312 = vadd.f32 0.0, %v1311
        %v1313 = vpop.f32.mrf.mxu0
        %1314 = vdwg.mxu0
        %v1315 = vpack.c.bf16 %v1224, %v1221
        %v1316 = vpack.c.bf16 %v1232, %v1229
        %v1317 = vpack.c.bf16 %v1240, %v1237
        %v1318 = vpack.c.bf16 %v1248, %v1245
        %v1319 = vpack.c.bf16 %v1256, %v1253
        %v1320 = vpack.c.bf16 %v1264, %v1261
        %v1321 = vpack.c.bf16 %v1272, %v1269
        %v1322 = vpack.c.bf16 %v1280, %v1277
        %v1323 = vpack.c.bf16 %v1288, %v1285
        %v1324 = vpack.c.bf16 %v1296, %v1293
        %v1325 = vpack.c.bf16 %v1304, %v1301
        %v1326 = vpack.c.bf16 %v1312, %v1309
        %v1339 = vunpack.c.l.b16 %v1315
        %v1340 = vunpack.c.h.b16 %v1315
        %v1341 = vunpack.c.l.b16 %v1316
        %v1342 = vunpack.c.h.b16 %v1316
        %v1343 = vunpack.c.l.b16 %v1317
        %v1344 = vunpack.c.h.b16 %v1317
        %v1345 = vunpack.c.l.b16 %v1318
        %v1346 = vunpack.c.h.b16 %v1318
        %v1347 = vunpack.c.l.b16 %v1319
        %v1348 = vunpack.c.h.b16 %v1319
        %v1349 = vunpack.c.l.b16 %v1320
        %v1350 = vunpack.c.h.b16 %v1320
        %v1351 = vunpack.c.l.b16 %v1321
        %v1352 = vunpack.c.h.b16 %v1321
        %v1353 = vunpack.c.l.b16 %v1322
        %v1354 = vunpack.c.h.b16 %v1322
        %v1355 = vunpack.c.l.b16 %v1323
        %v1356 = vunpack.c.h.b16 %v1323
        %v1357 = vunpack.c.l.b16 %v1324
        %v1358 = vunpack.c.h.b16 %v1324
        %v1359 = vunpack.c.l.b16 %v1325
        %v1360 = vunpack.c.h.b16 %v1325
        %v1361 = vunpack.c.l.b16 %v1326
        %v1362 = vunpack.c.h.b16 %v1326
        %v1363 = vpack.c.b16 %v1339, %v1339
        %v1364 = vpack.c.b16 %v1340, %v1340
        %v1365 = vpack.c.b16 %v1341, %v1341
        %v1366 = vpack.c.b16 %v1342, %v1342
        %v1367 = vpack.c.b16 %v1343, %v1343
        %v1368 = vpack.c.b16 %v1344, %v1344
        %v1369 = vpack.c.b16 %v1345, %v1345
        %v1370 = vpack.c.b16 %v1346, %v1346
        %v1371 = vpack.c.b16 %v1347, %v1347
        %v1372 = vpack.c.b16 %v1348, %v1348
        %v1373 = vpack.c.b16 %v1349, %v1349
        %v1374 = vpack.c.b16 %v1350, %v1350
        %v1375 = vpack.c.b16 %v1351, %v1351
        %v1376 = vpack.c.b16 %v1352, %v1352
        %v1377 = vpack.c.b16 %v1353, %v1353
        %v1378 = vpack.c.b16 %v1354, %v1354
        %v1379 = vpack.c.b16 %v1355, %v1355
        %v1380 = vpack.c.b16 %v1356, %v1356
        %v1381 = vpack.c.b16 %v1357, %v1357
        %v1382 = vpack.c.b16 %v1358, %v1358
        %v1383 = vpack.c.b16 %v1359, %v1359
        %v1384 = vpack.c.b16 %v1360, %v1360
        %v1385 = vpack.c.b16 %v1361, %v1361
        %v1386 = vpack.c.b16 %v1362, %v1362
        %1411 = vst [vmem:[%s230] sm:$0xf] %v1363
        %1412 = vst [vmem:[%s230 + $0x4] sm:$0xf] %v1364
        %1413 = vst [vmem:[%s230 + $0x8] sm:$0xf] %v1365
        %1414 = vst [vmem:[%s230 + $0xc] sm:$0xf] %v1366
        %1415 = vst [vmem:[%s230 + $0x10] sm:$0xf] %v1367
        %1416 = vst [vmem:[%s230 + $0x14] sm:$0xf] %v1368
        %1417 = vst [vmem:[%s230 + $0x18] sm:$0xf] %v1369
        %1418 = vst [vmem:[%s230 + $0x1c] sm:$0xf] %v1370
        %1419 = vst [vmem:[%s230 + $0x20] sm:$0xf] %v1371
        %1420 = vst [vmem:[%s230 + $0x24] sm:$0xf] %v1372
        %1421 = vst [vmem:[%s230 + $0x28] sm:$0xf] %v1373
        %1422 = vst [vmem:[%s230 + $0x2c] sm:$0xf] %v1374
        %1423 = vst [vmem:[%s230 + $0x30] sm:$0xf] %v1375
        %1424 = vst [vmem:[%s230 + $0x34] sm:$0xf] %v1376
        %1425 = vst [vmem:[%s230 + $0x38] sm:$0xf] %v1377
        %1426 = vst [vmem:[%s230 + $0x3c] sm:$0xf] %v1378
        %1427 = vst [vmem:[%s230 + $0x40] sm:$0xf] %v1379
        %1428 = vst [vmem:[%s230 + $0x44] sm:$0xf] %v1380
        %1429 = vst [vmem:[%s230 + $0x48] sm:$0xf] %v1381
        %1430 = vst [vmem:[%s230 + $0x4c] sm:$0xf] %v1382
        %1431 = vst [vmem:[%s230 + $0x50] sm:$0xf] %v1383
        %1432 = vst [vmem:[%s230 + $0x54] sm:$0xf] %v1384
        %1433 = vst [vmem:[%s230 + $0x58] sm:$0xf] %v1385
        %1434 = vst [vmem:[%s230 + $0x5c] sm:$0xf] %v1386
      $region44: #{encoder_forward.5} parent=35 // pred_fallthru
        _
      %s1435 = smul.u32 24, %s19
      %p1436 = scmp.lt.s32.totalorder %s1435, 47
      %s1437 = scalar_select %p1436, %s1435, 47
      %s1438 = smul.addr %s1437, 4
      %s1439 = scalar_lea.vmem %s4, %s1438
      // Predicated region
      $region45: #{encoder_forward.5} parent=35 // pred_check
        %p1440 = pneg %p136
      $region46: #{encoder_forward.5} parent=35 // pred_check_branch
        %1442 = sbr.rel (%p1440) target = $region48
      $region47: #{encoder_forward.5} parent=35 // pred_region
        %s1443 = smul.u32 24, %s19
      $region48: #{encoder_forward.5} parent=35 // pred_fallthru
        _
    $region36: #{encoder_forward.5} parent=5 // pred_fallthru
      _
    %p1444 = scmp.le.s32.totalorder 2, %s10
    // Predicated region
    $region49: #{encoder_forward.5} parent=5 // pred_check
      %p1445 = pneg %p1444
    $region50: #{encoder_forward.5} parent=5 // pred_check_branch
      %1447 = sbr.rel (%p1445) target = $region52
    $region51: #{encoder_forward.5} parent=5 // pred_region
      %s1448 = ssub.s32 %s10, 2
      // Predicated region
      $region53: #{encoder_forward.5} parent=51 // pred_check
        %p1449 = pneg %p142
      $region54: #{encoder_forward.5} parent=51 // pred_check_branch
        %1451 = sbr.rel (%p1449) target = $region56
      $region55: #{encoder_forward.5} parent=51 // pred_region
        %s1452 = smul.u32 24, %s21
        %p1453 = scmp.lt.s32.totalorder %s1452, 47
        %s1454 = scalar_select %p1453, %s1452, 47
        %s1455 = smul.addr %s1454, 4
        %s1456 = scalar_lea.vmem %s4, %s1455
      $region56: #{encoder_forward.5} parent=51 // pred_fallthru
        _
    $region52: #{encoder_forward.5} parent=5 // pred_fallthru
      _
  $region6: #{encoder_forward.5} parent=0 // loop_footer
    %s14 = sadd.s32 1, %s10
  $region7: #{encoder_forward.5} parent=0 // loop_footer_branch
    %9 = sbr.rel target = $region3
  $region8: #{encoder_forward.5} parent=0 // loop_exit
    _

</llo_original>
